<compile_context>
chip_gen: v5e
topology: v5e:2x2
jax: 0.10.0
libtpu: 0.0.40
codegen_flags: <defaults>
</compile_context>

<pallas_src>
import jax
import jax.numpy as jnp
from jax.experimental import pallas as pl
from jax.experimental.pallas import tpu as pltpu

NUM_CLASSES = 10
PADDED_CLASSES = 128          # lane-dense output width
NEG_PAD = -1e30               # pad-column bias: softmax normalizer ignores pads


def mlp_kernel(x_ref, w1_ref, b1_ref, w2_ref, b2_ref, w3_ref, b3_ref, o_ref):
    # Three bf16 x bf16 -> f32 MXU matmuls, relu on VPU, log_softmax over a
    # full 128-lane row (pad columns carry -1e30 bias -> exp == 0).
    x = x_ref[...]                                                     # bf16

    h1 = jnp.dot(x, w1_ref[...], preferred_element_type=jnp.float32) + b1_ref[...]
    h1 = jnp.maximum(h1, 0.0)                                          # relu(fc1)
    # dropout1: identity (eval mode)

    h2 = jnp.dot(h1.astype(jnp.bfloat16), w2_ref[...],
                 preferred_element_type=jnp.float32) + b2_ref[...]
    h2 = jnp.maximum(h2, 0.0)                                          # relu(fc2)

    logits = jnp.dot(h2.astype(jnp.bfloat16), w3_ref[...],
                     preferred_element_type=jnp.float32) + b3_ref[...]
    # dropout2: identity (eval mode)

    # log_softmax along the lane axis; pad lanes (-1e30) never win the max and
    # contribute exp(.) == 0 to the sum, so the real 10 columns are exact.
    m = jnp.max(logits, axis=-1, keepdims=True)
    s = logits - m
    lse = jnp.log(jnp.sum(jnp.exp(s), axis=-1, keepdims=True))
    o_ref[...] = (s - lse).astype(o_ref.dtype)


def _round_up(n, m):
    return ((n + m - 1) // m) * m


def custom_model_forward(x, params, *, batch_tile=512):
    """x: any shape whose trailing dims flatten to 784 (e.g. (B,1,28,28))."""
    w1, b1, w2, b2, w3, b3 = params

    x2d = x.reshape(-1, 28 * 28)
    B = x2d.shape[0]
    Bp = _round_up(B, batch_tile)
    if Bp != B:
        x2d = jnp.pad(x2d, ((0, Bp - B), (0, 0)))       # zero rows, sliced off below

    # bf16 MXU inputs; biases stay f32 (added post-accumulation).
    x_bf = x2d.astype(jnp.bfloat16)
    w1_bf = w1.astype(jnp.bfloat16)
    w2_bf = w2.astype(jnp.bfloat16)
    b1_f = b1.astype(jnp.float32)
    b2_f = b2.astype(jnp.float32)

    # Lane-dense fc3: pad W3 to (64,128) with zeros, b3 to (1,128) with -1e30.
    w3_pad = jnp.zeros((64, PADDED_CLASSES), jnp.bfloat16).at[:, :NUM_CLASSES].set(
        w3.astype(jnp.bfloat16))
    b3_pad = jnp.full((1, PADDED_CLASSES), NEG_PAD, jnp.float32).at[:, :NUM_CLASSES].set(
        b3.astype(jnp.float32))

    grid = (Bp // batch_tile,)

    def x_map(i):
        return (i, 0)

    def rep_map(i):
        return (0, 0)

    out = pl.pallas_call(
        mlp_kernel,
        out_shape=jax.ShapeDtypeStruct((Bp, PADDED_CLASSES), jnp.float32),
        grid_spec=pltpu.PrefetchScalarGridSpec(
            num_scalar_prefetch=0,
            grid=grid,
            in_specs=[
                pl.BlockSpec((batch_tile, 784), x_map),        # x tile (bf16)
                pl.BlockSpec((784, 128), rep_map),             # W1 (bf16)
                pl.BlockSpec((1, 128), rep_map),               # b1 (f32)
                pl.BlockSpec((128, 64), rep_map),              # W2 (bf16)
                pl.BlockSpec((1, 64), rep_map),                # b2 (f32)
                pl.BlockSpec((64, PADDED_CLASSES), rep_map),   # W3 padded (bf16)
                pl.BlockSpec((1, PADDED_CLASSES), rep_map),    # b3 padded (f32)
            ],
            out_specs=pl.BlockSpec((batch_tile, PADDED_CLASSES), x_map),
        ),
        compiler_params=pltpu.CompilerParams(
            dimension_semantics=("parallel",),   # batch tiles shard across TCs (v7x)
        ),
    )(x_bf, w1_bf, b1_f, w2_bf, b2_f, w3_pad, b3_pad)

    return out[:B, :NUM_CLASSES]


def init_params(key):
    """Deterministic init mirroring nn.Linear default: U(-1/sqrt(fan_in), +)."""
    def linear(key, fan_in, fan_out):
        kw, kb = jax.random.split(key)
        bound = 1.0 / jnp.sqrt(jnp.float32(fan_in))
        # stored as (in, out) so kernel does x @ W
        w = jax.random.uniform(kw, (fan_in, fan_out), jnp.float32, -bound, bound)
        b = jax.random.uniform(kb, (1, fan_out), jnp.float32, -bound, bound)
        return w, b

    k1, k2, k3 = jax.random.split(key, 3)
    w1, b1 = linear(k1, 28 * 28, 128)
    w2, b2 = linear(k2, 128, 64)
    w3, b3 = linear(k3, 64, 10)
    return (w1, b1, w2, b2, w3, b3)


def _reference(x, params):
    """Pure-JAX f32 reference for a sanity check."""
    w1, b1, w2, b2, w3, b3 = params
    x = x.reshape(-1, 28 * 28).astype(jnp.float32)
    h1 = jnp.maximum(x @ w1 + b1, 0.0)
    h2 = jnp.maximum(h1 @ w2 + b2, 0.0)
    logits = h2 @ w3 + b3
    return jax.nn.log_softmax(logits, axis=1)


if __name__ == "__main__":
    key = jax.random.PRNGKey(0)
    kx, kp = jax.random.split(key)

    B = 16  # small demo batch; wrapper pads up to the batch tile internally
    x = jax.random.normal(kx, (B, 1, 28, 28), jnp.float32)  # NCHW like PyTorch
    params = init_params(kp)

    out = custom_model_forward(x, params)
    out = jax.block_until_ready(out)

    ref = _reference(x, params)
    assert out.shape == (B, NUM_CLASSES)
    # bf16 matmul inputs (f32 accumulation) -> loosened tolerance vs f32 reference.
    assert jnp.allclose(out, ref, atol=5e-2, rtol=5e-2), "mismatch vs reference"

    print("KERNEL_OK")
</pallas_src>

<mosaic_0001>
module attributes {stable_mosaic.version = 11 : i64} {
  func.func @mlp_kernel(%arg0: i32, %arg1: memref<512x784xbf16, #tpu.memory_space<vmem>>, %arg2: memref<784x128xbf16, #tpu.memory_space<vmem>>, %arg3: memref<1x128xf32, #tpu.memory_space<vmem>>, %arg4: memref<128x64xbf16, #tpu.memory_space<vmem>>, %arg5: memref<1x64xf32, #tpu.memory_space<vmem>>, %arg6: memref<64x128xbf16, #tpu.memory_space<vmem>>, %arg7: memref<1x128xf32, #tpu.memory_space<vmem>>, %arg8: memref<512x128xf32, #tpu.memory_space<vmem>>) attributes {dimension_semantics = [#tpu.dimension_semantics<parallel>], iteration_bounds = array<i64: 1>, scalar_prefetch = 0 : i64, scratch_operands = 0 : i64, tpu.core_type = #tpu.core_type<tc>, window_params = [{transform_indices = @transform_0, window_bounds = array<i64: 512, 784>}, {pipeline_mode = #tpu.pipeline_mode<synchronous>, transform_indices = @transform_1, window_bounds = array<i64: 784, 128>}, {pipeline_mode = #tpu.pipeline_mode<synchronous>, transform_indices = @transform_2, window_bounds = array<i64: 1, 128>}, {pipeline_mode = #tpu.pipeline_mode<synchronous>, transform_indices = @transform_3, window_bounds = array<i64: 128, 64>}, {pipeline_mode = #tpu.pipeline_mode<synchronous>, transform_indices = @transform_4, window_bounds = array<i64: 1, 64>}, {pipeline_mode = #tpu.pipeline_mode<synchronous>, transform_indices = @transform_5, window_bounds = array<i64: 64, 128>}, {pipeline_mode = #tpu.pipeline_mode<synchronous>, transform_indices = @transform_6, window_bounds = array<i64: 1, 128>}, {transform_indices = @transform_7, window_bounds = array<i64: 512, 128>}]} {
    %c0 = arith.constant 0 : index
    %c0_0 = arith.constant 0 : index
    %0 = vector.load %arg1[%c0, %c0_0] : memref<512x784xbf16, #tpu.memory_space<vmem>>, vector<512x784xbf16>
    %c0_1 = arith.constant 0 : index
    %c0_2 = arith.constant 0 : index
    %1 = vector.load %arg2[%c0_1, %c0_2] : memref<784x128xbf16, #tpu.memory_space<vmem>>, vector<784x128xbf16>
    %cst = arith.constant dense<0.000000e+00> : vector<512x128xf32>
    %2 = tpu.matmul %0, %1, %cst {dimension_numbers = #tpu.dot_dimension_numbers<[1], [0], [0], [1], [0, 0, 1, 1], [], []>} : vector<512x784xbf16>, vector<784x128xbf16>, vector<512x128xf32> -> vector<512x128xf32>
    %c0_3 = arith.constant 0 : index
    %c0_4 = arith.constant 0 : index
    %3 = vector.load %arg3[%c0_3, %c0_4] : memref<1x128xf32, #tpu.memory_space<vmem>>, vector<1x128xf32>
    %4 = vector.broadcast %3 : vector<1x128xf32> to vector<512x128xf32>
    %5 = arith.addf %2, %4 : vector<512x128xf32>
    %cst_5 = arith.constant 0.000000e+00 : f32
    %6 = vector.broadcast %cst_5 : f32 to vector<512x128xf32>
    %7 = arith.maximumf %5, %6 : vector<512x128xf32>
    %8 = arith.truncf %7 : vector<512x128xf32> to vector<512x128xbf16>
    %c0_6 = arith.constant 0 : index
    %c0_7 = arith.constant 0 : index
    %9 = vector.load %arg4[%c0_6, %c0_7] : memref<128x64xbf16, #tpu.memory_space<vmem>>, vector<128x64xbf16>
    %cst_8 = arith.constant dense<0.000000e+00> : vector<512x64xf32>
    %10 = tpu.matmul %8, %9, %cst_8 {dimension_numbers = #tpu.dot_dimension_numbers<[1], [0], [0], [1], [0, 0, 1, 1], [], []>} : vector<512x128xbf16>, vector<128x64xbf16>, vector<512x64xf32> -> vector<512x64xf32>
    %c0_9 = arith.constant 0 : index
    %c0_10 = arith.constant 0 : index
    %11 = vector.load %arg5[%c0_9, %c0_10] : memref<1x64xf32, #tpu.memory_space<vmem>>, vector<1x64xf32>
    %12 = vector.broadcast %11 : vector<1x64xf32> to vector<512x64xf32>
    %13 = arith.addf %10, %12 : vector<512x64xf32>
    %cst_11 = arith.constant 0.000000e+00 : f32
    %14 = vector.broadcast %cst_11 : f32 to vector<512x64xf32>
    %15 = arith.maximumf %13, %14 : vector<512x64xf32>
    %16 = arith.truncf %15 : vector<512x64xf32> to vector<512x64xbf16>
    %c0_12 = arith.constant 0 : index
    %c0_13 = arith.constant 0 : index
    %17 = vector.load %arg6[%c0_12, %c0_13] : memref<64x128xbf16, #tpu.memory_space<vmem>>, vector<64x128xbf16>
    %cst_14 = arith.constant dense<0.000000e+00> : vector<512x128xf32>
    %18 = tpu.matmul %16, %17, %cst_14 {dimension_numbers = #tpu.dot_dimension_numbers<[1], [0], [0], [1], [0, 0, 1, 1], [], []>} : vector<512x64xbf16>, vector<64x128xbf16>, vector<512x128xf32> -> vector<512x128xf32>
    %c0_15 = arith.constant 0 : index
    %c0_16 = arith.constant 0 : index
    %19 = vector.load %arg7[%c0_15, %c0_16] : memref<1x128xf32, #tpu.memory_space<vmem>>, vector<1x128xf32>
    %20 = vector.broadcast %19 : vector<1x128xf32> to vector<512x128xf32>
    %21 = arith.addf %18, %20 : vector<512x128xf32>
    %cst_17 = arith.constant dense<0xFF800000> : vector<512xf32>
    %22 = vector.multi_reduction <maximumf>, %21, %cst_17 [1] : vector<512x128xf32> to vector<512xf32>
    %23 = vector.shape_cast %22 : vector<512xf32> to vector<512x1xf32>
    %24 = vector.broadcast %23 : vector<512x1xf32> to vector<512x128xf32>
    %25 = arith.subf %21, %24 : vector<512x128xf32>
    %26 = math.exp %25 : vector<512x128xf32>
    %cst_18 = arith.constant dense<0.000000e+00> : vector<512xf32>
    %27 = vector.multi_reduction <add>, %26, %cst_18 [1] : vector<512x128xf32> to vector<512xf32>
    %28 = vector.shape_cast %27 : vector<512xf32> to vector<512x1xf32>
    %29 = math.log %28 : vector<512x1xf32>
    %30 = vector.broadcast %29 : vector<512x1xf32> to vector<512x128xf32>
    %31 = arith.subf %25, %30 : vector<512x128xf32>
    %c0_19 = arith.constant 0 : index
    %c0_20 = arith.constant 0 : index
    %32 = vector.load %arg8[%c0_19, %c0_20] : memref<512x128xf32, #tpu.memory_space<vmem>>, vector<512x128xf32>
    tpu.vector_store %arg8[%c0_19, %c0_20], %31 {strides = array<i32>} : memref<512x128xf32, #tpu.memory_space<vmem>>, vector<512x128xf32>,
    return
  }
  func.func @transform_0(%arg0: i32) -> (i32, i32) {
    %c0_i32 = arith.constant 0 : i32
    %c0_i32_0 = arith.constant 0 : i32
    return %arg0, %c0_i32 : i32, i32
  }
  func.func @transform_1(%arg0: i32) -> (i32, i32) {
    %c0_i32 = arith.constant 0 : i32
    %c0_i32_0 = arith.constant 0 : i32
    %c0_i32_1 = arith.constant 0 : i32
    return %c0_i32, %c0_i32_0 : i32, i32
  }
  func.func @transform_2(%arg0: i32) -> (i32, i32) {
    %c0_i32 = arith.constant 0 : i32
    %c0_i32_0 = arith.constant 0 : i32
    %c0_i32_1 = arith.constant 0 : i32
    return %c0_i32, %c0_i32_0 : i32, i32
  }
  func.func @transform_3(%arg0: i32) -> (i32, i32) {
    %c0_i32 = arith.constant 0 : i32
    %c0_i32_0 = arith.constant 0 : i32
    %c0_i32_1 = arith.constant 0 : i32
    return %c0_i32, %c0_i32_0 : i32, i32
  }
  func.func @transform_4(%arg0: i32) -> (i32, i32) {
    %c0_i32 = arith.constant 0 : i32
    %c0_i32_0 = arith.constant 0 : i32
    %c0_i32_1 = arith.constant 0 : i32
    return %c0_i32, %c0_i32_0 : i32, i32
  }
  func.func @transform_5(%arg0: i32) -> (i32, i32) {
    %c0_i32 = arith.constant 0 : i32
    %c0_i32_0 = arith.constant 0 : i32
    %c0_i32_1 = arith.constant 0 : i32
    return %c0_i32, %c0_i32_0 : i32, i32
  }
  func.func @transform_6(%arg0: i32) -> (i32, i32) {
    %c0_i32 = arith.constant 0 : i32
    %c0_i32_0 = arith.constant 0 : i32
    %c0_i32_1 = arith.constant 0 : i32
    return %c0_i32, %c0_i32_0 : i32, i32
  }
  func.func @transform_7(%arg0: i32) -> (i32, i32) {
    %c0_i32 = arith.constant 0 : i32
    %c0_i32_0 = arith.constant 0 : i32
    return %arg0, %c0_i32 : i32, i32
  }
}

</mosaic_0001>

<llo_original>
// kernel: tpu_custom_call.1
$region0: #{tpu_custom_call.1}
  #allocation0 [shape = 'u32[]', space=smem, size = 0x4, offset = 0x4, fixed_abs, tag = 'smem constant byte address 0x4 - core index']
  #allocation1 [shape = 'u32[72,128]{1,0:T(1,128)}', space=vmem, size = 0x9000, scoped, tag = 'internal scratch']
  %s0 = inlined_call_operand.vmem [shape: bf16[512,784], index: 0, kind: input, shape index: {}]
  %s1 = inlined_call_operand.vmem [shape: bf16[784,128], index: 1, kind: input, shape index: {}]
  %s2 = inlined_call_operand.vmem [shape: f32[1,128], index: 2, kind: input, shape index: {}]
  %s3 = inlined_call_operand.vmem [shape: bf16[128,64], index: 3, kind: input, shape index: {}]
  %s4 = inlined_call_operand.vmem [shape: f32[1,64], index: 4, kind: input, shape index: {}]
  %s5 = inlined_call_operand.vmem [shape: bf16[64,128], index: 5, kind: input, shape index: {}]
  %s6 = inlined_call_operand.vmem [shape: f32[1,128], index: 6, kind: input, shape index: {}]
  %s7 = inlined_call_operand.hbm [shape: f32[512,128], index: 7, kind: output, shape index: {}]
  %s8 = sld [smem:[#allocation0]]
  $region38: #{tpu_custom_call.1} parent=0
    _
  %s10 = ssub.s32 1, %s8
  %s11 = scalar_select 0, %s10, %s8
  $region1: #{tpu_custom_call.1} parent=0
    #allocation2 [shape = 'u8[262144]{0}', space=vmem, size = 0x40000, scoped, tag = 'output window, operand 0, single buffered']
    #allocation3 [shape = 's32[1]{0}', space=sflag, size = 0x4, scoped, tag = 'scoped memory for tpu_custom_call.1']
    %12 = vsyncpa [#allocation3], 0
    // Predicated region
    $region2: #{tpu_custom_call.1} parent=1 // pred_check
      _
    $region3: #{tpu_custom_call.1} parent=1 // pred_check_branch
      %14 = sbr.rel (0) target = $region5
    $region4: #{tpu_custom_call.1} parent=1 // pred_region
      _
    $region5: #{tpu_custom_call.1} parent=1 // pred_fallthru
      _
    // Predicated region
    $region6: #{tpu_custom_call.1} parent=1 // pred_check
      _
    $region7: #{tpu_custom_call.1} parent=1 // pred_check_branch
      %16 = sbr.rel (0) target = $region9
    $region8: #{tpu_custom_call.1} parent=1 // pred_region
      _
    $region9: #{tpu_custom_call.1} parent=1 // pred_fallthru
      _
    // Predicated region
    $region10: #{tpu_custom_call.1} parent=1 // pred_check
      _
    $region11: #{tpu_custom_call.1} parent=1 // pred_check_branch
      %18 = sbr.rel (0) target = $region13
    $region12: #{tpu_custom_call.1} parent=1 // pred_region
      _
    $region13: #{tpu_custom_call.1} parent=1 // pred_fallthru
      _
    // Predicated region
    $region14: #{tpu_custom_call.1} parent=1 // pred_check
      _
    $region15: #{tpu_custom_call.1} parent=1 // pred_check_branch
      %20 = sbr.rel (0) target = $region17
    $region16: #{tpu_custom_call.1} parent=1 // pred_region
      _
    $region17: #{tpu_custom_call.1} parent=1 // pred_fallthru
      _
    // Predicated region
    $region18: #{tpu_custom_call.1} parent=1 // pred_check
      _
    $region19: #{tpu_custom_call.1} parent=1 // pred_check_branch
      %22 = sbr.rel (0) target = $region21
    $region20: #{tpu_custom_call.1} parent=1 // pred_region
      _
    $region21: #{tpu_custom_call.1} parent=1 // pred_fallthru
      _
    // Predicated region
    $region22: #{tpu_custom_call.1} parent=1 // pred_check
      _
    $region23: #{tpu_custom_call.1} parent=1 // pred_check_branch
      %24 = sbr.rel (0) target = $region25
    $region24: #{tpu_custom_call.1} parent=1 // pred_region
      _
    $region25: #{tpu_custom_call.1} parent=1 // pred_fallthru
      _
    // Predicated region
    $region26: #{tpu_custom_call.1} parent=1 // pred_check
      _
    $region27: #{tpu_custom_call.1} parent=1 // pred_check_branch
      %26 = sbr.rel (0) target = $region29
    $region28: #{tpu_custom_call.1} parent=1 // pred_region
      _
    $region29: #{tpu_custom_call.1} parent=1 // pred_fallthru
      _
    %v28 = vld [vmem:[%s0] sm:$0xff]
    %v29 = vld [vmem:[%s0 + $0x8] sm:$0xff]
    %v30 = vld [vmem:[%s0 + $0x10] sm:$0xff]
    %v31 = vld [vmem:[%s0 + $0x18] sm:$0xf]
    %v32 = vld [vmem:[%s0 + $0x1c] sm:$0xff]
    %v33 = vld [vmem:[%s0 + $0x24] sm:$0xff]
    %v34 = vld [vmem:[%s0 + $0x2c] sm:$0xff]
    %v35 = vld [vmem:[%s0 + $0x34] sm:$0xf]
    %v36 = vld [vmem:[%s0 + $0x38] sm:$0xff]
    %v37 = vld [vmem:[%s0 + $0x40] sm:$0xff]
    %v38 = vld [vmem:[%s0 + $0x48] sm:$0xff]
    %v39 = vld [vmem:[%s0 + $0x50] sm:$0xf]
    %v40 = vld [vmem:[%s0 + $0x54] sm:$0xff]
    %v41 = vld [vmem:[%s0 + $0x5c] sm:$0xff]
    %v42 = vld [vmem:[%s0 + $0x64] sm:$0xff]
    %v43 = vld [vmem:[%s0 + $0x6c] sm:$0xf]
    %v44 = vld [vmem:[%s0 + $0x70] sm:$0xff]
    %v45 = vld [vmem:[%s0 + $0x78] sm:$0xff]
    %v46 = vld [vmem:[%s0 + $0x80] sm:$0xff]
    %v47 = vld [vmem:[%s0 + $0x88] sm:$0xf]
    %v48 = vld [vmem:[%s0 + $0x8c] sm:$0xff]
    %v49 = vld [vmem:[%s0 + $0x94] sm:$0xff]
    %v50 = vld [vmem:[%s0 + $0x9c] sm:$0xff]
    %v51 = vld [vmem:[%s0 + $0xa4] sm:$0xf]
    %v52 = vld [vmem:[%s0 + $0xa8] sm:$0xff]
    %v53 = vld [vmem:[%s0 + $0xb0] sm:$0xff]
    %v54 = vld [vmem:[%s0 + $0xb8] sm:$0xff]
    %v55 = vld [vmem:[%s0 + $0xc0] sm:$0xf]
    %v56 = vld [vmem:[%s0 + $0xc4] sm:$0xff]
    %v57 = vld [vmem:[%s0 + $0xcc] sm:$0xff]
    %v58 = vld [vmem:[%s0 + $0xd4] sm:$0xff]
    %v59 = vld [vmem:[%s0 + $0xdc] sm:$0xf]
    %v60 = vld [vmem:[%s0 + $0xe0] sm:$0xff]
    %v61 = vld [vmem:[%s0 + $0xe8] sm:$0xff]
    %v62 = vld [vmem:[%s0 + $0xf0] sm:$0xff]
    %v63 = vld [vmem:[%s0 + $0xf8] sm:$0xf]
    %v64 = vld [vmem:[%s0 + $0xfc] sm:$0xff]
    %v65 = vld [vmem:[%s0 + $0x104] sm:$0xff]
    %v66 = vld [vmem:[%s0 + $0x10c] sm:$0xff]
    %v67 = vld [vmem:[%s0 + $0x114] sm:$0xf]
    %v68 = vld [vmem:[%s0 + $0x118] sm:$0xff]
    %v69 = vld [vmem:[%s0 + $0x120] sm:$0xff]
    %v70 = vld [vmem:[%s0 + $0x128] sm:$0xff]
    %v71 = vld [vmem:[%s0 + $0x130] sm:$0xf]
    %v72 = vld [vmem:[%s0 + $0x134] sm:$0xff]
    %v73 = vld [vmem:[%s0 + $0x13c] sm:$0xff]
    %v74 = vld [vmem:[%s0 + $0x144] sm:$0xff]
    %v75 = vld [vmem:[%s0 + $0x14c] sm:$0xf]
    %v76 = vld [vmem:[%s0 + $0x150] sm:$0xff]
    %v77 = vld [vmem:[%s0 + $0x158] sm:$0xff]
    %v78 = vld [vmem:[%s0 + $0x160] sm:$0xff]
    %v79 = vld [vmem:[%s0 + $0x168] sm:$0xf]
    %v80 = vld [vmem:[%s0 + $0x16c] sm:$0xff]
    %v81 = vld [vmem:[%s0 + $0x174] sm:$0xff]
    %v82 = vld [vmem:[%s0 + $0x17c] sm:$0xff]
    %v83 = vld [vmem:[%s0 + $0x184] sm:$0xf]
    %v84 = vld [vmem:[%s0 + $0x188] sm:$0xff]
    %v85 = vld [vmem:[%s0 + $0x190] sm:$0xff]
    %v86 = vld [vmem:[%s0 + $0x198] sm:$0xff]
    %v87 = vld [vmem:[%s0 + $0x1a0] sm:$0xf]
    %v88 = vld [vmem:[%s0 + $0x1a4] sm:$0xff]
    %v89 = vld [vmem:[%s0 + $0x1ac] sm:$0xff]
    %v90 = vld [vmem:[%s0 + $0x1b4] sm:$0xff]
    %v91 = vld [vmem:[%s0 + $0x1bc] sm:$0xf]
    %v92 = vld [vmem:[%s0 + $0x1c0] sm:$0xff]
    %v93 = vld [vmem:[%s0 + $0x1c8] sm:$0xff]
    %v94 = vld [vmem:[%s0 + $0x1d0] sm:$0xff]
    %v95 = vld [vmem:[%s0 + $0x1d8] sm:$0xf]
    %v96 = vld [vmem:[%s0 + $0x1dc] sm:$0xff]
    %v97 = vld [vmem:[%s0 + $0x1e4] sm:$0xff]
    %v98 = vld [vmem:[%s0 + $0x1ec] sm:$0xff]
    %v99 = vld [vmem:[%s0 + $0x1f4] sm:$0xf]
    %v100 = vld [vmem:[%s0 + $0x1f8] sm:$0xff]
    %v101 = vld [vmem:[%s0 + $0x200] sm:$0xff]
    %v102 = vld [vmem:[%s0 + $0x208] sm:$0xff]
    %v103 = vld [vmem:[%s0 + $0x210] sm:$0xf]
    %v104 = vld [vmem:[%s0 + $0x214] sm:$0xff]
    %v105 = vld [vmem:[%s0 + $0x21c] sm:$0xff]
    %v106 = vld [vmem:[%s0 + $0x224] sm:$0xff]
    %v107 = vld [vmem:[%s0 + $0x22c] sm:$0xf]
    %v108 = vld [vmem:[%s0 + $0x230] sm:$0xff]
    %v109 = vld [vmem:[%s0 + $0x238] sm:$0xff]
    %v110 = vld [vmem:[%s0 + $0x240] sm:$0xff]
    %v111 = vld [vmem:[%s0 + $0x248] sm:$0xf]
    %v112 = vld [vmem:[%s0 + $0x24c] sm:$0xff]
    %v113 = vld [vmem:[%s0 + $0x254] sm:$0xff]
    %v114 = vld [vmem:[%s0 + $0x25c] sm:$0xff]
    %v115 = vld [vmem:[%s0 + $0x264] sm:$0xf]
    %v116 = vld [vmem:[%s0 + $0x268] sm:$0xff]
    %v117 = vld [vmem:[%s0 + $0x270] sm:$0xff]
    %v118 = vld [vmem:[%s0 + $0x278] sm:$0xff]
    %v119 = vld [vmem:[%s0 + $0x280] sm:$0xf]
    %v120 = vld [vmem:[%s0 + $0x284] sm:$0xff]
    %v121 = vld [vmem:[%s0 + $0x28c] sm:$0xff]
    %v122 = vld [vmem:[%s0 + $0x294] sm:$0xff]
    %v123 = vld [vmem:[%s0 + $0x29c] sm:$0xf]
    %v124 = vld [vmem:[%s0 + $0x2a0] sm:$0xff]
    %v125 = vld [vmem:[%s0 + $0x2a8] sm:$0xff]
    %v126 = vld [vmem:[%s0 + $0x2b0] sm:$0xff]
    %v127 = vld [vmem:[%s0 + $0x2b8] sm:$0xf]
    %v128 = vld [vmem:[%s0 + $0x2bc] sm:$0xff]
    %v129 = vld [vmem:[%s0 + $0x2c4] sm:$0xff]
    %v130 = vld [vmem:[%s0 + $0x2cc] sm:$0xff]
    %v131 = vld [vmem:[%s0 + $0x2d4] sm:$0xf]
    %v132 = vld [vmem:[%s0 + $0x2d8] sm:$0xff]
    %v133 = vld [vmem:[%s0 + $0x2e0] sm:$0xff]
    %v134 = vld [vmem:[%s0 + $0x2e8] sm:$0xff]
    %v135 = vld [vmem:[%s0 + $0x2f0] sm:$0xf]
    %v136 = vld [vmem:[%s0 + $0x2f4] sm:$0xff]
    %v137 = vld [vmem:[%s0 + $0x2fc] sm:$0xff]
    %v138 = vld [vmem:[%s0 + $0x304] sm:$0xff]
    %v139 = vld [vmem:[%s0 + $0x30c] sm:$0xf]
    %v140 = vld [vmem:[%s0 + $0x310] sm:$0xff]
    %v141 = vld [vmem:[%s0 + $0x318] sm:$0xff]
    %v142 = vld [vmem:[%s0 + $0x320] sm:$0xff]
    %v143 = vld [vmem:[%s0 + $0x328] sm:$0xf]
    %v144 = vld [vmem:[%s0 + $0x32c] sm:$0xff]
    %v145 = vld [vmem:[%s0 + $0x334] sm:$0xff]
    %v146 = vld [vmem:[%s0 + $0x33c] sm:$0xff]
    %v147 = vld [vmem:[%s0 + $0x344] sm:$0xf]
    %v148 = vld [vmem:[%s0 + $0x348] sm:$0xff]
    %v149 = vld [vmem:[%s0 + $0x350] sm:$0xff]
    %v150 = vld [vmem:[%s0 + $0x358] sm:$0xff]
    %v151 = vld [vmem:[%s0 + $0x360] sm:$0xf]
    %v152 = vld [vmem:[%s0 + $0x364] sm:$0xff]
    %v153 = vld [vmem:[%s0 + $0x36c] sm:$0xff]
    %v154 = vld [vmem:[%s0 + $0x374] sm:$0xff]
    %v155 = vld [vmem:[%s0 + $0x37c] sm:$0xf]
    %v156 = vld [vmem:[%s0 + $0x380] sm:$0xff]
    %v157 = vld [vmem:[%s0 + $0x388] sm:$0xff]
    %v158 = vld [vmem:[%s0 + $0x390] sm:$0xff]
    %v159 = vld [vmem:[%s0 + $0x398] sm:$0xf]
    %v160 = vld [vmem:[%s0 + $0x39c] sm:$0xff]
    %v161 = vld [vmem:[%s0 + $0x3a4] sm:$0xff]
    %v162 = vld [vmem:[%s0 + $0x3ac] sm:$0xff]
    %v163 = vld [vmem:[%s0 + $0x3b4] sm:$0xf]
    %v164 = vld [vmem:[%s0 + $0x3b8] sm:$0xff]
    %v165 = vld [vmem:[%s0 + $0x3c0] sm:$0xff]
    %v166 = vld [vmem:[%s0 + $0x3c8] sm:$0xff]
    %v167 = vld [vmem:[%s0 + $0x3d0] sm:$0xf]
    %v168 = vld [vmem:[%s0 + $0x3d4] sm:$0xff]
    %v169 = vld [vmem:[%s0 + $0x3dc] sm:$0xff]
    %v170 = vld [vmem:[%s0 + $0x3e4] sm:$0xff]
    %v171 = vld [vmem:[%s0 + $0x3ec] sm:$0xf]
    %v172 = vld [vmem:[%s0 + $0x3f0] sm:$0xff]
    %v173 = vld [vmem:[%s0 + $0x3f8] sm:$0xff]
    %v174 = vld [vmem:[%s0 + $0x400] sm:$0xff]
    %v175 = vld [vmem:[%s0 + $0x408] sm:$0xf]
    %v176 = vld [vmem:[%s0 + $0x40c] sm:$0xff]
    %v177 = vld [vmem:[%s0 + $0x414] sm:$0xff]
    %v178 = vld [vmem:[%s0 + $0x41c] sm:$0xff]
    %v179 = vld [vmem:[%s0 + $0x424] sm:$0xf]
    %v180 = vld [vmem:[%s0 + $0x428] sm:$0xff]
    %v181 = vld [vmem:[%s0 + $0x430] sm:$0xff]
    %v182 = vld [vmem:[%s0 + $0x438] sm:$0xff]
    %v183 = vld [vmem:[%s0 + $0x440] sm:$0xf]
    %v184 = vld [vmem:[%s0 + $0x444] sm:$0xff]
    %v185 = vld [vmem:[%s0 + $0x44c] sm:$0xff]
    %v186 = vld [vmem:[%s0 + $0x454] sm:$0xff]
    %v187 = vld [vmem:[%s0 + $0x45c] sm:$0xf]
    %v188 = vld [vmem:[%s0 + $0x460] sm:$0xff]
    %v189 = vld [vmem:[%s0 + $0x468] sm:$0xff]
    %v190 = vld [vmem:[%s0 + $0x470] sm:$0xff]
    %v191 = vld [vmem:[%s0 + $0x478] sm:$0xf]
    %v192 = vld [vmem:[%s0 + $0x47c] sm:$0xff]
    %v193 = vld [vmem:[%s0 + $0x484] sm:$0xff]
    %v194 = vld [vmem:[%s0 + $0x48c] sm:$0xff]
    %v195 = vld [vmem:[%s0 + $0x494] sm:$0xf]
    %v196 = vld [vmem:[%s0 + $0x498] sm:$0xff]
    %v197 = vld [vmem:[%s0 + $0x4a0] sm:$0xff]
    %v198 = vld [vmem:[%s0 + $0x4a8] sm:$0xff]
    %v199 = vld [vmem:[%s0 + $0x4b0] sm:$0xf]
    %v200 = vld [vmem:[%s0 + $0x4b4] sm:$0xff]
    %v201 = vld [vmem:[%s0 + $0x4bc] sm:$0xff]
    %v202 = vld [vmem:[%s0 + $0x4c4] sm:$0xff]
    %v203 = vld [vmem:[%s0 + $0x4cc] sm:$0xf]
    %v204 = vld [vmem:[%s0 + $0x4d0] sm:$0xff]
    %v205 = vld [vmem:[%s0 + $0x4d8] sm:$0xff]
    %v206 = vld [vmem:[%s0 + $0x4e0] sm:$0xff]
    %v207 = vld [vmem:[%s0 + $0x4e8] sm:$0xf]
    %v208 = vld [vmem:[%s0 + $0x4ec] sm:$0xff]
    %v209 = vld [vmem:[%s0 + $0x4f4] sm:$0xff]
    %v210 = vld [vmem:[%s0 + $0x4fc] sm:$0xff]
    %v211 = vld [vmem:[%s0 + $0x504] sm:$0xf]
    %v212 = vld [vmem:[%s0 + $0x508] sm:$0xff]
    %v213 = vld [vmem:[%s0 + $0x510] sm:$0xff]
    %v214 = vld [vmem:[%s0 + $0x518] sm:$0xff]
    %v215 = vld [vmem:[%s0 + $0x520] sm:$0xf]
    %v216 = vld [vmem:[%s0 + $0x524] sm:$0xff]
    %v217 = vld [vmem:[%s0 + $0x52c] sm:$0xff]
    %v218 = vld [vmem:[%s0 + $0x534] sm:$0xff]
    %v219 = vld [vmem:[%s0 + $0x53c] sm:$0xf]
    %v220 = vld [vmem:[%s0 + $0x540] sm:$0xff]
    %v221 = vld [vmem:[%s0 + $0x548] sm:$0xff]
    %v222 = vld [vmem:[%s0 + $0x550] sm:$0xff]
    %v223 = vld [vmem:[%s0 + $0x558] sm:$0xf]
    %v224 = vld [vmem:[%s0 + $0x55c] sm:$0xff]
    %v225 = vld [vmem:[%s0 + $0x564] sm:$0xff]
    %v226 = vld [vmem:[%s0 + $0x56c] sm:$0xff]
    %v227 = vld [vmem:[%s0 + $0x574] sm:$0xf]
    %v228 = vld [vmem:[%s0 + $0x578] sm:$0xff]
    %v229 = vld [vmem:[%s0 + $0x580] sm:$0xff]
    %v230 = vld [vmem:[%s0 + $0x588] sm:$0xff]
    %v231 = vld [vmem:[%s0 + $0x590] sm:$0xf]
    %v232 = vld [vmem:[%s0 + $0x594] sm:$0xff]
    %v233 = vld [vmem:[%s0 + $0x59c] sm:$0xff]
    %v234 = vld [vmem:[%s0 + $0x5a4] sm:$0xff]
    %v235 = vld [vmem:[%s0 + $0x5ac] sm:$0xf]
    %v236 = vld [vmem:[%s0 + $0x5b0] sm:$0xff]
    %v237 = vld [vmem:[%s0 + $0x5b8] sm:$0xff]
    %v238 = vld [vmem:[%s0 + $0x5c0] sm:$0xff]
    %v239 = vld [vmem:[%s0 + $0x5c8] sm:$0xf]
    %v240 = vld [vmem:[%s0 + $0x5cc] sm:$0xff]
    %v241 = vld [vmem:[%s0 + $0x5d4] sm:$0xff]
    %v242 = vld [vmem:[%s0 + $0x5dc] sm:$0xff]
    %v243 = vld [vmem:[%s0 + $0x5e4] sm:$0xf]
    %v244 = vld [vmem:[%s0 + $0x5e8] sm:$0xff]
    %v245 = vld [vmem:[%s0 + $0x5f0] sm:$0xff]
    %v246 = vld [vmem:[%s0 + $0x5f8] sm:$0xff]
    %v247 = vld [vmem:[%s0 + $0x600] sm:$0xf]
    %v248 = vld [vmem:[%s0 + $0x604] sm:$0xff]
    %v249 = vld [vmem:[%s0 + $0x60c] sm:$0xff]
    %v250 = vld [vmem:[%s0 + $0x614] sm:$0xff]
    %v251 = vld [vmem:[%s0 + $0x61c] sm:$0xf]
    %v252 = vld [vmem:[%s0 + $0x620] sm:$0xff]
    %v253 = vld [vmem:[%s0 + $0x628] sm:$0xff]
    %v254 = vld [vmem:[%s0 + $0x630] sm:$0xff]
    %v255 = vld [vmem:[%s0 + $0x638] sm:$0xf]
    %v256 = vld [vmem:[%s0 + $0x63c] sm:$0xff]
    %v257 = vld [vmem:[%s0 + $0x644] sm:$0xff]
    %v258 = vld [vmem:[%s0 + $0x64c] sm:$0xff]
    %v259 = vld [vmem:[%s0 + $0x654] sm:$0xf]
    %v260 = vld [vmem:[%s0 + $0x658] sm:$0xff]
    %v261 = vld [vmem:[%s0 + $0x660] sm:$0xff]
    %v262 = vld [vmem:[%s0 + $0x668] sm:$0xff]
    %v263 = vld [vmem:[%s0 + $0x670] sm:$0xf]
    %v264 = vld [vmem:[%s0 + $0x674] sm:$0xff]
    %v265 = vld [vmem:[%s0 + $0x67c] sm:$0xff]
    %v266 = vld [vmem:[%s0 + $0x684] sm:$0xff]
    %v267 = vld [vmem:[%s0 + $0x68c] sm:$0xf]
    %v268 = vld [vmem:[%s0 + $0x690] sm:$0xff]
    %v269 = vld [vmem:[%s0 + $0x698] sm:$0xff]
    %v270 = vld [vmem:[%s0 + $0x6a0] sm:$0xff]
    %v271 = vld [vmem:[%s0 + $0x6a8] sm:$0xf]
    %v272 = vld [vmem:[%s0 + $0x6ac] sm:$0xff]
    %v273 = vld [vmem:[%s0 + $0x6b4] sm:$0xff]
    %v274 = vld [vmem:[%s0 + $0x6bc] sm:$0xff]
    %v275 = vld [vmem:[%s0 + $0x6c4] sm:$0xf]
    %v276 = vld [vmem:[%s0 + $0x6c8] sm:$0xff]
    %v277 = vld [vmem:[%s0 + $0x6d0] sm:$0xff]
    %v278 = vld [vmem:[%s0 + $0x6d8] sm:$0xff]
    %v279 = vld [vmem:[%s0 + $0x6e0] sm:$0xf]
    %v280 = vld [vmem:[%s0 + $0x6e4] sm:$0xff]
    %v281 = vld [vmem:[%s0 + $0x6ec] sm:$0xff]
    %v282 = vld [vmem:[%s0 + $0x6f4] sm:$0xff]
    %v283 = vld [vmem:[%s0 + $0x6fc] sm:$0xf]
    %v284 = vld [vmem:[%s1] sm:$0xf]
    %v285 = vld [vmem:[%s1 + $0x4] sm:$0xf]
    %v286 = vld [vmem:[%s1 + $0x8] sm:$0xf]
    %v287 = vld [vmem:[%s1 + $0xc] sm:$0xf]
    %v288 = vld [vmem:[%s1 + $0x10] sm:$0xf]
    %v289 = vld [vmem:[%s1 + $0x14] sm:$0xf]
    %v290 = vld [vmem:[%s1 + $0x18] sm:$0xf]
    %v291 = vld [vmem:[%s1 + $0x1c] sm:$0xf]
    %v292 = vld [vmem:[%s1 + $0x20] sm:$0xf]
    %v293 = vld [vmem:[%s1 + $0x24] sm:$0xf]
    %v294 = vld [vmem:[%s1 + $0x28] sm:$0xf]
    %v295 = vld [vmem:[%s1 + $0x2c] sm:$0xf]
    %v296 = vld [vmem:[%s1 + $0x30] sm:$0xf]
    %v297 = vld [vmem:[%s1 + $0x34] sm:$0xf]
    %v298 = vld [vmem:[%s1 + $0x38] sm:$0xf]
    %v299 = vld [vmem:[%s1 + $0x3c] sm:$0xf]
    %v300 = vld [vmem:[%s1 + $0x40] sm:$0xf]
    %v301 = vld [vmem:[%s1 + $0x44] sm:$0xf]
    %v302 = vld [vmem:[%s1 + $0x48] sm:$0xf]
    %v303 = vld [vmem:[%s1 + $0x4c] sm:$0xf]
    %v304 = vld [vmem:[%s1 + $0x50] sm:$0xf]
    %v305 = vld [vmem:[%s1 + $0x54] sm:$0xf]
    %v306 = vld [vmem:[%s1 + $0x58] sm:$0xf]
    %v307 = vld [vmem:[%s1 + $0x5c] sm:$0xf]
    %v308 = vld [vmem:[%s1 + $0x60] sm:$0xf]
    %v309 = vld [vmem:[%s1 + $0x64] sm:$0xf]
    %v310 = vld [vmem:[%s1 + $0x68] sm:$0xf]
    %v311 = vld [vmem:[%s1 + $0x6c] sm:$0xf]
    %v312 = vld [vmem:[%s1 + $0x70] sm:$0xf]
    %v313 = vld [vmem:[%s1 + $0x74] sm:$0xf]
    %v314 = vld [vmem:[%s1 + $0x78] sm:$0xf]
    %v315 = vld [vmem:[%s1 + $0x7c] sm:$0xf]
    %v316 = vld [vmem:[%s1 + $0x80] sm:$0xf]
    %v317 = vld [vmem:[%s1 + $0x84] sm:$0xf]
    %v318 = vld [vmem:[%s1 + $0x88] sm:$0xf]
    %v319 = vld [vmem:[%s1 + $0x8c] sm:$0xf]
    %v320 = vld [vmem:[%s1 + $0x90] sm:$0xf]
    %v321 = vld [vmem:[%s1 + $0x94] sm:$0xf]
    %v322 = vld [vmem:[%s1 + $0x98] sm:$0xf]
    %v323 = vld [vmem:[%s1 + $0x9c] sm:$0xf]
    %v324 = vld [vmem:[%s1 + $0xa0] sm:$0xf]
    %v325 = vld [vmem:[%s1 + $0xa4] sm:$0xf]
    %v326 = vld [vmem:[%s1 + $0xa8] sm:$0xf]
    %v327 = vld [vmem:[%s1 + $0xac] sm:$0xf]
    %v328 = vld [vmem:[%s1 + $0xb0] sm:$0xf]
    %v329 = vld [vmem:[%s1 + $0xb4] sm:$0xf]
    %v330 = vld [vmem:[%s1 + $0xb8] sm:$0xf]
    %v331 = vld [vmem:[%s1 + $0xbc] sm:$0xf]
    %v332 = vld [vmem:[%s1 + $0xc0] sm:$0xf]
    %v333 = vld [vmem:[%s1 + $0xc4] sm:$0xf]
    %v334 = vld [vmem:[%s1 + $0xc8] sm:$0xf]
    %v335 = vld [vmem:[%s1 + $0xcc] sm:$0xf]
    %v336 = vld [vmem:[%s1 + $0xd0] sm:$0xf]
    %v337 = vld [vmem:[%s1 + $0xd4] sm:$0xf]
    %v338 = vld [vmem:[%s1 + $0xd8] sm:$0xf]
    %v339 = vld [vmem:[%s1 + $0xdc] sm:$0xf]
    %v340 = vld [vmem:[%s1 + $0xe0] sm:$0xf]
    %v341 = vld [vmem:[%s1 + $0xe4] sm:$0xf]
    %v342 = vld [vmem:[%s1 + $0xe8] sm:$0xf]
    %v343 = vld [vmem:[%s1 + $0xec] sm:$0xf]
    %v344 = vld [vmem:[%s1 + $0xf0] sm:$0xf]
    %v345 = vld [vmem:[%s1 + $0xf4] sm:$0xf]
    %v346 = vld [vmem:[%s1 + $0xf8] sm:$0xf]
    %v347 = vld [vmem:[%s1 + $0xfc] sm:$0xf]
    %v348 = vld [vmem:[%s1 + $0x100] sm:$0xf]
    %v349 = vld [vmem:[%s1 + $0x104] sm:$0xf]
    %v350 = vld [vmem:[%s1 + $0x108] sm:$0xf]
    %v351 = vld [vmem:[%s1 + $0x10c] sm:$0xf]
    %v352 = vld [vmem:[%s1 + $0x110] sm:$0xf]
    %v353 = vld [vmem:[%s1 + $0x114] sm:$0xf]
    %v354 = vld [vmem:[%s1 + $0x118] sm:$0xf]
    %v355 = vld [vmem:[%s1 + $0x11c] sm:$0xf]
    %v356 = vld [vmem:[%s1 + $0x120] sm:$0xf]
    %v357 = vld [vmem:[%s1 + $0x124] sm:$0xf]
    %v358 = vld [vmem:[%s1 + $0x128] sm:$0xf]
    %v359 = vld [vmem:[%s1 + $0x12c] sm:$0xf]
    %v360 = vld [vmem:[%s1 + $0x130] sm:$0xf]
    %v361 = vld [vmem:[%s1 + $0x134] sm:$0xf]
    %v362 = vld [vmem:[%s1 + $0x138] sm:$0xf]
    %v363 = vld [vmem:[%s1 + $0x13c] sm:$0xf]
    %v364 = vld [vmem:[%s1 + $0x140] sm:$0xf]
    %v365 = vld [vmem:[%s1 + $0x144] sm:$0xf]
    %v366 = vld [vmem:[%s1 + $0x148] sm:$0xf]
    %v367 = vld [vmem:[%s1 + $0x14c] sm:$0xf]
    %v368 = vld [vmem:[%s1 + $0x150] sm:$0xf]
    %v369 = vld [vmem:[%s1 + $0x154] sm:$0xf]
    %v370 = vld [vmem:[%s1 + $0x158] sm:$0xf]
    %v371 = vld [vmem:[%s1 + $0x15c] sm:$0xf]
    %v372 = vld [vmem:[%s1 + $0x160] sm:$0xf]
    %v373 = vld [vmem:[%s1 + $0x164] sm:$0xf]
    %v374 = vld [vmem:[%s1 + $0x168] sm:$0xf]
    %v375 = vld [vmem:[%s1 + $0x16c] sm:$0xf]
    %v376 = vld [vmem:[%s1 + $0x170] sm:$0xf]
    %v377 = vld [vmem:[%s1 + $0x174] sm:$0xf]
    %v378 = vld [vmem:[%s1 + $0x178] sm:$0xf]
    %v379 = vld [vmem:[%s1 + $0x17c] sm:$0xf]
    %v380 = vld [vmem:[%s1 + $0x180] sm:$0xf]
    %v381 = vld [vmem:[%s1 + $0x184] sm:$0xf]
    %v382 = vld [vmem:[%s2] sm:$0x1]
    %v384 = vperm.slane %v382, 0
    %v642 = vunpack.c.l.b16 %v28
    %v643 = vunpack.c.h.b16 %v28
    %v644 = vunpack.c.l.b16 %v29
    %v645 = vunpack.c.h.b16 %v29
    %v646 = vunpack.c.l.b16 %v30
    %v647 = vunpack.c.h.b16 %v30
    %v648 = vunpack.c.l.b16 %v31
    %v649 = vunpack.c.l.b16 %v32
    %v650 = vunpack.c.h.b16 %v32
    %v651 = vunpack.c.l.b16 %v33
    %v652 = vunpack.c.h.b16 %v33
    %v653 = vunpack.c.l.b16 %v34
    %v654 = vunpack.c.h.b16 %v34
    %v655 = vunpack.c.l.b16 %v35
    %v656 = vunpack.c.l.b16 %v36
    %v657 = vunpack.c.h.b16 %v36
    %v658 = vunpack.c.l.b16 %v37
    %v659 = vunpack.c.h.b16 %v37
    %v660 = vunpack.c.l.b16 %v38
    %v661 = vunpack.c.h.b16 %v38
    %v662 = vunpack.c.l.b16 %v39
    %v663 = vunpack.c.l.b16 %v40
    %v664 = vunpack.c.h.b16 %v40
    %v665 = vunpack.c.l.b16 %v41
    %v666 = vunpack.c.h.b16 %v41
    %v667 = vunpack.c.l.b16 %v42
    %v668 = vunpack.c.h.b16 %v42
    %v669 = vunpack.c.l.b16 %v43
    %v670 = vunpack.c.l.b16 %v44
    %v671 = vunpack.c.h.b16 %v44
    %v672 = vunpack.c.l.b16 %v45
    %v673 = vunpack.c.h.b16 %v45
    %v674 = vunpack.c.l.b16 %v46
    %v675 = vunpack.c.h.b16 %v46
    %v676 = vunpack.c.l.b16 %v47
    %v677 = vunpack.c.l.b16 %v48
    %v678 = vunpack.c.h.b16 %v48
    %v679 = vunpack.c.l.b16 %v49
    %v680 = vunpack.c.h.b16 %v49
    %v681 = vunpack.c.l.b16 %v50
    %v682 = vunpack.c.h.b16 %v50
    %v683 = vunpack.c.l.b16 %v51
    %v684 = vunpack.c.l.b16 %v52
    %v685 = vunpack.c.h.b16 %v52
    %v686 = vunpack.c.l.b16 %v53
    %v687 = vunpack.c.h.b16 %v53
    %v688 = vunpack.c.l.b16 %v54
    %v689 = vunpack.c.h.b16 %v54
    %v690 = vunpack.c.l.b16 %v55
    %v691 = vunpack.c.l.b16 %v56
    %v692 = vunpack.c.h.b16 %v56
    %v693 = vunpack.c.l.b16 %v57
    %v694 = vunpack.c.h.b16 %v57
    %v695 = vunpack.c.l.b16 %v58
    %v696 = vunpack.c.h.b16 %v58
    %v697 = vunpack.c.l.b16 %v59
    %v698 = vunpack.c.l.b16 %v60
    %v699 = vunpack.c.h.b16 %v60
    %v700 = vunpack.c.l.b16 %v61
    %v701 = vunpack.c.h.b16 %v61
    %v702 = vunpack.c.l.b16 %v62
    %v703 = vunpack.c.h.b16 %v62
    %v704 = vunpack.c.l.b16 %v63
    %v705 = vunpack.c.l.b16 %v64
    %v706 = vunpack.c.h.b16 %v64
    %v707 = vunpack.c.l.b16 %v65
    %v708 = vunpack.c.h.b16 %v65
    %v709 = vunpack.c.l.b16 %v66
    %v710 = vunpack.c.h.b16 %v66
    %v711 = vunpack.c.l.b16 %v67
    %v712 = vunpack.c.l.b16 %v68
    %v713 = vunpack.c.h.b16 %v68
    %v714 = vunpack.c.l.b16 %v69
    %v715 = vunpack.c.h.b16 %v69
    %v716 = vunpack.c.l.b16 %v70
    %v717 = vunpack.c.h.b16 %v70
    %v718 = vunpack.c.l.b16 %v71
    %v719 = vunpack.c.l.b16 %v72
    %v720 = vunpack.c.h.b16 %v72
    %v721 = vunpack.c.l.b16 %v73
    %v722 = vunpack.c.h.b16 %v73
    %v723 = vunpack.c.l.b16 %v74
    %v724 = vunpack.c.h.b16 %v74
    %v725 = vunpack.c.l.b16 %v75
    %v726 = vunpack.c.l.b16 %v76
    %v727 = vunpack.c.h.b16 %v76
    %v728 = vunpack.c.l.b16 %v77
    %v729 = vunpack.c.h.b16 %v77
    %v730 = vunpack.c.l.b16 %v78
    %v731 = vunpack.c.h.b16 %v78
    %v732 = vunpack.c.l.b16 %v79
    %v733 = vunpack.c.l.b16 %v80
    %v734 = vunpack.c.h.b16 %v80
    %v735 = vunpack.c.l.b16 %v81
    %v736 = vunpack.c.h.b16 %v81
    %v737 = vunpack.c.l.b16 %v82
    %v738 = vunpack.c.h.b16 %v82
    %v739 = vunpack.c.l.b16 %v83
    %v740 = vunpack.c.l.b16 %v84
    %v741 = vunpack.c.h.b16 %v84
    %v742 = vunpack.c.l.b16 %v85
    %v743 = vunpack.c.h.b16 %v85
    %v744 = vunpack.c.l.b16 %v86
    %v745 = vunpack.c.h.b16 %v86
    %v746 = vunpack.c.l.b16 %v87
    %v747 = vunpack.c.l.b16 %v88
    %v748 = vunpack.c.h.b16 %v88
    %v749 = vunpack.c.l.b16 %v89
    %v750 = vunpack.c.h.b16 %v89
    %v751 = vunpack.c.l.b16 %v90
    %v752 = vunpack.c.h.b16 %v90
    %v753 = vunpack.c.l.b16 %v91
    %v754 = vunpack.c.l.b16 %v92
    %v755 = vunpack.c.h.b16 %v92
    %v756 = vunpack.c.l.b16 %v93
    %v757 = vunpack.c.h.b16 %v93
    %v758 = vunpack.c.l.b16 %v94
    %v759 = vunpack.c.h.b16 %v94
    %v760 = vunpack.c.l.b16 %v95
    %v761 = vunpack.c.l.b16 %v96
    %v762 = vunpack.c.h.b16 %v96
    %v763 = vunpack.c.l.b16 %v97
    %v764 = vunpack.c.h.b16 %v97
    %v765 = vunpack.c.l.b16 %v98
    %v766 = vunpack.c.h.b16 %v98
    %v767 = vunpack.c.l.b16 %v99
    %v768 = vunpack.c.l.b16 %v100
    %v769 = vunpack.c.h.b16 %v100
    %v770 = vunpack.c.l.b16 %v101
    %v771 = vunpack.c.h.b16 %v101
    %v772 = vunpack.c.l.b16 %v102
    %v773 = vunpack.c.h.b16 %v102
    %v774 = vunpack.c.l.b16 %v103
    %v775 = vunpack.c.l.b16 %v104
    %v776 = vunpack.c.h.b16 %v104
    %v777 = vunpack.c.l.b16 %v105
    %v778 = vunpack.c.h.b16 %v105
    %v779 = vunpack.c.l.b16 %v106
    %v780 = vunpack.c.h.b16 %v106
    %v781 = vunpack.c.l.b16 %v107
    %v782 = vunpack.c.l.b16 %v108
    %v783 = vunpack.c.h.b16 %v108
    %v784 = vunpack.c.l.b16 %v109
    %v785 = vunpack.c.h.b16 %v109
    %v786 = vunpack.c.l.b16 %v110
    %v787 = vunpack.c.h.b16 %v110
    %v788 = vunpack.c.l.b16 %v111
    %v789 = vunpack.c.l.b16 %v112
    %v790 = vunpack.c.h.b16 %v112
    %v791 = vunpack.c.l.b16 %v113
    %v792 = vunpack.c.h.b16 %v113
    %v793 = vunpack.c.l.b16 %v114
    %v794 = vunpack.c.h.b16 %v114
    %v795 = vunpack.c.l.b16 %v115
    %v796 = vunpack.c.l.b16 %v116
    %v797 = vunpack.c.h.b16 %v116
    %v798 = vunpack.c.l.b16 %v117
    %v799 = vunpack.c.h.b16 %v117
    %v800 = vunpack.c.l.b16 %v118
    %v801 = vunpack.c.h.b16 %v118
    %v802 = vunpack.c.l.b16 %v119
    %v803 = vunpack.c.l.b16 %v120
    %v804 = vunpack.c.h.b16 %v120
    %v805 = vunpack.c.l.b16 %v121
    %v806 = vunpack.c.h.b16 %v121
    %v807 = vunpack.c.l.b16 %v122
    %v808 = vunpack.c.h.b16 %v122
    %v809 = vunpack.c.l.b16 %v123
    %v810 = vunpack.c.l.b16 %v124
    %v811 = vunpack.c.h.b16 %v124
    %v812 = vunpack.c.l.b16 %v125
    %v813 = vunpack.c.h.b16 %v125
    %v814 = vunpack.c.l.b16 %v126
    %v815 = vunpack.c.h.b16 %v126
    %v816 = vunpack.c.l.b16 %v127
    %v817 = vunpack.c.l.b16 %v128
    %v818 = vunpack.c.h.b16 %v128
    %v819 = vunpack.c.l.b16 %v129
    %v820 = vunpack.c.h.b16 %v129
    %v821 = vunpack.c.l.b16 %v130
    %v822 = vunpack.c.h.b16 %v130
    %v823 = vunpack.c.l.b16 %v131
    %v824 = vunpack.c.l.b16 %v132
    %v825 = vunpack.c.h.b16 %v132
    %v826 = vunpack.c.l.b16 %v133
    %v827 = vunpack.c.h.b16 %v133
    %v828 = vunpack.c.l.b16 %v134
    %v829 = vunpack.c.h.b16 %v134
    %v830 = vunpack.c.l.b16 %v135
    %v831 = vunpack.c.l.b16 %v136
    %v832 = vunpack.c.h.b16 %v136
    %v833 = vunpack.c.l.b16 %v137
    %v834 = vunpack.c.h.b16 %v137
    %v835 = vunpack.c.l.b16 %v138
    %v836 = vunpack.c.h.b16 %v138
    %v837 = vunpack.c.l.b16 %v139
    %v838 = vunpack.c.l.b16 %v140
    %v839 = vunpack.c.h.b16 %v140
    %v840 = vunpack.c.l.b16 %v141
    %v841 = vunpack.c.h.b16 %v141
    %v842 = vunpack.c.l.b16 %v142
    %v843 = vunpack.c.h.b16 %v142
    %v844 = vunpack.c.l.b16 %v143
    %v845 = vunpack.c.l.b16 %v144
    %v846 = vunpack.c.h.b16 %v144
    %v847 = vunpack.c.l.b16 %v145
    %v848 = vunpack.c.h.b16 %v145
    %v849 = vunpack.c.l.b16 %v146
    %v850 = vunpack.c.h.b16 %v146
    %v851 = vunpack.c.l.b16 %v147
    %v852 = vunpack.c.l.b16 %v148
    %v853 = vunpack.c.h.b16 %v148
    %v854 = vunpack.c.l.b16 %v149
    %v855 = vunpack.c.h.b16 %v149
    %v856 = vunpack.c.l.b16 %v150
    %v857 = vunpack.c.h.b16 %v150
    %v858 = vunpack.c.l.b16 %v151
    %v859 = vunpack.c.l.b16 %v152
    %v860 = vunpack.c.h.b16 %v152
    %v861 = vunpack.c.l.b16 %v153
    %v862 = vunpack.c.h.b16 %v153
    %v863 = vunpack.c.l.b16 %v154
    %v864 = vunpack.c.h.b16 %v154
    %v865 = vunpack.c.l.b16 %v155
    %v866 = vunpack.c.l.b16 %v156
    %v867 = vunpack.c.h.b16 %v156
    %v868 = vunpack.c.l.b16 %v157
    %v869 = vunpack.c.h.b16 %v157
    %v870 = vunpack.c.l.b16 %v158
    %v871 = vunpack.c.h.b16 %v158
    %v872 = vunpack.c.l.b16 %v159
    %v873 = vunpack.c.l.b16 %v160
    %v874 = vunpack.c.h.b16 %v160
    %v875 = vunpack.c.l.b16 %v161
    %v876 = vunpack.c.h.b16 %v161
    %v877 = vunpack.c.l.b16 %v162
    %v878 = vunpack.c.h.b16 %v162
    %v879 = vunpack.c.l.b16 %v163
    %v880 = vunpack.c.l.b16 %v164
    %v881 = vunpack.c.h.b16 %v164
    %v882 = vunpack.c.l.b16 %v165
    %v883 = vunpack.c.h.b16 %v165
    %v884 = vunpack.c.l.b16 %v166
    %v885 = vunpack.c.h.b16 %v166
    %v886 = vunpack.c.l.b16 %v167
    %v887 = vunpack.c.l.b16 %v168
    %v888 = vunpack.c.h.b16 %v168
    %v889 = vunpack.c.l.b16 %v169
    %v890 = vunpack.c.h.b16 %v169
    %v891 = vunpack.c.l.b16 %v170
    %v892 = vunpack.c.h.b16 %v170
    %v893 = vunpack.c.l.b16 %v171
    %v894 = vunpack.c.l.b16 %v172
    %v895 = vunpack.c.h.b16 %v172
    %v896 = vunpack.c.l.b16 %v173
    %v897 = vunpack.c.h.b16 %v173
    %v898 = vunpack.c.l.b16 %v174
    %v899 = vunpack.c.h.b16 %v174
    %v900 = vunpack.c.l.b16 %v175
    %v901 = vunpack.c.l.b16 %v176
    %v902 = vunpack.c.h.b16 %v176
    %v903 = vunpack.c.l.b16 %v177
    %v904 = vunpack.c.h.b16 %v177
    %v905 = vunpack.c.l.b16 %v178
    %v906 = vunpack.c.h.b16 %v178
    %v907 = vunpack.c.l.b16 %v179
    %v908 = vunpack.c.l.b16 %v180
    %v909 = vunpack.c.h.b16 %v180
    %v910 = vunpack.c.l.b16 %v181
    %v911 = vunpack.c.h.b16 %v181
    %v912 = vunpack.c.l.b16 %v182
    %v913 = vunpack.c.h.b16 %v182
    %v914 = vunpack.c.l.b16 %v183
    %v915 = vunpack.c.l.b16 %v184
    %v916 = vunpack.c.h.b16 %v184
    %v917 = vunpack.c.l.b16 %v185
    %v918 = vunpack.c.h.b16 %v185
    %v919 = vunpack.c.l.b16 %v186
    %v920 = vunpack.c.h.b16 %v186
    %v921 = vunpack.c.l.b16 %v187
    %v922 = vunpack.c.l.b16 %v188
    %v923 = vunpack.c.h.b16 %v188
    %v924 = vunpack.c.l.b16 %v189
    %v925 = vunpack.c.h.b16 %v189
    %v926 = vunpack.c.l.b16 %v190
    %v927 = vunpack.c.h.b16 %v190
    %v928 = vunpack.c.l.b16 %v191
    %v929 = vunpack.c.l.b16 %v192
    %v930 = vunpack.c.h.b16 %v192
    %v931 = vunpack.c.l.b16 %v193
    %v932 = vunpack.c.h.b16 %v193
    %v933 = vunpack.c.l.b16 %v194
    %v934 = vunpack.c.h.b16 %v194
    %v935 = vunpack.c.l.b16 %v195
    %v936 = vunpack.c.l.b16 %v196
    %v937 = vunpack.c.h.b16 %v196
    %v938 = vunpack.c.l.b16 %v197
    %v939 = vunpack.c.h.b16 %v197
    %v940 = vunpack.c.l.b16 %v198
    %v941 = vunpack.c.h.b16 %v198
    %v942 = vunpack.c.l.b16 %v199
    %v943 = vunpack.c.l.b16 %v200
    %v944 = vunpack.c.h.b16 %v200
    %v945 = vunpack.c.l.b16 %v201
    %v946 = vunpack.c.h.b16 %v201
    %v947 = vunpack.c.l.b16 %v202
    %v948 = vunpack.c.h.b16 %v202
    %v949 = vunpack.c.l.b16 %v203
    %v950 = vunpack.c.l.b16 %v204
    %v951 = vunpack.c.h.b16 %v204
    %v952 = vunpack.c.l.b16 %v205
    %v953 = vunpack.c.h.b16 %v205
    %v954 = vunpack.c.l.b16 %v206
    %v955 = vunpack.c.h.b16 %v206
    %v956 = vunpack.c.l.b16 %v207
    %v957 = vunpack.c.l.b16 %v208
    %v958 = vunpack.c.h.b16 %v208
    %v959 = vunpack.c.l.b16 %v209
    %v960 = vunpack.c.h.b16 %v209
    %v961 = vunpack.c.l.b16 %v210
    %v962 = vunpack.c.h.b16 %v210
    %v963 = vunpack.c.l.b16 %v211
    %v964 = vunpack.c.l.b16 %v212
    %v965 = vunpack.c.h.b16 %v212
    %v966 = vunpack.c.l.b16 %v213
    %v967 = vunpack.c.h.b16 %v213
    %v968 = vunpack.c.l.b16 %v214
    %v969 = vunpack.c.h.b16 %v214
    %v970 = vunpack.c.l.b16 %v215
    %v971 = vunpack.c.l.b16 %v216
    %v972 = vunpack.c.h.b16 %v216
    %v973 = vunpack.c.l.b16 %v217
    %v974 = vunpack.c.h.b16 %v217
    %v975 = vunpack.c.l.b16 %v218
    %v976 = vunpack.c.h.b16 %v218
    %v977 = vunpack.c.l.b16 %v219
    %v978 = vunpack.c.l.b16 %v220
    %v979 = vunpack.c.h.b16 %v220
    %v980 = vunpack.c.l.b16 %v221
    %v981 = vunpack.c.h.b16 %v221
    %v982 = vunpack.c.l.b16 %v222
    %v983 = vunpack.c.h.b16 %v222
    %v984 = vunpack.c.l.b16 %v223
    %v985 = vunpack.c.l.b16 %v224
    %v986 = vunpack.c.h.b16 %v224
    %v987 = vunpack.c.l.b16 %v225
    %v988 = vunpack.c.h.b16 %v225
    %v989 = vunpack.c.l.b16 %v226
    %v990 = vunpack.c.h.b16 %v226
    %v991 = vunpack.c.l.b16 %v227
    %v992 = vunpack.c.l.b16 %v228
    %v993 = vunpack.c.h.b16 %v228
    %v994 = vunpack.c.l.b16 %v229
    %v995 = vunpack.c.h.b16 %v229
    %v996 = vunpack.c.l.b16 %v230
    %v997 = vunpack.c.h.b16 %v230
    %v998 = vunpack.c.l.b16 %v231
    %v999 = vunpack.c.l.b16 %v232
    %v1000 = vunpack.c.h.b16 %v232
    %v1001 = vunpack.c.l.b16 %v233
    %v1002 = vunpack.c.h.b16 %v233
    %v1003 = vunpack.c.l.b16 %v234
    %v1004 = vunpack.c.h.b16 %v234
    %v1005 = vunpack.c.l.b16 %v235
    %v1006 = vunpack.c.l.b16 %v236
    %v1007 = vunpack.c.h.b16 %v236
    %v1008 = vunpack.c.l.b16 %v237
    %v1009 = vunpack.c.h.b16 %v237
    %v1010 = vunpack.c.l.b16 %v238
    %v1011 = vunpack.c.h.b16 %v238
    %v1012 = vunpack.c.l.b16 %v239
    %v1013 = vunpack.c.l.b16 %v240
    %v1014 = vunpack.c.h.b16 %v240
    %v1015 = vunpack.c.l.b16 %v241
    %v1016 = vunpack.c.h.b16 %v241
    %v1017 = vunpack.c.l.b16 %v242
    %v1018 = vunpack.c.h.b16 %v242
    %v1019 = vunpack.c.l.b16 %v243
    %v1020 = vunpack.c.l.b16 %v244
    %v1021 = vunpack.c.h.b16 %v244
    %v1022 = vunpack.c.l.b16 %v245
    %v1023 = vunpack.c.h.b16 %v245
    %v1024 = vunpack.c.l.b16 %v246
    %v1025 = vunpack.c.h.b16 %v246
    %v1026 = vunpack.c.l.b16 %v247
    %v1027 = vunpack.c.l.b16 %v248
    %v1028 = vunpack.c.h.b16 %v248
    %v1029 = vunpack.c.l.b16 %v249
    %v1030 = vunpack.c.h.b16 %v249
    %v1031 = vunpack.c.l.b16 %v250
    %v1032 = vunpack.c.h.b16 %v250
    %v1033 = vunpack.c.l.b16 %v251
    %v1034 = vunpack.c.l.b16 %v252
    %v1035 = vunpack.c.h.b16 %v252
    %v1036 = vunpack.c.l.b16 %v253
    %v1037 = vunpack.c.h.b16 %v253
    %v1038 = vunpack.c.l.b16 %v254
    %v1039 = vunpack.c.h.b16 %v254
    %v1040 = vunpack.c.l.b16 %v255
    %v1041 = vunpack.c.l.b16 %v256
    %v1042 = vunpack.c.h.b16 %v256
    %v1043 = vunpack.c.l.b16 %v257
    %v1044 = vunpack.c.h.b16 %v257
    %v1045 = vunpack.c.l.b16 %v258
    %v1046 = vunpack.c.h.b16 %v258
    %v1047 = vunpack.c.l.b16 %v259
    %v1048 = vunpack.c.l.b16 %v260
    %v1049 = vunpack.c.h.b16 %v260
    %v1050 = vunpack.c.l.b16 %v261
    %v1051 = vunpack.c.h.b16 %v261
    %v1052 = vunpack.c.l.b16 %v262
    %v1053 = vunpack.c.h.b16 %v262
    %v1054 = vunpack.c.l.b16 %v263
    %v1055 = vunpack.c.l.b16 %v264
    %v1056 = vunpack.c.h.b16 %v264
    %v1057 = vunpack.c.l.b16 %v265
    %v1058 = vunpack.c.h.b16 %v265
    %v1059 = vunpack.c.l.b16 %v266
    %v1060 = vunpack.c.h.b16 %v266
    %v1061 = vunpack.c.l.b16 %v267
    %v1062 = vunpack.c.l.b16 %v268
    %v1063 = vunpack.c.h.b16 %v268
    %v1064 = vunpack.c.l.b16 %v269
    %v1065 = vunpack.c.h.b16 %v269
    %v1066 = vunpack.c.l.b16 %v270
    %v1067 = vunpack.c.h.b16 %v270
    %v1068 = vunpack.c.l.b16 %v271
    %v1069 = vunpack.c.l.b16 %v272
    %v1070 = vunpack.c.h.b16 %v272
    %v1071 = vunpack.c.l.b16 %v273
    %v1072 = vunpack.c.h.b16 %v273
    %v1073 = vunpack.c.l.b16 %v274
    %v1074 = vunpack.c.h.b16 %v274
    %v1075 = vunpack.c.l.b16 %v275
    %v1076 = vunpack.c.l.b16 %v276
    %v1077 = vunpack.c.h.b16 %v276
    %v1078 = vunpack.c.l.b16 %v277
    %v1079 = vunpack.c.h.b16 %v277
    %v1080 = vunpack.c.l.b16 %v278
    %v1081 = vunpack.c.h.b16 %v278
    %v1082 = vunpack.c.l.b16 %v279
    %v1083 = vunpack.c.l.b16 %v280
    %v1084 = vunpack.c.h.b16 %v280
    %v1085 = vunpack.c.l.b16 %v281
    %v1086 = vunpack.c.h.b16 %v281
    %v1087 = vunpack.c.l.b16 %v282
    %v1088 = vunpack.c.h.b16 %v282
    %v1089 = vunpack.c.l.b16 %v283
    %v1090 = vpack.c.b16 %v649, %v642
    %v1091 = vpack.c.b16 %v650, %v643
    %v1092 = vpack.c.b16 %v651, %v644
    %v1093 = vpack.c.b16 %v652, %v645
    %v1094 = vpack.c.b16 %v653, %v646
    %v1095 = vpack.c.b16 %v654, %v647
    %v1096 = vpack.c.b16 %v655, %v648
    %v1097 = vpack.c.b16 %v663, %v656
    %v1098 = vpack.c.b16 %v664, %v657
    %v1099 = vpack.c.b16 %v665, %v658
    %v1100 = vpack.c.b16 %v666, %v659
    %v1101 = vpack.c.b16 %v667, %v660
    %v1102 = vpack.c.b16 %v668, %v661
    %v1103 = vpack.c.b16 %v669, %v662
    %v1104 = vpack.c.b16 %v677, %v670
    %v1105 = vpack.c.b16 %v678, %v671
    %v1106 = vpack.c.b16 %v679, %v672
    %v1107 = vpack.c.b16 %v680, %v673
    %v1108 = vpack.c.b16 %v681, %v674
    %v1109 = vpack.c.b16 %v682, %v675
    %v1110 = vpack.c.b16 %v683, %v676
    %v1111 = vpack.c.b16 %v691, %v684
    %v1112 = vpack.c.b16 %v692, %v685
    %v1113 = vpack.c.b16 %v693, %v686
    %v1114 = vpack.c.b16 %v694, %v687
    %v1115 = vpack.c.b16 %v695, %v688
    %v1116 = vpack.c.b16 %v696, %v689
    %v1117 = vpack.c.b16 %v697, %v690
    %v1118 = vpack.c.b16 %v705, %v698
    %v1119 = vpack.c.b16 %v706, %v699
    %v1120 = vpack.c.b16 %v707, %v700
    %v1121 = vpack.c.b16 %v708, %v701
    %v1122 = vpack.c.b16 %v709, %v702
    %v1123 = vpack.c.b16 %v710, %v703
    %v1124 = vpack.c.b16 %v711, %v704
    %v1125 = vpack.c.b16 %v719, %v712
    %v1126 = vpack.c.b16 %v720, %v713
    %v1127 = vpack.c.b16 %v721, %v714
    %v1128 = vpack.c.b16 %v722, %v715
    %v1129 = vpack.c.b16 %v723, %v716
    %v1130 = vpack.c.b16 %v724, %v717
    %v1131 = vpack.c.b16 %v725, %v718
    %v1132 = vpack.c.b16 %v733, %v726
    %v1133 = vpack.c.b16 %v734, %v727
    %v1134 = vpack.c.b16 %v735, %v728
    %v1135 = vpack.c.b16 %v736, %v729
    %v1136 = vpack.c.b16 %v737, %v730
    %v1137 = vpack.c.b16 %v738, %v731
    %v1138 = vpack.c.b16 %v739, %v732
    %v1139 = vpack.c.b16 %v747, %v740
    %v1140 = vpack.c.b16 %v748, %v741
    %v1141 = vpack.c.b16 %v749, %v742
    %v1142 = vpack.c.b16 %v750, %v743
    %v1143 = vpack.c.b16 %v751, %v744
    %v1144 = vpack.c.b16 %v752, %v745
    %v1145 = vpack.c.b16 %v753, %v746
    %v1146 = vpack.c.b16 %v761, %v754
    %v1147 = vpack.c.b16 %v762, %v755
    %v1148 = vpack.c.b16 %v763, %v756
    %v1149 = vpack.c.b16 %v764, %v757
    %v1150 = vpack.c.b16 %v765, %v758
    %v1151 = vpack.c.b16 %v766, %v759
    %v1152 = vpack.c.b16 %v767, %v760
    %v1153 = vpack.c.b16 %v775, %v768
    %v1154 = vpack.c.b16 %v776, %v769
    %v1155 = vpack.c.b16 %v777, %v770
    %v1156 = vpack.c.b16 %v778, %v771
    %v1157 = vpack.c.b16 %v779, %v772
    %v1158 = vpack.c.b16 %v780, %v773
    %v1159 = vpack.c.b16 %v781, %v774
    %v1160 = vpack.c.b16 %v789, %v782
    %v1161 = vpack.c.b16 %v790, %v783
    %v1162 = vpack.c.b16 %v791, %v784
    %v1163 = vpack.c.b16 %v792, %v785
    %v1164 = vpack.c.b16 %v793, %v786
    %v1165 = vpack.c.b16 %v794, %v787
    %v1166 = vpack.c.b16 %v795, %v788
    %v1167 = vpack.c.b16 %v803, %v796
    %v1168 = vpack.c.b16 %v804, %v797
    %v1169 = vpack.c.b16 %v805, %v798
    %v1170 = vpack.c.b16 %v806, %v799
    %v1171 = vpack.c.b16 %v807, %v800
    %v1172 = vpack.c.b16 %v808, %v801
    %v1173 = vpack.c.b16 %v809, %v802
    %v1174 = vpack.c.b16 %v817, %v810
    %v1175 = vpack.c.b16 %v818, %v811
    %v1176 = vpack.c.b16 %v819, %v812
    %v1177 = vpack.c.b16 %v820, %v813
    %v1178 = vpack.c.b16 %v821, %v814
    %v1179 = vpack.c.b16 %v822, %v815
    %v1180 = vpack.c.b16 %v823, %v816
    %v1181 = vpack.c.b16 %v831, %v824
    %v1182 = vpack.c.b16 %v832, %v825
    %v1183 = vpack.c.b16 %v833, %v826
    %v1184 = vpack.c.b16 %v834, %v827
    %v1185 = vpack.c.b16 %v835, %v828
    %v1186 = vpack.c.b16 %v836, %v829
    %v1187 = vpack.c.b16 %v837, %v830
    %v1188 = vpack.c.b16 %v845, %v838
    %v1189 = vpack.c.b16 %v846, %v839
    %v1190 = vpack.c.b16 %v847, %v840
    %v1191 = vpack.c.b16 %v848, %v841
    %v1192 = vpack.c.b16 %v849, %v842
    %v1193 = vpack.c.b16 %v850, %v843
    %v1194 = vpack.c.b16 %v851, %v844
    %v1195 = vpack.c.b16 %v859, %v852
    %v1196 = vpack.c.b16 %v860, %v853
    %v1197 = vpack.c.b16 %v861, %v854
    %v1198 = vpack.c.b16 %v862, %v855
    %v1199 = vpack.c.b16 %v863, %v856
    %v1200 = vpack.c.b16 %v864, %v857
    %v1201 = vpack.c.b16 %v865, %v858
    %v1202 = vpack.c.b16 %v873, %v866
    %v1203 = vpack.c.b16 %v874, %v867
    %v1204 = vpack.c.b16 %v875, %v868
    %v1205 = vpack.c.b16 %v876, %v869
    %v1206 = vpack.c.b16 %v877, %v870
    %v1207 = vpack.c.b16 %v878, %v871
    %v1208 = vpack.c.b16 %v879, %v872
    %v1209 = vpack.c.b16 %v887, %v880
    %v1210 = vpack.c.b16 %v888, %v881
    %v1211 = vpack.c.b16 %v889, %v882
    %v1212 = vpack.c.b16 %v890, %v883
    %v1213 = vpack.c.b16 %v891, %v884
    %v1214 = vpack.c.b16 %v892, %v885
    %v1215 = vpack.c.b16 %v893, %v886
    %v1216 = vpack.c.b16 %v901, %v894
    %v1217 = vpack.c.b16 %v902, %v895
    %v1218 = vpack.c.b16 %v903, %v896
    %v1219 = vpack.c.b16 %v904, %v897
    %v1220 = vpack.c.b16 %v905, %v898
    %v1221 = vpack.c.b16 %v906, %v899
    %v1222 = vpack.c.b16 %v907, %v900
    %v1223 = vpack.c.b16 %v915, %v908
    %v1224 = vpack.c.b16 %v916, %v909
    %v1225 = vpack.c.b16 %v917, %v910
    %v1226 = vpack.c.b16 %v918, %v911
    %v1227 = vpack.c.b16 %v919, %v912
    %v1228 = vpack.c.b16 %v920, %v913
    %v1229 = vpack.c.b16 %v921, %v914
    %v1230 = vpack.c.b16 %v929, %v922
    %v1231 = vpack.c.b16 %v930, %v923
    %v1232 = vpack.c.b16 %v931, %v924
    %v1233 = vpack.c.b16 %v932, %v925
    %v1234 = vpack.c.b16 %v933, %v926
    %v1235 = vpack.c.b16 %v934, %v927
    %v1236 = vpack.c.b16 %v935, %v928
    %v1237 = vpack.c.b16 %v943, %v936
    %v1238 = vpack.c.b16 %v944, %v937
    %v1239 = vpack.c.b16 %v945, %v938
    %v1240 = vpack.c.b16 %v946, %v939
    %v1241 = vpack.c.b16 %v947, %v940
    %v1242 = vpack.c.b16 %v948, %v941
    %v1243 = vpack.c.b16 %v949, %v942
    %v1244 = vpack.c.b16 %v957, %v950
    %v1245 = vpack.c.b16 %v958, %v951
    %v1246 = vpack.c.b16 %v959, %v952
    %v1247 = vpack.c.b16 %v960, %v953
    %v1248 = vpack.c.b16 %v961, %v954
    %v1249 = vpack.c.b16 %v962, %v955
    %v1250 = vpack.c.b16 %v963, %v956
    %v1251 = vpack.c.b16 %v971, %v964
    %v1252 = vpack.c.b16 %v972, %v965
    %v1253 = vpack.c.b16 %v973, %v966
    %v1254 = vpack.c.b16 %v974, %v967
    %v1255 = vpack.c.b16 %v975, %v968
    %v1256 = vpack.c.b16 %v976, %v969
    %v1257 = vpack.c.b16 %v977, %v970
    %v1258 = vpack.c.b16 %v985, %v978
    %v1259 = vpack.c.b16 %v986, %v979
    %v1260 = vpack.c.b16 %v987, %v980
    %v1261 = vpack.c.b16 %v988, %v981
    %v1262 = vpack.c.b16 %v989, %v982
    %v1263 = vpack.c.b16 %v990, %v983
    %v1264 = vpack.c.b16 %v991, %v984
    %v1265 = vpack.c.b16 %v999, %v992
    %v1266 = vpack.c.b16 %v1000, %v993
    %v1267 = vpack.c.b16 %v1001, %v994
    %v1268 = vpack.c.b16 %v1002, %v995
    %v1269 = vpack.c.b16 %v1003, %v996
    %v1270 = vpack.c.b16 %v1004, %v997
    %v1271 = vpack.c.b16 %v1005, %v998
    %v1272 = vpack.c.b16 %v1013, %v1006
    %v1273 = vpack.c.b16 %v1014, %v1007
    %v1274 = vpack.c.b16 %v1015, %v1008
    %v1275 = vpack.c.b16 %v1016, %v1009
    %v1276 = vpack.c.b16 %v1017, %v1010
    %v1277 = vpack.c.b16 %v1018, %v1011
    %v1278 = vpack.c.b16 %v1019, %v1012
    %v1279 = vpack.c.b16 %v1027, %v1020
    %v1280 = vpack.c.b16 %v1028, %v1021
    %v1281 = vpack.c.b16 %v1029, %v1022
    %v1282 = vpack.c.b16 %v1030, %v1023
    %v1283 = vpack.c.b16 %v1031, %v1024
    %v1284 = vpack.c.b16 %v1032, %v1025
    %v1285 = vpack.c.b16 %v1033, %v1026
    %v1286 = vpack.c.b16 %v1041, %v1034
    %v1287 = vpack.c.b16 %v1042, %v1035
    %v1288 = vpack.c.b16 %v1043, %v1036
    %v1289 = vpack.c.b16 %v1044, %v1037
    %v1290 = vpack.c.b16 %v1045, %v1038
    %v1291 = vpack.c.b16 %v1046, %v1039
    %v1292 = vpack.c.b16 %v1047, %v1040
    %v1293 = vpack.c.b16 %v1055, %v1048
    %v1294 = vpack.c.b16 %v1056, %v1049
    %v1295 = vpack.c.b16 %v1057, %v1050
    %v1296 = vpack.c.b16 %v1058, %v1051
    %v1297 = vpack.c.b16 %v1059, %v1052
    %v1298 = vpack.c.b16 %v1060, %v1053
    %v1299 = vpack.c.b16 %v1061, %v1054
    %v1300 = vpack.c.b16 %v1069, %v1062
    %v1301 = vpack.c.b16 %v1070, %v1063
    %v1302 = vpack.c.b16 %v1071, %v1064
    %v1303 = vpack.c.b16 %v1072, %v1065
    %v1304 = vpack.c.b16 %v1073, %v1066
    %v1305 = vpack.c.b16 %v1074, %v1067
    %v1306 = vpack.c.b16 %v1075, %v1068
    %v1307 = vpack.c.b16 %v1083, %v1076
    %v1308 = vpack.c.b16 %v1084, %v1077
    %v1309 = vpack.c.b16 %v1085, %v1078
    %v1310 = vpack.c.b16 %v1086, %v1079
    %v1311 = vpack.c.b16 %v1087, %v1080
    %v1312 = vpack.c.b16 %v1088, %v1081
    %v1313 = vpack.c.b16 %v1089, %v1082
    %v1604 = vunpack.c.l.b16 %v284
    %v1605 = vunpack.c.l.b16 %v285
    %v1606 = vunpack.c.l.b16 %v286
    %v1607 = vunpack.c.l.b16 %v287
    %v1608 = vunpack.c.l.b16 %v288
    %v1609 = vunpack.c.l.b16 %v289
    %v1610 = vunpack.c.l.b16 %v290
    %v1611 = vunpack.c.l.b16 %v291
    %v1612 = vunpack.c.l.b16 %v292
    %v1613 = vunpack.c.l.b16 %v293
    %v1614 = vunpack.c.l.b16 %v294
    %v1615 = vunpack.c.l.b16 %v295
    %v1616 = vunpack.c.l.b16 %v296
    %v1617 = vunpack.c.l.b16 %v297
    %v1618 = vunpack.c.l.b16 %v298
    %v1619 = vunpack.c.l.b16 %v299
    %v1620 = vunpack.c.l.b16 %v300
    %v1621 = vunpack.c.l.b16 %v301
    %v1622 = vunpack.c.l.b16 %v302
    %v1623 = vunpack.c.l.b16 %v303
    %v1624 = vunpack.c.l.b16 %v304
    %v1625 = vunpack.c.l.b16 %v305
    %v1626 = vunpack.c.l.b16 %v306
    %v1627 = vunpack.c.l.b16 %v307
    %v1628 = vunpack.c.l.b16 %v308
    %v1629 = vunpack.c.l.b16 %v309
    %v1630 = vunpack.c.l.b16 %v310
    %v1631 = vunpack.c.l.b16 %v311
    %v1632 = vunpack.c.l.b16 %v312
    %v1633 = vunpack.c.l.b16 %v313
    %v1634 = vunpack.c.l.b16 %v314
    %v1635 = vunpack.c.l.b16 %v315
    %v1636 = vunpack.c.l.b16 %v316
    %v1637 = vunpack.c.l.b16 %v317
    %v1638 = vunpack.c.l.b16 %v318
    %v1639 = vunpack.c.l.b16 %v319
    %v1640 = vunpack.c.l.b16 %v320
    %v1641 = vunpack.c.l.b16 %v321
    %v1642 = vunpack.c.l.b16 %v322
    %v1643 = vunpack.c.l.b16 %v323
    %v1644 = vunpack.c.l.b16 %v324
    %v1645 = vunpack.c.l.b16 %v325
    %v1646 = vunpack.c.l.b16 %v326
    %v1647 = vunpack.c.l.b16 %v327
    %v1648 = vunpack.c.l.b16 %v328
    %v1649 = vunpack.c.l.b16 %v329
    %v1650 = vunpack.c.l.b16 %v330
    %v1651 = vunpack.c.l.b16 %v331
    %v1652 = vunpack.c.l.b16 %v332
    %v1653 = vunpack.c.l.b16 %v333
    %v1654 = vunpack.c.l.b16 %v334
    %v1655 = vunpack.c.l.b16 %v335
    %v1656 = vunpack.c.l.b16 %v336
    %v1657 = vunpack.c.l.b16 %v337
    %v1658 = vunpack.c.l.b16 %v338
    %v1659 = vunpack.c.l.b16 %v339
    %v1660 = vunpack.c.l.b16 %v340
    %v1661 = vunpack.c.l.b16 %v341
    %v1662 = vunpack.c.l.b16 %v342
    %v1663 = vunpack.c.l.b16 %v343
    %v1664 = vunpack.c.l.b16 %v344
    %v1665 = vunpack.c.l.b16 %v345
    %v1666 = vunpack.c.l.b16 %v346
    %v1667 = vunpack.c.l.b16 %v347
    %v1668 = vunpack.c.l.b16 %v348
    %v1669 = vunpack.c.l.b16 %v349
    %v1670 = vunpack.c.l.b16 %v350
    %v1671 = vunpack.c.l.b16 %v351
    %v1672 = vunpack.c.l.b16 %v352
    %v1673 = vunpack.c.l.b16 %v353
    %v1674 = vunpack.c.l.b16 %v354
    %v1675 = vunpack.c.l.b16 %v355
    %v1676 = vunpack.c.l.b16 %v356
    %v1677 = vunpack.c.l.b16 %v357
    %v1678 = vunpack.c.l.b16 %v358
    %v1679 = vunpack.c.l.b16 %v359
    %v1680 = vunpack.c.l.b16 %v360
    %v1681 = vunpack.c.l.b16 %v361
    %v1682 = vunpack.c.l.b16 %v362
    %v1683 = vunpack.c.l.b16 %v363
    %v1684 = vunpack.c.l.b16 %v364
    %v1685 = vunpack.c.l.b16 %v365
    %v1686 = vunpack.c.l.b16 %v366
    %v1687 = vunpack.c.l.b16 %v367
    %v1688 = vunpack.c.l.b16 %v368
    %v1689 = vunpack.c.l.b16 %v369
    %v1690 = vunpack.c.l.b16 %v370
    %v1691 = vunpack.c.l.b16 %v371
    %v1692 = vunpack.c.l.b16 %v372
    %v1693 = vunpack.c.l.b16 %v373
    %v1694 = vunpack.c.l.b16 %v374
    %v1695 = vunpack.c.l.b16 %v375
    %v1696 = vunpack.c.l.b16 %v376
    %v1697 = vunpack.c.l.b16 %v377
    %v1698 = vunpack.c.l.b16 %v378
    %v1699 = vunpack.c.l.b16 %v379
    %v1700 = vunpack.c.l.b16 %v380
    %v1701 = vunpack.c.l.b16 %v381
    %v1702 = vpack.c.b16 %v1605, %v1604
    %v1703 = vpack.c.b16 %v1607, %v1606
    %v1704 = vpack.c.b16 %v1609, %v1608
    %v1705 = vpack.c.b16 %v1611, %v1610
    %v1706 = vpack.c.b16 %v1613, %v1612
    %v1707 = vpack.c.b16 %v1615, %v1614
    %v1708 = vpack.c.b16 %v1617, %v1616
    %v1709 = vpack.c.b16 %v1619, %v1618
    %v1710 = vpack.c.b16 %v1621, %v1620
    %v1711 = vpack.c.b16 %v1623, %v1622
    %v1712 = vpack.c.b16 %v1625, %v1624
    %v1713 = vpack.c.b16 %v1627, %v1626
    %v1714 = vpack.c.b16 %v1629, %v1628
    %v1715 = vpack.c.b16 %v1631, %v1630
    %v1716 = vpack.c.b16 %v1633, %v1632
    %v1717 = vpack.c.b16 %v1635, %v1634
    %v1718 = vpack.c.b16 %v1637, %v1636
    %v1719 = vpack.c.b16 %v1639, %v1638
    %v1720 = vpack.c.b16 %v1641, %v1640
    %v1721 = vpack.c.b16 %v1643, %v1642
    %v1722 = vpack.c.b16 %v1645, %v1644
    %v1723 = vpack.c.b16 %v1647, %v1646
    %v1724 = vpack.c.b16 %v1649, %v1648
    %v1725 = vpack.c.b16 %v1651, %v1650
    %v1726 = vpack.c.b16 %v1653, %v1652
    %v1727 = vpack.c.b16 %v1655, %v1654
    %v1728 = vpack.c.b16 %v1657, %v1656
    %v1729 = vpack.c.b16 %v1659, %v1658
    %v1730 = vpack.c.b16 %v1661, %v1660
    %v1731 = vpack.c.b16 %v1663, %v1662
    %v1732 = vpack.c.b16 %v1665, %v1664
    %v1733 = vpack.c.b16 %v1667, %v1666
    %v1734 = vpack.c.b16 %v1669, %v1668
    %v1735 = vpack.c.b16 %v1671, %v1670
    %v1736 = vpack.c.b16 %v1673, %v1672
    %v1737 = vpack.c.b16 %v1675, %v1674
    %v1738 = vpack.c.b16 %v1677, %v1676
    %v1739 = vpack.c.b16 %v1679, %v1678
    %v1740 = vpack.c.b16 %v1681, %v1680
    %v1741 = vpack.c.b16 %v1683, %v1682
    %v1742 = vpack.c.b16 %v1685, %v1684
    %v1743 = vpack.c.b16 %v1687, %v1686
    %v1744 = vpack.c.b16 %v1689, %v1688
    %v1745 = vpack.c.b16 %v1691, %v1690
    %v1746 = vpack.c.b16 %v1693, %v1692
    %v1747 = vpack.c.b16 %v1695, %v1694
    %v1748 = vpack.c.b16 %v1697, %v1696
    %v1749 = vpack.c.b16 %v1699, %v1698
    %v1750 = vpack.c.b16 %v1701, %v1700
    %vm1800 = vcmask 130048
    %v1802 = vsel %vm1800, %v1096, 0
    %v1805 = vsel %vm1800, %v1103, 0
    %v1808 = vsel %vm1800, %v1110, 0
    %v1811 = vsel %vm1800, %v1117, 0
    %v1814 = vsel %vm1800, %v1124, 0
    %v1817 = vsel %vm1800, %v1131, 0
    %v1820 = vsel %vm1800, %v1138, 0
    %v1823 = vsel %vm1800, %v1145, 0
    %v1826 = vsel %vm1800, %v1152, 0
    %v1829 = vsel %vm1800, %v1159, 0
    %v1832 = vsel %vm1800, %v1166, 0
    %v1835 = vsel %vm1800, %v1173, 0
    %v1838 = vsel %vm1800, %v1180, 0
    %v1841 = vsel %vm1800, %v1187, 0
    %v1844 = vsel %vm1800, %v1194, 0
    %v1847 = vsel %vm1800, %v1201, 0
    %v1850 = vsel %vm1800, %v1208, 0
    %v1853 = vsel %vm1800, %v1215, 0
    %v1856 = vsel %vm1800, %v1222, 0
    %v1859 = vsel %vm1800, %v1229, 0
    %v1862 = vsel %vm1800, %v1236, 0
    %v1865 = vsel %vm1800, %v1243, 0
    %v1868 = vsel %vm1800, %v1250, 0
    %v1871 = vsel %vm1800, %v1257, 0
    %v1874 = vsel %vm1800, %v1264, 0
    %v1877 = vsel %vm1800, %v1271, 0
    %v1880 = vsel %vm1800, %v1278, 0
    %v1883 = vsel %vm1800, %v1285, 0
    %v1886 = vsel %vm1800, %v1292, 0
    %v1889 = vsel %vm1800, %v1299, 0
    %v1892 = vsel %vm1800, %v1306, 0
    %v1895 = vsel %vm1800, %v1313, 0
    %1897 = vmatpush.bf16.msra.mxu0 %v1709
    %1898 = vmatpush.bf16.msra.mxu0 %v1708
    %1899 = vmatpush.bf16.msra.mxu0 %v1707
    %1900 = vmatpush.bf16.msra.mxu0 %v1706
    %1901 = vmatpush.bf16.msra.mxu0 %v1705
    %1902 = vmatpush.bf16.msra.mxu0 %v1704
    %1903 = vmatpush.bf16.msra.mxu0 %v1703
    %1904 = vmatpush.bf16.msra.mxu0 %v1702
    %1905 = vmatmul.bf16.gmra.mxu0 %v1090
    %v1906 = vpop.f32.mrf.mxu0
    %v1907 = vadd.f32 %v384, %v1906
    %v1908 = vpop.f32.mrf.mxu0
    %v1909 = vadd.f32 %v384, %v1908
    %1910 = vmatmul.bf16.gmra.mxu0 %v1097
    %v1911 = vpop.f32.mrf.mxu0
    %v1912 = vadd.f32 %v384, %v1911
    %v1913 = vpop.f32.mrf.mxu0
    %v1914 = vadd.f32 %v384, %v1913
    %1915 = vmatmul.bf16.gmra.mxu0 %v1104
    %v1916 = vpop.f32.mrf.mxu0
    %v1917 = vadd.f32 %v384, %v1916
    %v1918 = vpop.f32.mrf.mxu0
    %v1919 = vadd.f32 %v384, %v1918
    %1920 = vmatmul.bf16.gmra.mxu0 %v1111
    %v1921 = vpop.f32.mrf.mxu0
    %v1922 = vadd.f32 %v384, %v1921
    %v1923 = vpop.f32.mrf.mxu0
    %v1924 = vadd.f32 %v384, %v1923
    %1925 = vmatmul.bf16.gmra.mxu0 %v1118
    %v1926 = vpop.f32.mrf.mxu0
    %v1927 = vadd.f32 %v384, %v1926
    %v1928 = vpop.f32.mrf.mxu0
    %v1929 = vadd.f32 %v384, %v1928
    %1930 = vmatmul.bf16.gmra.mxu0 %v1125
    %v1931 = vpop.f32.mrf.mxu0
    %v1932 = vadd.f32 %v384, %v1931
    %v1933 = vpop.f32.mrf.mxu0
    %v1934 = vadd.f32 %v384, %v1933
    %1935 = vmatmul.bf16.gmra.mxu0 %v1132
    %v1936 = vpop.f32.mrf.mxu0
    %v1937 = vadd.f32 %v384, %v1936
    %v1938 = vpop.f32.mrf.mxu0
    %v1939 = vadd.f32 %v384, %v1938
    %1940 = vmatmul.bf16.gmra.mxu0 %v1139
    %v1941 = vpop.f32.mrf.mxu0
    %v1942 = vadd.f32 %v384, %v1941
    %v1943 = vpop.f32.mrf.mxu0
    %v1944 = vadd.f32 %v384, %v1943
    %1945 = vmatmul.bf16.gmra.mxu0 %v1146
    %v1946 = vpop.f32.mrf.mxu0
    %v1947 = vadd.f32 %v384, %v1946
    %v1948 = vpop.f32.mrf.mxu0
    %v1949 = vadd.f32 %v384, %v1948
    %1950 = vmatmul.bf16.gmra.mxu0 %v1153
    %v1951 = vpop.f32.mrf.mxu0
    %v1952 = vadd.f32 %v384, %v1951
    %v1953 = vpop.f32.mrf.mxu0
    %v1954 = vadd.f32 %v384, %v1953
    %1955 = vmatmul.bf16.gmra.mxu0 %v1160
    %v1956 = vpop.f32.mrf.mxu0
    %v1957 = vadd.f32 %v384, %v1956
    %v1958 = vpop.f32.mrf.mxu0
    %v1959 = vadd.f32 %v384, %v1958
    %1960 = vmatmul.bf16.gmra.mxu0 %v1167
    %v1961 = vpop.f32.mrf.mxu0
    %v1962 = vadd.f32 %v384, %v1961
    %v1963 = vpop.f32.mrf.mxu0
    %v1964 = vadd.f32 %v384, %v1963
    %1965 = vmatmul.bf16.gmra.mxu0 %v1174
    %v1966 = vpop.f32.mrf.mxu0
    %v1967 = vadd.f32 %v384, %v1966
    %v1968 = vpop.f32.mrf.mxu0
    %v1969 = vadd.f32 %v384, %v1968
    %1970 = vmatmul.bf16.gmra.mxu0 %v1181
    %v1971 = vpop.f32.mrf.mxu0
    %v1972 = vadd.f32 %v384, %v1971
    %v1973 = vpop.f32.mrf.mxu0
    %v1974 = vadd.f32 %v384, %v1973
    %1975 = vmatmul.bf16.gmra.mxu0 %v1188
    %v1976 = vpop.f32.mrf.mxu0
    %v1977 = vadd.f32 %v384, %v1976
    %v1978 = vpop.f32.mrf.mxu0
    %v1979 = vadd.f32 %v384, %v1978
    %1980 = vmatmul.bf16.gmra.mxu0 %v1195
    %v1981 = vpop.f32.mrf.mxu0
    %v1982 = vadd.f32 %v384, %v1981
    %v1983 = vpop.f32.mrf.mxu0
    %v1984 = vadd.f32 %v384, %v1983
    %1985 = vmatmul.bf16.gmra.mxu0 %v1202
    %v1986 = vpop.f32.mrf.mxu0
    %v1987 = vadd.f32 %v384, %v1986
    %v1988 = vpop.f32.mrf.mxu0
    %v1989 = vadd.f32 %v384, %v1988
    %1990 = vmatmul.bf16.gmra.mxu0 %v1209
    %v1991 = vpop.f32.mrf.mxu0
    %v1992 = vadd.f32 %v384, %v1991
    %v1993 = vpop.f32.mrf.mxu0
    %v1994 = vadd.f32 %v384, %v1993
    %1995 = vmatmul.bf16.gmra.mxu0 %v1216
    %v1996 = vpop.f32.mrf.mxu0
    %v1997 = vadd.f32 %v384, %v1996
    %v1998 = vpop.f32.mrf.mxu0
    %v1999 = vadd.f32 %v384, %v1998
    %2000 = vmatmul.bf16.gmra.mxu0 %v1223
    %v2001 = vpop.f32.mrf.mxu0
    %v2002 = vadd.f32 %v384, %v2001
    %v2003 = vpop.f32.mrf.mxu0
    %v2004 = vadd.f32 %v384, %v2003
    %2005 = vmatmul.bf16.gmra.mxu0 %v1230
    %v2006 = vpop.f32.mrf.mxu0
    %v2007 = vadd.f32 %v384, %v2006
    %v2008 = vpop.f32.mrf.mxu0
    %v2009 = vadd.f32 %v384, %v2008
    %2010 = vmatmul.bf16.gmra.mxu0 %v1237
    %v2011 = vpop.f32.mrf.mxu0
    %v2012 = vadd.f32 %v384, %v2011
    %v2013 = vpop.f32.mrf.mxu0
    %v2014 = vadd.f32 %v384, %v2013
    %2015 = vmatmul.bf16.gmra.mxu0 %v1244
    %v2016 = vpop.f32.mrf.mxu0
    %v2017 = vadd.f32 %v384, %v2016
    %v2018 = vpop.f32.mrf.mxu0
    %v2019 = vadd.f32 %v384, %v2018
    %2020 = vmatmul.bf16.gmra.mxu0 %v1251
    %v2021 = vpop.f32.mrf.mxu0
    %v2022 = vadd.f32 %v384, %v2021
    %v2023 = vpop.f32.mrf.mxu0
    %v2024 = vadd.f32 %v384, %v2023
    %2025 = vmatmul.bf16.gmra.mxu0 %v1258
    %v2026 = vpop.f32.mrf.mxu0
    %v2027 = vadd.f32 %v384, %v2026
    %v2028 = vpop.f32.mrf.mxu0
    %v2029 = vadd.f32 %v384, %v2028
    %2030 = vmatmul.bf16.gmra.mxu0 %v1265
    %v2031 = vpop.f32.mrf.mxu0
    %v2032 = vadd.f32 %v384, %v2031
    %v2033 = vpop.f32.mrf.mxu0
    %v2034 = vadd.f32 %v384, %v2033
    %2035 = vmatmul.bf16.gmra.mxu0 %v1272
    %v2036 = vpop.f32.mrf.mxu0
    %v2037 = vadd.f32 %v384, %v2036
    %v2038 = vpop.f32.mrf.mxu0
    %v2039 = vadd.f32 %v384, %v2038
    %2040 = vmatmul.bf16.gmra.mxu0 %v1279
    %v2041 = vpop.f32.mrf.mxu0
    %v2042 = vadd.f32 %v384, %v2041
    %v2043 = vpop.f32.mrf.mxu0
    %v2044 = vadd.f32 %v384, %v2043
    %2045 = vmatmul.bf16.gmra.mxu0 %v1286
    %v2046 = vpop.f32.mrf.mxu0
    %v2047 = vadd.f32 %v384, %v2046
    %v2048 = vpop.f32.mrf.mxu0
    %v2049 = vadd.f32 %v384, %v2048
    %2050 = vmatmul.bf16.gmra.mxu0 %v1293
    %v2051 = vpop.f32.mrf.mxu0
    %v2052 = vadd.f32 %v384, %v2051
    %v2053 = vpop.f32.mrf.mxu0
    %v2054 = vadd.f32 %v384, %v2053
    %2055 = vmatmul.bf16.gmra.mxu0 %v1300
    %v2056 = vpop.f32.mrf.mxu0
    %v2057 = vadd.f32 %v384, %v2056
    %v2058 = vpop.f32.mrf.mxu0
    %v2059 = vadd.f32 %v384, %v2058
    %2060 = vmatmul.bf16.gmra.mxu0 %v1307
    %v2061 = vpop.f32.mrf.mxu0
    %v2062 = vadd.f32 %v384, %v2061
    %v2063 = vpop.f32.mrf.mxu0
    %v2064 = vadd.f32 %v384, %v2063
    %2065 = vdwg.mxu0
    %2066 = vmatpush.bf16.msra.mxu0 %v1717
    %2067 = vmatpush.bf16.msra.mxu0 %v1716
    %2068 = vmatpush.bf16.msra.mxu0 %v1715
    %2069 = vmatpush.bf16.msra.mxu0 %v1714
    %2070 = vmatpush.bf16.msra.mxu0 %v1713
    %2071 = vmatpush.bf16.msra.mxu0 %v1712
    %2072 = vmatpush.bf16.msra.mxu0 %v1711
    %2073 = vmatpush.bf16.msra.mxu0 %v1710
    %2074 = vmatmul.bf16.gmra.mxu0 %v1091
    %v2075 = vpop.f32.mrf.mxu0
    %v2076 = vadd.f32 %v1907, %v2075
    %v2077 = vpop.f32.mrf.mxu0
    %v2078 = vadd.f32 %v1909, %v2077
    %2079 = vmatmul.bf16.gmra.mxu0 %v1098
    %v2080 = vpop.f32.mrf.mxu0
    %v2081 = vadd.f32 %v1912, %v2080
    %v2082 = vpop.f32.mrf.mxu0
    %v2083 = vadd.f32 %v1914, %v2082
    %2084 = vmatmul.bf16.gmra.mxu0 %v1105
    %v2085 = vpop.f32.mrf.mxu0
    %v2086 = vadd.f32 %v1917, %v2085
    %v2087 = vpop.f32.mrf.mxu0
    %v2088 = vadd.f32 %v1919, %v2087
    %2089 = vmatmul.bf16.gmra.mxu0 %v1112
    %v2090 = vpop.f32.mrf.mxu0
    %v2091 = vadd.f32 %v1922, %v2090
    %v2092 = vpop.f32.mrf.mxu0
    %v2093 = vadd.f32 %v1924, %v2092
    %2094 = vmatmul.bf16.gmra.mxu0 %v1119
    %v2095 = vpop.f32.mrf.mxu0
    %v2096 = vadd.f32 %v1927, %v2095
    %v2097 = vpop.f32.mrf.mxu0
    %v2098 = vadd.f32 %v1929, %v2097
    %2099 = vmatmul.bf16.gmra.mxu0 %v1126
    %v2100 = vpop.f32.mrf.mxu0
    %v2101 = vadd.f32 %v1932, %v2100
    %v2102 = vpop.f32.mrf.mxu0
    %v2103 = vadd.f32 %v1934, %v2102
    %2104 = vmatmul.bf16.gmra.mxu0 %v1133
    %v2105 = vpop.f32.mrf.mxu0
    %v2106 = vadd.f32 %v1937, %v2105
    %v2107 = vpop.f32.mrf.mxu0
    %v2108 = vadd.f32 %v1939, %v2107
    %2109 = vmatmul.bf16.gmra.mxu0 %v1140
    %v2110 = vpop.f32.mrf.mxu0
    %v2111 = vadd.f32 %v1942, %v2110
    %v2112 = vpop.f32.mrf.mxu0
    %v2113 = vadd.f32 %v1944, %v2112
    %2114 = vmatmul.bf16.gmra.mxu0 %v1147
    %v2115 = vpop.f32.mrf.mxu0
    %v2116 = vadd.f32 %v1947, %v2115
    %v2117 = vpop.f32.mrf.mxu0
    %v2118 = vadd.f32 %v1949, %v2117
    %2119 = vmatmul.bf16.gmra.mxu0 %v1154
    %v2120 = vpop.f32.mrf.mxu0
    %v2121 = vadd.f32 %v1952, %v2120
    %v2122 = vpop.f32.mrf.mxu0
    %v2123 = vadd.f32 %v1954, %v2122
    %2124 = vmatmul.bf16.gmra.mxu0 %v1161
    %v2125 = vpop.f32.mrf.mxu0
    %v2126 = vadd.f32 %v1957, %v2125
    %v2127 = vpop.f32.mrf.mxu0
    %v2128 = vadd.f32 %v1959, %v2127
    %2129 = vmatmul.bf16.gmra.mxu0 %v1168
    %v2130 = vpop.f32.mrf.mxu0
    %v2131 = vadd.f32 %v1962, %v2130
    %v2132 = vpop.f32.mrf.mxu0
    %v2133 = vadd.f32 %v1964, %v2132
    %2134 = vmatmul.bf16.gmra.mxu0 %v1175
    %v2135 = vpop.f32.mrf.mxu0
    %v2136 = vadd.f32 %v1967, %v2135
    %v2137 = vpop.f32.mrf.mxu0
    %v2138 = vadd.f32 %v1969, %v2137
    %2139 = vmatmul.bf16.gmra.mxu0 %v1182
    %v2140 = vpop.f32.mrf.mxu0
    %v2141 = vadd.f32 %v1972, %v2140
    %v2142 = vpop.f32.mrf.mxu0
    %v2143 = vadd.f32 %v1974, %v2142
    %2144 = vmatmul.bf16.gmra.mxu0 %v1189
    %v2145 = vpop.f32.mrf.mxu0
    %v2146 = vadd.f32 %v1977, %v2145
    %v2147 = vpop.f32.mrf.mxu0
    %v2148 = vadd.f32 %v1979, %v2147
    %2149 = vmatmul.bf16.gmra.mxu0 %v1196
    %v2150 = vpop.f32.mrf.mxu0
    %v2151 = vadd.f32 %v1982, %v2150
    %v2152 = vpop.f32.mrf.mxu0
    %v2153 = vadd.f32 %v1984, %v2152
    %2154 = vmatmul.bf16.gmra.mxu0 %v1203
    %v2155 = vpop.f32.mrf.mxu0
    %v2156 = vadd.f32 %v1987, %v2155
    %v2157 = vpop.f32.mrf.mxu0
    %v2158 = vadd.f32 %v1989, %v2157
    %2159 = vmatmul.bf16.gmra.mxu0 %v1210
    %v2160 = vpop.f32.mrf.mxu0
    %v2161 = vadd.f32 %v1992, %v2160
    %v2162 = vpop.f32.mrf.mxu0
    %v2163 = vadd.f32 %v1994, %v2162
    %2164 = vmatmul.bf16.gmra.mxu0 %v1217
    %v2165 = vpop.f32.mrf.mxu0
    %v2166 = vadd.f32 %v1997, %v2165
    %v2167 = vpop.f32.mrf.mxu0
    %v2168 = vadd.f32 %v1999, %v2167
    %2169 = vmatmul.bf16.gmra.mxu0 %v1224
    %v2170 = vpop.f32.mrf.mxu0
    %v2171 = vadd.f32 %v2002, %v2170
    %v2172 = vpop.f32.mrf.mxu0
    %v2173 = vadd.f32 %v2004, %v2172
    %2174 = vmatmul.bf16.gmra.mxu0 %v1231
    %v2175 = vpop.f32.mrf.mxu0
    %v2176 = vadd.f32 %v2007, %v2175
    %v2177 = vpop.f32.mrf.mxu0
    %v2178 = vadd.f32 %v2009, %v2177
    %2179 = vmatmul.bf16.gmra.mxu0 %v1238
    %v2180 = vpop.f32.mrf.mxu0
    %v2181 = vadd.f32 %v2012, %v2180
    %v2182 = vpop.f32.mrf.mxu0
    %v2183 = vadd.f32 %v2014, %v2182
    %2184 = vmatmul.bf16.gmra.mxu0 %v1245
    %v2185 = vpop.f32.mrf.mxu0
    %v2186 = vadd.f32 %v2017, %v2185
    %v2187 = vpop.f32.mrf.mxu0
    %v2188 = vadd.f32 %v2019, %v2187
    %2189 = vmatmul.bf16.gmra.mxu0 %v1252
    %v2190 = vpop.f32.mrf.mxu0
    %v2191 = vadd.f32 %v2022, %v2190
    %v2192 = vpop.f32.mrf.mxu0
    %v2193 = vadd.f32 %v2024, %v2192
    %2194 = vmatmul.bf16.gmra.mxu0 %v1259
    %v2195 = vpop.f32.mrf.mxu0
    %v2196 = vadd.f32 %v2027, %v2195
    %v2197 = vpop.f32.mrf.mxu0
    %v2198 = vadd.f32 %v2029, %v2197
    %2199 = vmatmul.bf16.gmra.mxu0 %v1266
    %v2200 = vpop.f32.mrf.mxu0
    %v2201 = vadd.f32 %v2032, %v2200
    %v2202 = vpop.f32.mrf.mxu0
    %v2203 = vadd.f32 %v2034, %v2202
    %2204 = vmatmul.bf16.gmra.mxu0 %v1273
    %v2205 = vpop.f32.mrf.mxu0
    %v2206 = vadd.f32 %v2037, %v2205
    %v2207 = vpop.f32.mrf.mxu0
    %v2208 = vadd.f32 %v2039, %v2207
    %2209 = vmatmul.bf16.gmra.mxu0 %v1280
    %v2210 = vpop.f32.mrf.mxu0
    %v2211 = vadd.f32 %v2042, %v2210
    %v2212 = vpop.f32.mrf.mxu0
    %v2213 = vadd.f32 %v2044, %v2212
    %2214 = vmatmul.bf16.gmra.mxu0 %v1287
    %v2215 = vpop.f32.mrf.mxu0
    %v2216 = vadd.f32 %v2047, %v2215
    %v2217 = vpop.f32.mrf.mxu0
    %v2218 = vadd.f32 %v2049, %v2217
    %2219 = vmatmul.bf16.gmra.mxu0 %v1294
    %v2220 = vpop.f32.mrf.mxu0
    %v2221 = vadd.f32 %v2052, %v2220
    %v2222 = vpop.f32.mrf.mxu0
    %v2223 = vadd.f32 %v2054, %v2222
    %2224 = vmatmul.bf16.gmra.mxu0 %v1301
    %v2225 = vpop.f32.mrf.mxu0
    %v2226 = vadd.f32 %v2057, %v2225
    %v2227 = vpop.f32.mrf.mxu0
    %v2228 = vadd.f32 %v2059, %v2227
    %2229 = vmatmul.bf16.gmra.mxu0 %v1308
    %v2230 = vpop.f32.mrf.mxu0
    %v2231 = vadd.f32 %v2062, %v2230
    %v2232 = vpop.f32.mrf.mxu0
    %v2233 = vadd.f32 %v2064, %v2232
    %2234 = vdwg.mxu0
    %2235 = vmatpush.bf16.msra.mxu0 %v1725
    %2236 = vmatpush.bf16.msra.mxu0 %v1724
    %2237 = vmatpush.bf16.msra.mxu0 %v1723
    %2238 = vmatpush.bf16.msra.mxu0 %v1722
    %2239 = vmatpush.bf16.msra.mxu0 %v1721
    %2240 = vmatpush.bf16.msra.mxu0 %v1720
    %2241 = vmatpush.bf16.msra.mxu0 %v1719
    %2242 = vmatpush.bf16.msra.mxu0 %v1718
    %2243 = vmatmul.bf16.gmra.mxu0 %v1092
    %v2244 = vpop.f32.mrf.mxu0
    %v2245 = vadd.f32 %v2076, %v2244
    %v2246 = vpop.f32.mrf.mxu0
    %v2247 = vadd.f32 %v2078, %v2246
    %2248 = vmatmul.bf16.gmra.mxu0 %v1099
    %v2249 = vpop.f32.mrf.mxu0
    %v2250 = vadd.f32 %v2081, %v2249
    %v2251 = vpop.f32.mrf.mxu0
    %v2252 = vadd.f32 %v2083, %v2251
    %2253 = vmatmul.bf16.gmra.mxu0 %v1106
    %v2254 = vpop.f32.mrf.mxu0
    %v2255 = vadd.f32 %v2086, %v2254
    %v2256 = vpop.f32.mrf.mxu0
    %v2257 = vadd.f32 %v2088, %v2256
    %2258 = vmatmul.bf16.gmra.mxu0 %v1113
    %v2259 = vpop.f32.mrf.mxu0
    %v2260 = vadd.f32 %v2091, %v2259
    %v2261 = vpop.f32.mrf.mxu0
    %v2262 = vadd.f32 %v2093, %v2261
    %2263 = vmatmul.bf16.gmra.mxu0 %v1120
    %v2264 = vpop.f32.mrf.mxu0
    %v2265 = vadd.f32 %v2096, %v2264
    %v2266 = vpop.f32.mrf.mxu0
    %v2267 = vadd.f32 %v2098, %v2266
    %2268 = vmatmul.bf16.gmra.mxu0 %v1127
    %v2269 = vpop.f32.mrf.mxu0
    %v2270 = vadd.f32 %v2101, %v2269
    %v2271 = vpop.f32.mrf.mxu0
    %v2272 = vadd.f32 %v2103, %v2271
    %2273 = vmatmul.bf16.gmra.mxu0 %v1134
    %v2274 = vpop.f32.mrf.mxu0
    %v2275 = vadd.f32 %v2106, %v2274
    %v2276 = vpop.f32.mrf.mxu0
    %v2277 = vadd.f32 %v2108, %v2276
    %2278 = vmatmul.bf16.gmra.mxu0 %v1141
    %v2279 = vpop.f32.mrf.mxu0
    %v2280 = vadd.f32 %v2111, %v2279
    %v2281 = vpop.f32.mrf.mxu0
    %v2282 = vadd.f32 %v2113, %v2281
    %2283 = vmatmul.bf16.gmra.mxu0 %v1148
    %v2284 = vpop.f32.mrf.mxu0
    %v2285 = vadd.f32 %v2116, %v2284
    %v2286 = vpop.f32.mrf.mxu0
    %v2287 = vadd.f32 %v2118, %v2286
    %2288 = vmatmul.bf16.gmra.mxu0 %v1155
    %v2289 = vpop.f32.mrf.mxu0
    %v2290 = vadd.f32 %v2121, %v2289
    %v2291 = vpop.f32.mrf.mxu0
    %v2292 = vadd.f32 %v2123, %v2291
    %2293 = vmatmul.bf16.gmra.mxu0 %v1162
    %v2294 = vpop.f32.mrf.mxu0
    %v2295 = vadd.f32 %v2126, %v2294
    %v2296 = vpop.f32.mrf.mxu0
    %v2297 = vadd.f32 %v2128, %v2296
    %2298 = vmatmul.bf16.gmra.mxu0 %v1169
    %v2299 = vpop.f32.mrf.mxu0
    %v2300 = vadd.f32 %v2131, %v2299
    %v2301 = vpop.f32.mrf.mxu0
    %v2302 = vadd.f32 %v2133, %v2301
    %2303 = vmatmul.bf16.gmra.mxu0 %v1176
    %v2304 = vpop.f32.mrf.mxu0
    %v2305 = vadd.f32 %v2136, %v2304
    %v2306 = vpop.f32.mrf.mxu0
    %v2307 = vadd.f32 %v2138, %v2306
    %2308 = vmatmul.bf16.gmra.mxu0 %v1183
    %v2309 = vpop.f32.mrf.mxu0
    %v2310 = vadd.f32 %v2141, %v2309
    %v2311 = vpop.f32.mrf.mxu0
    %v2312 = vadd.f32 %v2143, %v2311
    %2313 = vmatmul.bf16.gmra.mxu0 %v1190
    %v2314 = vpop.f32.mrf.mxu0
    %v2315 = vadd.f32 %v2146, %v2314
    %v2316 = vpop.f32.mrf.mxu0
    %v2317 = vadd.f32 %v2148, %v2316
    %2318 = vmatmul.bf16.gmra.mxu0 %v1197
    %v2319 = vpop.f32.mrf.mxu0
    %v2320 = vadd.f32 %v2151, %v2319
    %v2321 = vpop.f32.mrf.mxu0
    %v2322 = vadd.f32 %v2153, %v2321
    %2323 = vmatmul.bf16.gmra.mxu0 %v1204
    %v2324 = vpop.f32.mrf.mxu0
    %v2325 = vadd.f32 %v2156, %v2324
    %v2326 = vpop.f32.mrf.mxu0
    %v2327 = vadd.f32 %v2158, %v2326
    %2328 = vmatmul.bf16.gmra.mxu0 %v1211
    %v2329 = vpop.f32.mrf.mxu0
    %v2330 = vadd.f32 %v2161, %v2329
    %v2331 = vpop.f32.mrf.mxu0
    %v2332 = vadd.f32 %v2163, %v2331
    %2333 = vmatmul.bf16.gmra.mxu0 %v1218
    %v2334 = vpop.f32.mrf.mxu0
    %v2335 = vadd.f32 %v2166, %v2334
    %v2336 = vpop.f32.mrf.mxu0
    %v2337 = vadd.f32 %v2168, %v2336
    %2338 = vmatmul.bf16.gmra.mxu0 %v1225
    %v2339 = vpop.f32.mrf.mxu0
    %v2340 = vadd.f32 %v2171, %v2339
    %v2341 = vpop.f32.mrf.mxu0
    %v2342 = vadd.f32 %v2173, %v2341
    %2343 = vmatmul.bf16.gmra.mxu0 %v1232
    %v2344 = vpop.f32.mrf.mxu0
    %v2345 = vadd.f32 %v2176, %v2344
    %v2346 = vpop.f32.mrf.mxu0
    %v2347 = vadd.f32 %v2178, %v2346
    %2348 = vmatmul.bf16.gmra.mxu0 %v1239
    %v2349 = vpop.f32.mrf.mxu0
    %v2350 = vadd.f32 %v2181, %v2349
    %v2351 = vpop.f32.mrf.mxu0
    %v2352 = vadd.f32 %v2183, %v2351
    %2353 = vmatmul.bf16.gmra.mxu0 %v1246
    %v2354 = vpop.f32.mrf.mxu0
    %v2355 = vadd.f32 %v2186, %v2354
    %v2356 = vpop.f32.mrf.mxu0
    %v2357 = vadd.f32 %v2188, %v2356
    %2358 = vmatmul.bf16.gmra.mxu0 %v1253
    %v2359 = vpop.f32.mrf.mxu0
    %v2360 = vadd.f32 %v2191, %v2359
    %v2361 = vpop.f32.mrf.mxu0
    %v2362 = vadd.f32 %v2193, %v2361
    %2363 = vmatmul.bf16.gmra.mxu0 %v1260
    %v2364 = vpop.f32.mrf.mxu0
    %v2365 = vadd.f32 %v2196, %v2364
    %v2366 = vpop.f32.mrf.mxu0
    %v2367 = vadd.f32 %v2198, %v2366
    %2368 = vmatmul.bf16.gmra.mxu0 %v1267
    %v2369 = vpop.f32.mrf.mxu0
    %v2370 = vadd.f32 %v2201, %v2369
    %v2371 = vpop.f32.mrf.mxu0
    %v2372 = vadd.f32 %v2203, %v2371
    %2373 = vmatmul.bf16.gmra.mxu0 %v1274
    %v2374 = vpop.f32.mrf.mxu0
    %v2375 = vadd.f32 %v2206, %v2374
    %v2376 = vpop.f32.mrf.mxu0
    %v2377 = vadd.f32 %v2208, %v2376
    %2378 = vmatmul.bf16.gmra.mxu0 %v1281
    %v2379 = vpop.f32.mrf.mxu0
    %v2380 = vadd.f32 %v2211, %v2379
    %v2381 = vpop.f32.mrf.mxu0
    %v2382 = vadd.f32 %v2213, %v2381
    %2383 = vmatmul.bf16.gmra.mxu0 %v1288
    %v2384 = vpop.f32.mrf.mxu0
    %v2385 = vadd.f32 %v2216, %v2384
    %v2386 = vpop.f32.mrf.mxu0
    %v2387 = vadd.f32 %v2218, %v2386
    %2388 = vmatmul.bf16.gmra.mxu0 %v1295
    %v2389 = vpop.f32.mrf.mxu0
    %v2390 = vadd.f32 %v2221, %v2389
    %v2391 = vpop.f32.mrf.mxu0
    %v2392 = vadd.f32 %v2223, %v2391
    %2393 = vmatmul.bf16.gmra.mxu0 %v1302
    %v2394 = vpop.f32.mrf.mxu0
    %v2395 = vadd.f32 %v2226, %v2394
    %v2396 = vpop.f32.mrf.mxu0
    %v2397 = vadd.f32 %v2228, %v2396
    %2398 = vmatmul.bf16.gmra.mxu0 %v1309
    %v2399 = vpop.f32.mrf.mxu0
    %v2400 = vadd.f32 %v2231, %v2399
    %v2401 = vpop.f32.mrf.mxu0
    %v2402 = vadd.f32 %v2233, %v2401
    %2403 = vdwg.mxu0
    %2404 = vmatpush.bf16.msra.mxu0 %v1733
    %2405 = vmatpush.bf16.msra.mxu0 %v1732
    %2406 = vmatpush.bf16.msra.mxu0 %v1731
    %2407 = vmatpush.bf16.msra.mxu0 %v1730
    %2408 = vmatpush.bf16.msra.mxu0 %v1729
    %2409 = vmatpush.bf16.msra.mxu0 %v1728
    %2410 = vmatpush.bf16.msra.mxu0 %v1727
    %2411 = vmatpush.bf16.msra.mxu0 %v1726
    %2412 = vmatmul.bf16.gmra.mxu0 %v1093
    %v2413 = vpop.f32.mrf.mxu0
    %v2414 = vadd.f32 %v2245, %v2413
    %v2415 = vpop.f32.mrf.mxu0
    %v2416 = vadd.f32 %v2247, %v2415
    %2417 = vmatmul.bf16.gmra.mxu0 %v1100
    %v2418 = vpop.f32.mrf.mxu0
    %v2419 = vadd.f32 %v2250, %v2418
    %v2420 = vpop.f32.mrf.mxu0
    %v2421 = vadd.f32 %v2252, %v2420
    %2422 = vmatmul.bf16.gmra.mxu0 %v1107
    %v2423 = vpop.f32.mrf.mxu0
    %v2424 = vadd.f32 %v2255, %v2423
    %v2425 = vpop.f32.mrf.mxu0
    %v2426 = vadd.f32 %v2257, %v2425
    %2427 = vmatmul.bf16.gmra.mxu0 %v1114
    %v2428 = vpop.f32.mrf.mxu0
    %v2429 = vadd.f32 %v2260, %v2428
    %v2430 = vpop.f32.mrf.mxu0
    %v2431 = vadd.f32 %v2262, %v2430
    %2432 = vmatmul.bf16.gmra.mxu0 %v1121
    %v2433 = vpop.f32.mrf.mxu0
    %v2434 = vadd.f32 %v2265, %v2433
    %v2435 = vpop.f32.mrf.mxu0
    %v2436 = vadd.f32 %v2267, %v2435
    %2437 = vmatmul.bf16.gmra.mxu0 %v1128
    %v2438 = vpop.f32.mrf.mxu0
    %v2439 = vadd.f32 %v2270, %v2438
    %v2440 = vpop.f32.mrf.mxu0
    %v2441 = vadd.f32 %v2272, %v2440
    %2442 = vmatmul.bf16.gmra.mxu0 %v1135
    %v2443 = vpop.f32.mrf.mxu0
    %v2444 = vadd.f32 %v2275, %v2443
    %v2445 = vpop.f32.mrf.mxu0
    %v2446 = vadd.f32 %v2277, %v2445
    %2447 = vmatmul.bf16.gmra.mxu0 %v1142
    %v2448 = vpop.f32.mrf.mxu0
    %v2449 = vadd.f32 %v2280, %v2448
    %v2450 = vpop.f32.mrf.mxu0
    %v2451 = vadd.f32 %v2282, %v2450
    %2452 = vmatmul.bf16.gmra.mxu0 %v1149
    %v2453 = vpop.f32.mrf.mxu0
    %v2454 = vadd.f32 %v2285, %v2453
    %v2455 = vpop.f32.mrf.mxu0
    %v2456 = vadd.f32 %v2287, %v2455
    %2457 = vmatmul.bf16.gmra.mxu0 %v1156
    %v2458 = vpop.f32.mrf.mxu0
    %v2459 = vadd.f32 %v2290, %v2458
    %v2460 = vpop.f32.mrf.mxu0
    %v2461 = vadd.f32 %v2292, %v2460
    %2462 = vmatmul.bf16.gmra.mxu0 %v1163
    %v2463 = vpop.f32.mrf.mxu0
    %v2464 = vadd.f32 %v2295, %v2463
    %v2465 = vpop.f32.mrf.mxu0
    %v2466 = vadd.f32 %v2297, %v2465
    %2467 = vmatmul.bf16.gmra.mxu0 %v1170
    %v2468 = vpop.f32.mrf.mxu0
    %v2469 = vadd.f32 %v2300, %v2468
    %v2470 = vpop.f32.mrf.mxu0
    %v2471 = vadd.f32 %v2302, %v2470
    %2472 = vmatmul.bf16.gmra.mxu0 %v1177
    %v2473 = vpop.f32.mrf.mxu0
    %v2474 = vadd.f32 %v2305, %v2473
    %v2475 = vpop.f32.mrf.mxu0
    %v2476 = vadd.f32 %v2307, %v2475
    %2477 = vmatmul.bf16.gmra.mxu0 %v1184
    %v2478 = vpop.f32.mrf.mxu0
    %v2479 = vadd.f32 %v2310, %v2478
    %v2480 = vpop.f32.mrf.mxu0
    %v2481 = vadd.f32 %v2312, %v2480
    %2482 = vmatmul.bf16.gmra.mxu0 %v1191
    %v2483 = vpop.f32.mrf.mxu0
    %v2484 = vadd.f32 %v2315, %v2483
    %v2485 = vpop.f32.mrf.mxu0
    %v2486 = vadd.f32 %v2317, %v2485
    %2487 = vmatmul.bf16.gmra.mxu0 %v1198
    %v2488 = vpop.f32.mrf.mxu0
    %v2489 = vadd.f32 %v2320, %v2488
    %v2490 = vpop.f32.mrf.mxu0
    %v2491 = vadd.f32 %v2322, %v2490
    %2492 = vmatmul.bf16.gmra.mxu0 %v1205
    %v2493 = vpop.f32.mrf.mxu0
    %v2494 = vadd.f32 %v2325, %v2493
    %v2495 = vpop.f32.mrf.mxu0
    %v2496 = vadd.f32 %v2327, %v2495
    %2497 = vmatmul.bf16.gmra.mxu0 %v1212
    %v2498 = vpop.f32.mrf.mxu0
    %v2499 = vadd.f32 %v2330, %v2498
    %v2500 = vpop.f32.mrf.mxu0
    %v2501 = vadd.f32 %v2332, %v2500
    %2502 = vmatmul.bf16.gmra.mxu0 %v1219
    %v2503 = vpop.f32.mrf.mxu0
    %v2504 = vadd.f32 %v2335, %v2503
    %v2505 = vpop.f32.mrf.mxu0
    %v2506 = vadd.f32 %v2337, %v2505
    %2507 = vmatmul.bf16.gmra.mxu0 %v1226
    %v2508 = vpop.f32.mrf.mxu0
    %v2509 = vadd.f32 %v2340, %v2508
    %v2510 = vpop.f32.mrf.mxu0
    %v2511 = vadd.f32 %v2342, %v2510
    %2512 = vmatmul.bf16.gmra.mxu0 %v1233
    %v2513 = vpop.f32.mrf.mxu0
    %v2514 = vadd.f32 %v2345, %v2513
    %v2515 = vpop.f32.mrf.mxu0
    %v2516 = vadd.f32 %v2347, %v2515
    %2517 = vmatmul.bf16.gmra.mxu0 %v1240
    %v2518 = vpop.f32.mrf.mxu0
    %v2519 = vadd.f32 %v2350, %v2518
    %v2520 = vpop.f32.mrf.mxu0
    %v2521 = vadd.f32 %v2352, %v2520
    %2522 = vmatmul.bf16.gmra.mxu0 %v1247
    %v2523 = vpop.f32.mrf.mxu0
    %v2524 = vadd.f32 %v2355, %v2523
    %v2525 = vpop.f32.mrf.mxu0
    %v2526 = vadd.f32 %v2357, %v2525
    %2527 = vmatmul.bf16.gmra.mxu0 %v1254
    %v2528 = vpop.f32.mrf.mxu0
    %v2529 = vadd.f32 %v2360, %v2528
    %v2530 = vpop.f32.mrf.mxu0
    %v2531 = vadd.f32 %v2362, %v2530
    %2532 = vmatmul.bf16.gmra.mxu0 %v1261
    %v2533 = vpop.f32.mrf.mxu0
    %v2534 = vadd.f32 %v2365, %v2533
    %v2535 = vpop.f32.mrf.mxu0
    %v2536 = vadd.f32 %v2367, %v2535
    %2537 = vmatmul.bf16.gmra.mxu0 %v1268
    %v2538 = vpop.f32.mrf.mxu0
    %v2539 = vadd.f32 %v2370, %v2538
    %v2540 = vpop.f32.mrf.mxu0
    %v2541 = vadd.f32 %v2372, %v2540
    %2542 = vmatmul.bf16.gmra.mxu0 %v1275
    %v2543 = vpop.f32.mrf.mxu0
    %v2544 = vadd.f32 %v2375, %v2543
    %v2545 = vpop.f32.mrf.mxu0
    %v2546 = vadd.f32 %v2377, %v2545
    %2547 = vmatmul.bf16.gmra.mxu0 %v1282
    %v2548 = vpop.f32.mrf.mxu0
    %v2549 = vadd.f32 %v2380, %v2548
    %v2550 = vpop.f32.mrf.mxu0
    %v2551 = vadd.f32 %v2382, %v2550
    %2552 = vmatmul.bf16.gmra.mxu0 %v1289
    %v2553 = vpop.f32.mrf.mxu0
    %v2554 = vadd.f32 %v2385, %v2553
    %v2555 = vpop.f32.mrf.mxu0
    %v2556 = vadd.f32 %v2387, %v2555
    %2557 = vmatmul.bf16.gmra.mxu0 %v1296
    %v2558 = vpop.f32.mrf.mxu0
    %v2559 = vadd.f32 %v2390, %v2558
    %v2560 = vpop.f32.mrf.mxu0
    %v2561 = vadd.f32 %v2392, %v2560
    %2562 = vmatmul.bf16.gmra.mxu0 %v1303
    %v2563 = vpop.f32.mrf.mxu0
    %v2564 = vadd.f32 %v2395, %v2563
    %v2565 = vpop.f32.mrf.mxu0
    %v2566 = vadd.f32 %v2397, %v2565
    %2567 = vmatmul.bf16.gmra.mxu0 %v1310
    %v2568 = vpop.f32.mrf.mxu0
    %v2569 = vadd.f32 %v2400, %v2568
    %v2570 = vpop.f32.mrf.mxu0
    %v2571 = vadd.f32 %v2402, %v2570
    %2572 = vdwg.mxu0
    %2573 = vmatpush.bf16.msra.mxu0 %v1741
    %2574 = vmatpush.bf16.msra.mxu0 %v1740
    %2575 = vmatpush.bf16.msra.mxu0 %v1739
    %2576 = vmatpush.bf16.msra.mxu0 %v1738
    %2577 = vmatpush.bf16.msra.mxu0 %v1737
    %2578 = vmatpush.bf16.msra.mxu0 %v1736
    %2579 = vmatpush.bf16.msra.mxu0 %v1735
    %2580 = vmatpush.bf16.msra.mxu0 %v1734
    %2581 = vmatmul.bf16.gmra.mxu0 %v1094
    %v2582 = vpop.f32.mrf.mxu0
    %v2583 = vadd.f32 %v2414, %v2582
    %v2584 = vpop.f32.mrf.mxu0
    %v2585 = vadd.f32 %v2416, %v2584
    %2586 = vmatmul.bf16.gmra.mxu0 %v1101
    %v2587 = vpop.f32.mrf.mxu0
    %v2588 = vadd.f32 %v2419, %v2587
    %v2589 = vpop.f32.mrf.mxu0
    %v2590 = vadd.f32 %v2421, %v2589
    %2591 = vmatmul.bf16.gmra.mxu0 %v1108
    %v2592 = vpop.f32.mrf.mxu0
    %v2593 = vadd.f32 %v2424, %v2592
    %v2594 = vpop.f32.mrf.mxu0
    %v2595 = vadd.f32 %v2426, %v2594
    %2596 = vmatmul.bf16.gmra.mxu0 %v1115
    %v2597 = vpop.f32.mrf.mxu0
    %v2598 = vadd.f32 %v2429, %v2597
    %v2599 = vpop.f32.mrf.mxu0
    %v2600 = vadd.f32 %v2431, %v2599
    %2601 = vmatmul.bf16.gmra.mxu0 %v1122
    %v2602 = vpop.f32.mrf.mxu0
    %v2603 = vadd.f32 %v2434, %v2602
    %v2604 = vpop.f32.mrf.mxu0
    %v2605 = vadd.f32 %v2436, %v2604
    %2606 = vmatmul.bf16.gmra.mxu0 %v1129
    %v2607 = vpop.f32.mrf.mxu0
    %v2608 = vadd.f32 %v2439, %v2607
    %v2609 = vpop.f32.mrf.mxu0
    %v2610 = vadd.f32 %v2441, %v2609
    %2611 = vmatmul.bf16.gmra.mxu0 %v1136
    %v2612 = vpop.f32.mrf.mxu0
    %v2613 = vadd.f32 %v2444, %v2612
    %v2614 = vpop.f32.mrf.mxu0
    %v2615 = vadd.f32 %v2446, %v2614
    %2616 = vmatmul.bf16.gmra.mxu0 %v1143
    %v2617 = vpop.f32.mrf.mxu0
    %v2618 = vadd.f32 %v2449, %v2617
    %v2619 = vpop.f32.mrf.mxu0
    %v2620 = vadd.f32 %v2451, %v2619
    %2621 = vmatmul.bf16.gmra.mxu0 %v1150
    %v2622 = vpop.f32.mrf.mxu0
    %v2623 = vadd.f32 %v2454, %v2622
    %v2624 = vpop.f32.mrf.mxu0
    %v2625 = vadd.f32 %v2456, %v2624
    %2626 = vmatmul.bf16.gmra.mxu0 %v1157
    %v2627 = vpop.f32.mrf.mxu0
    %v2628 = vadd.f32 %v2459, %v2627
    %v2629 = vpop.f32.mrf.mxu0
    %v2630 = vadd.f32 %v2461, %v2629
    %2631 = vmatmul.bf16.gmra.mxu0 %v1164
    %v2632 = vpop.f32.mrf.mxu0
    %v2633 = vadd.f32 %v2464, %v2632
    %v2634 = vpop.f32.mrf.mxu0
    %v2635 = vadd.f32 %v2466, %v2634
    %2636 = vmatmul.bf16.gmra.mxu0 %v1171
    %v2637 = vpop.f32.mrf.mxu0
    %v2638 = vadd.f32 %v2469, %v2637
    %v2639 = vpop.f32.mrf.mxu0
    %v2640 = vadd.f32 %v2471, %v2639
    %2641 = vmatmul.bf16.gmra.mxu0 %v1178
    %v2642 = vpop.f32.mrf.mxu0
    %v2643 = vadd.f32 %v2474, %v2642
    %v2644 = vpop.f32.mrf.mxu0
    %v2645 = vadd.f32 %v2476, %v2644
    %2646 = vmatmul.bf16.gmra.mxu0 %v1185
    %v2647 = vpop.f32.mrf.mxu0
    %v2648 = vadd.f32 %v2479, %v2647
    %v2649 = vpop.f32.mrf.mxu0
    %v2650 = vadd.f32 %v2481, %v2649
    %2651 = vmatmul.bf16.gmra.mxu0 %v1192
    %v2652 = vpop.f32.mrf.mxu0
    %v2653 = vadd.f32 %v2484, %v2652
    %v2654 = vpop.f32.mrf.mxu0
    %v2655 = vadd.f32 %v2486, %v2654
    %2656 = vmatmul.bf16.gmra.mxu0 %v1199
    %v2657 = vpop.f32.mrf.mxu0
    %v2658 = vadd.f32 %v2489, %v2657
    %v2659 = vpop.f32.mrf.mxu0
    %v2660 = vadd.f32 %v2491, %v2659
    %2661 = vmatmul.bf16.gmra.mxu0 %v1206
    %v2662 = vpop.f32.mrf.mxu0
    %v2663 = vadd.f32 %v2494, %v2662
    %v2664 = vpop.f32.mrf.mxu0
    %v2665 = vadd.f32 %v2496, %v2664
    %2666 = vmatmul.bf16.gmra.mxu0 %v1213
    %v2667 = vpop.f32.mrf.mxu0
    %v2668 = vadd.f32 %v2499, %v2667
    %v2669 = vpop.f32.mrf.mxu0
    %v2670 = vadd.f32 %v2501, %v2669
    %2671 = vmatmul.bf16.gmra.mxu0 %v1220
    %v2672 = vpop.f32.mrf.mxu0
    %v2673 = vadd.f32 %v2504, %v2672
    %v2674 = vpop.f32.mrf.mxu0
    %v2675 = vadd.f32 %v2506, %v2674
    %2676 = vmatmul.bf16.gmra.mxu0 %v1227
    %v2677 = vpop.f32.mrf.mxu0
    %v2678 = vadd.f32 %v2509, %v2677
    %v2679 = vpop.f32.mrf.mxu0
    %v2680 = vadd.f32 %v2511, %v2679
    %2681 = vmatmul.bf16.gmra.mxu0 %v1234
    %v2682 = vpop.f32.mrf.mxu0
    %v2683 = vadd.f32 %v2514, %v2682
    %v2684 = vpop.f32.mrf.mxu0
    %v2685 = vadd.f32 %v2516, %v2684
    %2686 = vmatmul.bf16.gmra.mxu0 %v1241
    %v2687 = vpop.f32.mrf.mxu0
    %v2688 = vadd.f32 %v2519, %v2687
    %v2689 = vpop.f32.mrf.mxu0
    %v2690 = vadd.f32 %v2521, %v2689
    %2691 = vmatmul.bf16.gmra.mxu0 %v1248
    %v2692 = vpop.f32.mrf.mxu0
    %v2693 = vadd.f32 %v2524, %v2692
    %v2694 = vpop.f32.mrf.mxu0
    %v2695 = vadd.f32 %v2526, %v2694
    %2696 = vmatmul.bf16.gmra.mxu0 %v1255
    %v2697 = vpop.f32.mrf.mxu0
    %v2698 = vadd.f32 %v2529, %v2697
    %v2699 = vpop.f32.mrf.mxu0
    %v2700 = vadd.f32 %v2531, %v2699
    %2701 = vmatmul.bf16.gmra.mxu0 %v1262
    %v2702 = vpop.f32.mrf.mxu0
    %v2703 = vadd.f32 %v2534, %v2702
    %v2704 = vpop.f32.mrf.mxu0
    %v2705 = vadd.f32 %v2536, %v2704
    %2706 = vmatmul.bf16.gmra.mxu0 %v1269
    %v2707 = vpop.f32.mrf.mxu0
    %v2708 = vadd.f32 %v2539, %v2707
    %v2709 = vpop.f32.mrf.mxu0
    %v2710 = vadd.f32 %v2541, %v2709
    %2711 = vmatmul.bf16.gmra.mxu0 %v1276
    %v2712 = vpop.f32.mrf.mxu0
    %v2713 = vadd.f32 %v2544, %v2712
    %v2714 = vpop.f32.mrf.mxu0
    %v2715 = vadd.f32 %v2546, %v2714
    %2716 = vmatmul.bf16.gmra.mxu0 %v1283
    %v2717 = vpop.f32.mrf.mxu0
    %v2718 = vadd.f32 %v2549, %v2717
    %v2719 = vpop.f32.mrf.mxu0
    %v2720 = vadd.f32 %v2551, %v2719
    %2721 = vmatmul.bf16.gmra.mxu0 %v1290
    %v2722 = vpop.f32.mrf.mxu0
    %v2723 = vadd.f32 %v2554, %v2722
    %v2724 = vpop.f32.mrf.mxu0
    %v2725 = vadd.f32 %v2556, %v2724
    %2726 = vmatmul.bf16.gmra.mxu0 %v1297
    %v2727 = vpop.f32.mrf.mxu0
    %v2728 = vadd.f32 %v2559, %v2727
    %v2729 = vpop.f32.mrf.mxu0
    %v2730 = vadd.f32 %v2561, %v2729
    %2731 = vmatmul.bf16.gmra.mxu0 %v1304
    %v2732 = vpop.f32.mrf.mxu0
    %v2733 = vadd.f32 %v2564, %v2732
    %v2734 = vpop.f32.mrf.mxu0
    %v2735 = vadd.f32 %v2566, %v2734
    %2736 = vmatmul.bf16.gmra.mxu0 %v1311
    %v2737 = vpop.f32.mrf.mxu0
    %v2738 = vadd.f32 %v2569, %v2737
    %v2739 = vpop.f32.mrf.mxu0
    %v2740 = vadd.f32 %v2571, %v2739
    %2741 = vdwg.mxu0
    %2742 = vmatpush.bf16.msra.mxu0 %v1749
    %2743 = vmatpush.bf16.msra.mxu0 %v1748
    %2744 = vmatpush.bf16.msra.mxu0 %v1747
    %2745 = vmatpush.bf16.msra.mxu0 %v1746
    %2746 = vmatpush.bf16.msra.mxu0 %v1745
    %2747 = vmatpush.bf16.msra.mxu0 %v1744
    %2748 = vmatpush.bf16.msra.mxu0 %v1743
    %2749 = vmatpush.bf16.msra.mxu0 %v1742
    %2750 = vmatmul.bf16.gmra.mxu0 %v1095
    %v2751 = vpop.f32.mrf.mxu0
    %v2752 = vadd.f32 %v2583, %v2751
    %v2753 = vpop.f32.mrf.mxu0
    %v2754 = vadd.f32 %v2585, %v2753
    %2755 = vmatmul.bf16.gmra.mxu0 %v1102
    %v2756 = vpop.f32.mrf.mxu0
    %v2757 = vadd.f32 %v2588, %v2756
    %v2758 = vpop.f32.mrf.mxu0
    %v2759 = vadd.f32 %v2590, %v2758
    %2760 = vmatmul.bf16.gmra.mxu0 %v1109
    %v2761 = vpop.f32.mrf.mxu0
    %v2762 = vadd.f32 %v2593, %v2761
    %v2763 = vpop.f32.mrf.mxu0
    %v2764 = vadd.f32 %v2595, %v2763
    %2765 = vmatmul.bf16.gmra.mxu0 %v1116
    %v2766 = vpop.f32.mrf.mxu0
    %v2767 = vadd.f32 %v2598, %v2766
    %v2768 = vpop.f32.mrf.mxu0
    %v2769 = vadd.f32 %v2600, %v2768
    %2770 = vmatmul.bf16.gmra.mxu0 %v1123
    %v2771 = vpop.f32.mrf.mxu0
    %v2772 = vadd.f32 %v2603, %v2771
    %v2773 = vpop.f32.mrf.mxu0
    %v2774 = vadd.f32 %v2605, %v2773
    %2775 = vmatmul.bf16.gmra.mxu0 %v1130
    %v2776 = vpop.f32.mrf.mxu0
    %v2777 = vadd.f32 %v2608, %v2776
    %v2778 = vpop.f32.mrf.mxu0
    %v2779 = vadd.f32 %v2610, %v2778
    %2780 = vmatmul.bf16.gmra.mxu0 %v1137
    %v2781 = vpop.f32.mrf.mxu0
    %v2782 = vadd.f32 %v2613, %v2781
    %v2783 = vpop.f32.mrf.mxu0
    %v2784 = vadd.f32 %v2615, %v2783
    %2785 = vmatmul.bf16.gmra.mxu0 %v1144
    %v2786 = vpop.f32.mrf.mxu0
    %v2787 = vadd.f32 %v2618, %v2786
    %v2788 = vpop.f32.mrf.mxu0
    %v2789 = vadd.f32 %v2620, %v2788
    %2790 = vmatmul.bf16.gmra.mxu0 %v1151
    %v2791 = vpop.f32.mrf.mxu0
    %v2792 = vadd.f32 %v2623, %v2791
    %v2793 = vpop.f32.mrf.mxu0
    %v2794 = vadd.f32 %v2625, %v2793
    %2795 = vmatmul.bf16.gmra.mxu0 %v1158
    %v2796 = vpop.f32.mrf.mxu0
    %v2797 = vadd.f32 %v2628, %v2796
    %v2798 = vpop.f32.mrf.mxu0
    %v2799 = vadd.f32 %v2630, %v2798
    %2800 = vmatmul.bf16.gmra.mxu0 %v1165
    %v2801 = vpop.f32.mrf.mxu0
    %v2802 = vadd.f32 %v2633, %v2801
    %v2803 = vpop.f32.mrf.mxu0
    %v2804 = vadd.f32 %v2635, %v2803
    %2805 = vmatmul.bf16.gmra.mxu0 %v1172
    %v2806 = vpop.f32.mrf.mxu0
    %v2807 = vadd.f32 %v2638, %v2806
    %v2808 = vpop.f32.mrf.mxu0
    %v2809 = vadd.f32 %v2640, %v2808
    %2810 = vmatmul.bf16.gmra.mxu0 %v1179
    %v2811 = vpop.f32.mrf.mxu0
    %v2812 = vadd.f32 %v2643, %v2811
    %v2813 = vpop.f32.mrf.mxu0
    %v2814 = vadd.f32 %v2645, %v2813
    %2815 = vmatmul.bf16.gmra.mxu0 %v1186
    %v2816 = vpop.f32.mrf.mxu0
    %v2817 = vadd.f32 %v2648, %v2816
    %v2818 = vpop.f32.mrf.mxu0
    %v2819 = vadd.f32 %v2650, %v2818
    %2820 = vmatmul.bf16.gmra.mxu0 %v1193
    %v2821 = vpop.f32.mrf.mxu0
    %v2822 = vadd.f32 %v2653, %v2821
    %v2823 = vpop.f32.mrf.mxu0
    %v2824 = vadd.f32 %v2655, %v2823
    %2825 = vmatmul.bf16.gmra.mxu0 %v1200
    %v2826 = vpop.f32.mrf.mxu0
    %v2827 = vadd.f32 %v2658, %v2826
    %v2828 = vpop.f32.mrf.mxu0
    %v2829 = vadd.f32 %v2660, %v2828
    %2830 = vmatmul.bf16.gmra.mxu0 %v1207
    %v2831 = vpop.f32.mrf.mxu0
    %v2832 = vadd.f32 %v2663, %v2831
    %v2833 = vpop.f32.mrf.mxu0
    %v2834 = vadd.f32 %v2665, %v2833
    %2835 = vmatmul.bf16.gmra.mxu0 %v1214
    %v2836 = vpop.f32.mrf.mxu0
    %v2837 = vadd.f32 %v2668, %v2836
    %v2838 = vpop.f32.mrf.mxu0
    %v2839 = vadd.f32 %v2670, %v2838
    %2840 = vmatmul.bf16.gmra.mxu0 %v1221
    %v2841 = vpop.f32.mrf.mxu0
    %v2842 = vadd.f32 %v2673, %v2841
    %v2843 = vpop.f32.mrf.mxu0
    %v2844 = vadd.f32 %v2675, %v2843
    %2845 = vmatmul.bf16.gmra.mxu0 %v1228
    %v2846 = vpop.f32.mrf.mxu0
    %v2847 = vadd.f32 %v2678, %v2846
    %v2848 = vpop.f32.mrf.mxu0
    %v2849 = vadd.f32 %v2680, %v2848
    %2850 = vmatmul.bf16.gmra.mxu0 %v1235
    %v2851 = vpop.f32.mrf.mxu0
    %v2852 = vadd.f32 %v2683, %v2851
    %v2853 = vpop.f32.mrf.mxu0
    %v2854 = vadd.f32 %v2685, %v2853
    %2855 = vmatmul.bf16.gmra.mxu0 %v1242
    %v2856 = vpop.f32.mrf.mxu0
    %v2857 = vadd.f32 %v2688, %v2856
    %v2858 = vpop.f32.mrf.mxu0
    %v2859 = vadd.f32 %v2690, %v2858
    %2860 = vmatmul.bf16.gmra.mxu0 %v1249
    %v2861 = vpop.f32.mrf.mxu0
    %v2862 = vadd.f32 %v2693, %v2861
    %v2863 = vpop.f32.mrf.mxu0
    %v2864 = vadd.f32 %v2695, %v2863
    %2865 = vmatmul.bf16.gmra.mxu0 %v1256
    %v2866 = vpop.f32.mrf.mxu0
    %v2867 = vadd.f32 %v2698, %v2866
    %v2868 = vpop.f32.mrf.mxu0
    %v2869 = vadd.f32 %v2700, %v2868
    %2870 = vmatmul.bf16.gmra.mxu0 %v1263
    %v2871 = vpop.f32.mrf.mxu0
    %v2872 = vadd.f32 %v2703, %v2871
    %v2873 = vpop.f32.mrf.mxu0
    %v2874 = vadd.f32 %v2705, %v2873
    %2875 = vmatmul.bf16.gmra.mxu0 %v1270
    %v2876 = vpop.f32.mrf.mxu0
    %v2877 = vadd.f32 %v2708, %v2876
    %v2878 = vpop.f32.mrf.mxu0
    %v2879 = vadd.f32 %v2710, %v2878
    %2880 = vmatmul.bf16.gmra.mxu0 %v1277
    %v2881 = vpop.f32.mrf.mxu0
    %v2882 = vadd.f32 %v2713, %v2881
    %v2883 = vpop.f32.mrf.mxu0
    %v2884 = vadd.f32 %v2715, %v2883
    %2885 = vmatmul.bf16.gmra.mxu0 %v1284
    %v2886 = vpop.f32.mrf.mxu0
    %v2887 = vadd.f32 %v2718, %v2886
    %v2888 = vpop.f32.mrf.mxu0
    %v2889 = vadd.f32 %v2720, %v2888
    %2890 = vmatmul.bf16.gmra.mxu0 %v1291
    %v2891 = vpop.f32.mrf.mxu0
    %v2892 = vadd.f32 %v2723, %v2891
    %v2893 = vpop.f32.mrf.mxu0
    %v2894 = vadd.f32 %v2725, %v2893
    %2895 = vmatmul.bf16.gmra.mxu0 %v1298
    %v2896 = vpop.f32.mrf.mxu0
    %v2897 = vadd.f32 %v2728, %v2896
    %v2898 = vpop.f32.mrf.mxu0
    %v2899 = vadd.f32 %v2730, %v2898
    %2900 = vmatmul.bf16.gmra.mxu0 %v1305
    %v2901 = vpop.f32.mrf.mxu0
    %v2902 = vadd.f32 %v2733, %v2901
    %v2903 = vpop.f32.mrf.mxu0
    %v2904 = vadd.f32 %v2735, %v2903
    %2905 = vmatmul.bf16.gmra.mxu0 %v1312
    %v2906 = vpop.f32.mrf.mxu0
    %v2907 = vadd.f32 %v2738, %v2906
    %v2908 = vpop.f32.mrf.mxu0
    %v2909 = vadd.f32 %v2740, %v2908
    %2910 = vdwg.mxu0
    %2911 = vmatpush.bf16.msra.mxu0 0
    %2912 = vmatpush.bf16.msra.mxu0 0
    %2913 = vmatpush.bf16.msra.mxu0 0
    %2914 = vmatpush.bf16.msra.mxu0 0
    %2915 = vmatpush.bf16.msra.mxu0 0
    %2916 = vmatpush.bf16.msra.mxu0 0
    %2917 = vmatpush.bf16.msra.mxu0 0
    %2918 = vmatpush.bf16.msra.mxu0 %v1750
    %2919 = vmatmul.bf16.gmra.mxu0 %v1802
    %v2920 = vpop.f32.mrf.mxu0
    %v2921 = vadd.f32 %v2752, %v2920
    %v2922 = vpop.f32.mrf.mxu0
    %v2923 = vadd.f32 %v2754, %v2922
    %2924 = vmatmul.bf16.gmra.mxu0 %v1805
    %v2925 = vpop.f32.mrf.mxu0
    %v2926 = vadd.f32 %v2757, %v2925
    %v2927 = vpop.f32.mrf.mxu0
    %v2928 = vadd.f32 %v2759, %v2927
    %2929 = vmatmul.bf16.gmra.mxu0 %v1808
    %v2930 = vpop.f32.mrf.mxu0
    %v2931 = vadd.f32 %v2762, %v2930
    %v2932 = vpop.f32.mrf.mxu0
    %v2933 = vadd.f32 %v2764, %v2932
    %2934 = vmatmul.bf16.gmra.mxu0 %v1811
    %v2935 = vpop.f32.mrf.mxu0
    %v2936 = vadd.f32 %v2767, %v2935
    %v2937 = vpop.f32.mrf.mxu0
    %v2938 = vadd.f32 %v2769, %v2937
    %2939 = vmatmul.bf16.gmra.mxu0 %v1814
    %v2940 = vpop.f32.mrf.mxu0
    %v2941 = vadd.f32 %v2772, %v2940
    %v2942 = vpop.f32.mrf.mxu0
    %v2943 = vadd.f32 %v2774, %v2942
    %2944 = vmatmul.bf16.gmra.mxu0 %v1817
    %v2945 = vpop.f32.mrf.mxu0
    %v2946 = vadd.f32 %v2777, %v2945
    %v2947 = vpop.f32.mrf.mxu0
    %v2948 = vadd.f32 %v2779, %v2947
    %2949 = vmatmul.bf16.gmra.mxu0 %v1820
    %v2950 = vpop.f32.mrf.mxu0
    %v2951 = vadd.f32 %v2782, %v2950
    %v2952 = vpop.f32.mrf.mxu0
    %v2953 = vadd.f32 %v2784, %v2952
    %2954 = vmatmul.bf16.gmra.mxu0 %v1823
    %v2955 = vpop.f32.mrf.mxu0
    %v2956 = vadd.f32 %v2787, %v2955
    %v2957 = vpop.f32.mrf.mxu0
    %v2958 = vadd.f32 %v2789, %v2957
    %2959 = vmatmul.bf16.gmra.mxu0 %v1826
    %v2960 = vpop.f32.mrf.mxu0
    %v2961 = vadd.f32 %v2792, %v2960
    %v2962 = vpop.f32.mrf.mxu0
    %v2963 = vadd.f32 %v2794, %v2962
    %2964 = vmatmul.bf16.gmra.mxu0 %v1829
    %v2965 = vpop.f32.mrf.mxu0
    %v2966 = vadd.f32 %v2797, %v2965
    %v2967 = vpop.f32.mrf.mxu0
    %v2968 = vadd.f32 %v2799, %v2967
    %2969 = vmatmul.bf16.gmra.mxu0 %v1832
    %v2970 = vpop.f32.mrf.mxu0
    %v2971 = vadd.f32 %v2802, %v2970
    %v2972 = vpop.f32.mrf.mxu0
    %v2973 = vadd.f32 %v2804, %v2972
    %2974 = vmatmul.bf16.gmra.mxu0 %v1835
    %v2975 = vpop.f32.mrf.mxu0
    %v2976 = vadd.f32 %v2807, %v2975
    %v2977 = vpop.f32.mrf.mxu0
    %v2978 = vadd.f32 %v2809, %v2977
    %2979 = vmatmul.bf16.gmra.mxu0 %v1838
    %v2980 = vpop.f32.mrf.mxu0
    %v2981 = vadd.f32 %v2812, %v2980
    %v2982 = vpop.f32.mrf.mxu0
    %v2983 = vadd.f32 %v2814, %v2982
    %2984 = vmatmul.bf16.gmra.mxu0 %v1841
    %v2985 = vpop.f32.mrf.mxu0
    %v2986 = vadd.f32 %v2817, %v2985
    %v2987 = vpop.f32.mrf.mxu0
    %v2988 = vadd.f32 %v2819, %v2987
    %2989 = vmatmul.bf16.gmra.mxu0 %v1844
    %v2990 = vpop.f32.mrf.mxu0
    %v2991 = vadd.f32 %v2822, %v2990
    %v2992 = vpop.f32.mrf.mxu0
    %v2993 = vadd.f32 %v2824, %v2992
    %2994 = vmatmul.bf16.gmra.mxu0 %v1847
    %v2995 = vpop.f32.mrf.mxu0
    %v2996 = vadd.f32 %v2827, %v2995
    %v2997 = vpop.f32.mrf.mxu0
    %v2998 = vadd.f32 %v2829, %v2997
    %2999 = vmatmul.bf16.gmra.mxu0 %v1850
    %v3000 = vpop.f32.mrf.mxu0
    %v3001 = vadd.f32 %v2832, %v3000
    %v3002 = vpop.f32.mrf.mxu0
    %v3003 = vadd.f32 %v2834, %v3002
    %3004 = vmatmul.bf16.gmra.mxu0 %v1853
    %v3005 = vpop.f32.mrf.mxu0
    %v3006 = vadd.f32 %v2837, %v3005
    %v3007 = vpop.f32.mrf.mxu0
    %v3008 = vadd.f32 %v2839, %v3007
    %3009 = vmatmul.bf16.gmra.mxu0 %v1856
    %v3010 = vpop.f32.mrf.mxu0
    %v3011 = vadd.f32 %v2842, %v3010
    %v3012 = vpop.f32.mrf.mxu0
    %v3013 = vadd.f32 %v2844, %v3012
    %3014 = vmatmul.bf16.gmra.mxu0 %v1859
    %v3015 = vpop.f32.mrf.mxu0
    %v3016 = vadd.f32 %v2847, %v3015
    %v3017 = vpop.f32.mrf.mxu0
    %v3018 = vadd.f32 %v2849, %v3017
    %3019 = vmatmul.bf16.gmra.mxu0 %v1862
    %v3020 = vpop.f32.mrf.mxu0
    %v3021 = vadd.f32 %v2852, %v3020
    %v3022 = vpop.f32.mrf.mxu0
    %v3023 = vadd.f32 %v2854, %v3022
    %3024 = vmatmul.bf16.gmra.mxu0 %v1865
    %v3025 = vpop.f32.mrf.mxu0
    %v3026 = vadd.f32 %v2857, %v3025
    %v3027 = vpop.f32.mrf.mxu0
    %v3028 = vadd.f32 %v2859, %v3027
    %3029 = vmatmul.bf16.gmra.mxu0 %v1868
    %v3030 = vpop.f32.mrf.mxu0
    %v3031 = vadd.f32 %v2862, %v3030
    %v3032 = vpop.f32.mrf.mxu0
    %v3033 = vadd.f32 %v2864, %v3032
    %3034 = vmatmul.bf16.gmra.mxu0 %v1871
    %v3035 = vpop.f32.mrf.mxu0
    %v3036 = vadd.f32 %v2867, %v3035
    %v3037 = vpop.f32.mrf.mxu0
    %v3038 = vadd.f32 %v2869, %v3037
    %3039 = vmatmul.bf16.gmra.mxu0 %v1874
    %v3040 = vpop.f32.mrf.mxu0
    %v3041 = vadd.f32 %v2872, %v3040
    %v3042 = vpop.f32.mrf.mxu0
    %v3043 = vadd.f32 %v2874, %v3042
    %3044 = vmatmul.bf16.gmra.mxu0 %v1877
    %v3045 = vpop.f32.mrf.mxu0
    %v3046 = vadd.f32 %v2877, %v3045
    %v3047 = vpop.f32.mrf.mxu0
    %v3048 = vadd.f32 %v2879, %v3047
    %3049 = vmatmul.bf16.gmra.mxu0 %v1880
    %v3050 = vpop.f32.mrf.mxu0
    %v3051 = vadd.f32 %v2882, %v3050
    %v3052 = vpop.f32.mrf.mxu0
    %v3053 = vadd.f32 %v2884, %v3052
    %3054 = vmatmul.bf16.gmra.mxu0 %v1883
    %v3055 = vpop.f32.mrf.mxu0
    %v3056 = vadd.f32 %v2887, %v3055
    %v3057 = vpop.f32.mrf.mxu0
    %v3058 = vadd.f32 %v2889, %v3057
    %3059 = vmatmul.bf16.gmra.mxu0 %v1886
    %v3060 = vpop.f32.mrf.mxu0
    %v3061 = vadd.f32 %v2892, %v3060
    %v3062 = vpop.f32.mrf.mxu0
    %v3063 = vadd.f32 %v2894, %v3062
    %3064 = vmatmul.bf16.gmra.mxu0 %v1889
    %v3065 = vpop.f32.mrf.mxu0
    %v3066 = vadd.f32 %v2897, %v3065
    %v3067 = vpop.f32.mrf.mxu0
    %v3068 = vadd.f32 %v2899, %v3067
    %3069 = vmatmul.bf16.gmra.mxu0 %v1892
    %v3070 = vpop.f32.mrf.mxu0
    %v3071 = vadd.f32 %v2902, %v3070
    %v3072 = vpop.f32.mrf.mxu0
    %v3073 = vadd.f32 %v2904, %v3072
    %3074 = vmatmul.bf16.gmra.mxu0 %v1895
    %v3075 = vpop.f32.mrf.mxu0
    %v3076 = vadd.f32 %v2907, %v3075
    %v3077 = vpop.f32.mrf.mxu0
    %v3078 = vadd.f32 %v2909, %v3077
    %3079 = vdwg.mxu0
    %v3080 = vmax.f32 %v2921, 0.0
    %v3081 = vmax.f32 %v2923, 0.0
    %v3082 = vmax.f32 %v2926, 0.0
    %v3083 = vmax.f32 %v2928, 0.0
    %v3084 = vmax.f32 %v2931, 0.0
    %v3085 = vmax.f32 %v2933, 0.0
    %v3086 = vmax.f32 %v2936, 0.0
    %v3087 = vmax.f32 %v2938, 0.0
    %v3088 = vmax.f32 %v2941, 0.0
    %v3089 = vmax.f32 %v2943, 0.0
    %v3090 = vmax.f32 %v2946, 0.0
    %v3091 = vmax.f32 %v2948, 0.0
    %v3092 = vmax.f32 %v2951, 0.0
    %v3093 = vmax.f32 %v2953, 0.0
    %v3094 = vmax.f32 %v2956, 0.0
    %v3095 = vmax.f32 %v2958, 0.0
    %v3096 = vmax.f32 %v2961, 0.0
    %v3097 = vmax.f32 %v2963, 0.0
    %v3098 = vmax.f32 %v2966, 0.0
    %v3099 = vmax.f32 %v2968, 0.0
    %v3100 = vmax.f32 %v2971, 0.0
    %v3101 = vmax.f32 %v2973, 0.0
    %v3102 = vmax.f32 %v2976, 0.0
    %v3103 = vmax.f32 %v2978, 0.0
    %v3104 = vmax.f32 %v2981, 0.0
    %v3105 = vmax.f32 %v2983, 0.0
    %v3106 = vmax.f32 %v2986, 0.0
    %v3107 = vmax.f32 %v2988, 0.0
    %v3108 = vmax.f32 %v2991, 0.0
    %v3109 = vmax.f32 %v2993, 0.0
    %v3110 = vmax.f32 %v2996, 0.0
    %v3111 = vmax.f32 %v2998, 0.0
    %v3112 = vmax.f32 %v3001, 0.0
    %v3113 = vmax.f32 %v3003, 0.0
    %v3114 = vmax.f32 %v3006, 0.0
    %v3115 = vmax.f32 %v3008, 0.0
    %v3116 = vmax.f32 %v3011, 0.0
    %v3117 = vmax.f32 %v3013, 0.0
    %v3118 = vmax.f32 %v3016, 0.0
    %v3119 = vmax.f32 %v3018, 0.0
    %v3120 = vmax.f32 %v3021, 0.0
    %v3121 = vmax.f32 %v3023, 0.0
    %v3122 = vmax.f32 %v3026, 0.0
    %v3123 = vmax.f32 %v3028, 0.0
    %v3124 = vmax.f32 %v3031, 0.0
    %v3125 = vmax.f32 %v3033, 0.0
    %v3126 = vmax.f32 %v3036, 0.0
    %v3127 = vmax.f32 %v3038, 0.0
    %v3128 = vmax.f32 %v3041, 0.0
    %v3129 = vmax.f32 %v3043, 0.0
    %v3130 = vmax.f32 %v3046, 0.0
    %v3131 = vmax.f32 %v3048, 0.0
    %v3132 = vmax.f32 %v3051, 0.0
    %v3133 = vmax.f32 %v3053, 0.0
    %v3134 = vmax.f32 %v3056, 0.0
    %v3135 = vmax.f32 %v3058, 0.0
    %v3136 = vmax.f32 %v3061, 0.0
    %v3137 = vmax.f32 %v3063, 0.0
    %v3138 = vmax.f32 %v3066, 0.0
    %v3139 = vmax.f32 %v3068, 0.0
    %v3140 = vmax.f32 %v3071, 0.0
    %v3141 = vmax.f32 %v3073, 0.0
    %v3142 = vmax.f32 %v3076, 0.0
    %v3143 = vmax.f32 %v3078, 0.0
    %v3144 = vpack.c.bf16 %v3081, %v3080
    %v3145 = vpack.c.bf16 %v3083, %v3082
    %v3146 = vpack.c.bf16 %v3085, %v3084
    %v3147 = vpack.c.bf16 %v3087, %v3086
    %v3148 = vpack.c.bf16 %v3089, %v3088
    %v3149 = vpack.c.bf16 %v3091, %v3090
    %v3150 = vpack.c.bf16 %v3093, %v3092
    %v3151 = vpack.c.bf16 %v3095, %v3094
    %v3152 = vpack.c.bf16 %v3097, %v3096
    %v3153 = vpack.c.bf16 %v3099, %v3098
    %v3154 = vpack.c.bf16 %v3101, %v3100
    %v3155 = vpack.c.bf16 %v3103, %v3102
    %v3156 = vpack.c.bf16 %v3105, %v3104
    %v3157 = vpack.c.bf16 %v3107, %v3106
    %v3158 = vpack.c.bf16 %v3109, %v3108
    %v3159 = vpack.c.bf16 %v3111, %v3110
    %v3160 = vpack.c.bf16 %v3113, %v3112
    %v3161 = vpack.c.bf16 %v3115, %v3114
    %v3162 = vpack.c.bf16 %v3117, %v3116
    %v3163 = vpack.c.bf16 %v3119, %v3118
    %v3164 = vpack.c.bf16 %v3121, %v3120
    %v3165 = vpack.c.bf16 %v3123, %v3122
    %v3166 = vpack.c.bf16 %v3125, %v3124
    %v3167 = vpack.c.bf16 %v3127, %v3126
    %v3168 = vpack.c.bf16 %v3129, %v3128
    %v3169 = vpack.c.bf16 %v3131, %v3130
    %v3170 = vpack.c.bf16 %v3133, %v3132
    %v3171 = vpack.c.bf16 %v3135, %v3134
    %v3172 = vpack.c.bf16 %v3137, %v3136
    %v3173 = vpack.c.bf16 %v3139, %v3138
    %v3174 = vpack.c.bf16 %v3141, %v3140
    %v3175 = vpack.c.bf16 %v3143, %v3142
    %v3176 = vld [vmem:[%s3] sm:$0xf]
    %v3177 = vld [vmem:[%s3 + $0x4] sm:$0xf]
    %v3178 = vld [vmem:[%s3 + $0x8] sm:$0xf]
    %v3179 = vld [vmem:[%s3 + $0xc] sm:$0xf]
    %v3180 = vld [vmem:[%s3 + $0x10] sm:$0xf]
    %v3181 = vld [vmem:[%s3 + $0x14] sm:$0xf]
    %v3182 = vld [vmem:[%s3 + $0x18] sm:$0xf]
    %v3183 = vld [vmem:[%s3 + $0x1c] sm:$0xf]
    %v3184 = vld [vmem:[%s3 + $0x20] sm:$0xf]
    %v3185 = vld [vmem:[%s3 + $0x24] sm:$0xf]
    %v3186 = vld [vmem:[%s3 + $0x28] sm:$0xf]
    %v3187 = vld [vmem:[%s3 + $0x2c] sm:$0xf]
    %v3188 = vld [vmem:[%s3 + $0x30] sm:$0xf]
    %v3189 = vld [vmem:[%s3 + $0x34] sm:$0xf]
    %v3190 = vld [vmem:[%s3 + $0x38] sm:$0xf]
    %v3191 = vld [vmem:[%s3 + $0x3c] sm:$0xf]
    %v3192 = vld [vmem:[%s4] sm:$0x1]
    %v3194 = vperm.slane %v3192, 0
    %v3212 = vunpack.c.l.b16 %v3176
    %v3213 = vunpack.c.l.b16 %v3177
    %v3214 = vunpack.c.l.b16 %v3178
    %v3215 = vunpack.c.l.b16 %v3179
    %v3216 = vunpack.c.l.b16 %v3180
    %v3217 = vunpack.c.l.b16 %v3181
    %v3218 = vunpack.c.l.b16 %v3182
    %v3219 = vunpack.c.l.b16 %v3183
    %v3220 = vunpack.c.l.b16 %v3184
    %v3221 = vunpack.c.l.b16 %v3185
    %v3222 = vunpack.c.l.b16 %v3186
    %v3223 = vunpack.c.l.b16 %v3187
    %v3224 = vunpack.c.l.b16 %v3188
    %v3225 = vunpack.c.l.b16 %v3189
    %v3226 = vunpack.c.l.b16 %v3190
    %v3227 = vunpack.c.l.b16 %v3191
    %v3228 = vpack.c.b16 %v3213, %v3212
    %v3229 = vpack.c.b16 %v3215, %v3214
    %v3230 = vpack.c.b16 %v3217, %v3216
    %v3231 = vpack.c.b16 %v3219, %v3218
    %v3232 = vpack.c.b16 %v3221, %v3220
    %v3233 = vpack.c.b16 %v3223, %v3222
    %v3234 = vpack.c.b16 %v3225, %v3224
    %v3235 = vpack.c.b16 %v3227, %v3226
    %3244 = vmatpush.bf16.msra.mxu0 %v3235
    %3245 = vmatpush.bf16.msra.mxu0 %v3234
    %3246 = vmatpush.bf16.msra.mxu0 %v3233
    %3247 = vmatpush.bf16.msra.mxu0 %v3232
    %3248 = vmatpush.bf16.msra.mxu0 %v3231
    %3249 = vmatpush.bf16.msra.mxu0 %v3230
    %3250 = vmatpush.bf16.msra.mxu0 %v3229
    %3251 = vmatpush.bf16.msra.mxu0 %v3228
    %3252 = vmatmul.bf16.gmra.mxu0 %v3144
    %v3253 = vpop.f32.mrf.mxu0
    %v3254 = vadd.f32 %v3194, %v3253
    %v3255 = vpop.f32.mrf.mxu0
    %v3256 = vadd.f32 %v3194, %v3255
    %3257 = vmatmul.bf16.gmra.mxu0 %v3145
    %v3258 = vpop.f32.mrf.mxu0
    %v3259 = vadd.f32 %v3194, %v3258
    %v3260 = vpop.f32.mrf.mxu0
    %v3261 = vadd.f32 %v3194, %v3260
    %3262 = vmatmul.bf16.gmra.mxu0 %v3146
    %v3263 = vpop.f32.mrf.mxu0
    %v3264 = vadd.f32 %v3194, %v3263
    %v3265 = vpop.f32.mrf.mxu0
    %v3266 = vadd.f32 %v3194, %v3265
    %3267 = vmatmul.bf16.gmra.mxu0 %v3147
    %v3268 = vpop.f32.mrf.mxu0
    %v3269 = vadd.f32 %v3194, %v3268
    %v3270 = vpop.f32.mrf.mxu0
    %v3271 = vadd.f32 %v3194, %v3270
    %3272 = vmatmul.bf16.gmra.mxu0 %v3148
    %v3273 = vpop.f32.mrf.mxu0
    %v3274 = vadd.f32 %v3194, %v3273
    %v3275 = vpop.f32.mrf.mxu0
    %v3276 = vadd.f32 %v3194, %v3275
    %3277 = vmatmul.bf16.gmra.mxu0 %v3149
    %v3278 = vpop.f32.mrf.mxu0
    %v3279 = vadd.f32 %v3194, %v3278
    %v3280 = vpop.f32.mrf.mxu0
    %v3281 = vadd.f32 %v3194, %v3280
    %3282 = vmatmul.bf16.gmra.mxu0 %v3150
    %v3283 = vpop.f32.mrf.mxu0
    %v3284 = vadd.f32 %v3194, %v3283
    %v3285 = vpop.f32.mrf.mxu0
    %v3286 = vadd.f32 %v3194, %v3285
    %3287 = vmatmul.bf16.gmra.mxu0 %v3151
    %v3288 = vpop.f32.mrf.mxu0
    %v3289 = vadd.f32 %v3194, %v3288
    %v3290 = vpop.f32.mrf.mxu0
    %v3291 = vadd.f32 %v3194, %v3290
    %3292 = vmatmul.bf16.gmra.mxu0 %v3152
    %v3293 = vpop.f32.mrf.mxu0
    %v3294 = vadd.f32 %v3194, %v3293
    %v3295 = vpop.f32.mrf.mxu0
    %v3296 = vadd.f32 %v3194, %v3295
    %3297 = vmatmul.bf16.gmra.mxu0 %v3153
    %v3298 = vpop.f32.mrf.mxu0
    %v3299 = vadd.f32 %v3194, %v3298
    %v3300 = vpop.f32.mrf.mxu0
    %v3301 = vadd.f32 %v3194, %v3300
    %3302 = vmatmul.bf16.gmra.mxu0 %v3154
    %v3303 = vpop.f32.mrf.mxu0
    %v3304 = vadd.f32 %v3194, %v3303
    %v3305 = vpop.f32.mrf.mxu0
    %v3306 = vadd.f32 %v3194, %v3305
    %3307 = vmatmul.bf16.gmra.mxu0 %v3155
    %v3308 = vpop.f32.mrf.mxu0
    %v3309 = vadd.f32 %v3194, %v3308
    %v3310 = vpop.f32.mrf.mxu0
    %v3311 = vadd.f32 %v3194, %v3310
    %3312 = vmatmul.bf16.gmra.mxu0 %v3156
    %v3313 = vpop.f32.mrf.mxu0
    %v3314 = vadd.f32 %v3194, %v3313
    %v3315 = vpop.f32.mrf.mxu0
    %v3316 = vadd.f32 %v3194, %v3315
    %3317 = vmatmul.bf16.gmra.mxu0 %v3157
    %v3318 = vpop.f32.mrf.mxu0
    %v3319 = vadd.f32 %v3194, %v3318
    %v3320 = vpop.f32.mrf.mxu0
    %v3321 = vadd.f32 %v3194, %v3320
    %3322 = vmatmul.bf16.gmra.mxu0 %v3158
    %v3323 = vpop.f32.mrf.mxu0
    %v3324 = vadd.f32 %v3194, %v3323
    %v3325 = vpop.f32.mrf.mxu0
    %v3326 = vadd.f32 %v3194, %v3325
    %3327 = vmatmul.bf16.gmra.mxu0 %v3159
    %v3328 = vpop.f32.mrf.mxu0
    %v3329 = vadd.f32 %v3194, %v3328
    %v3330 = vpop.f32.mrf.mxu0
    %v3331 = vadd.f32 %v3194, %v3330
    %3332 = vmatmul.bf16.gmra.mxu0 %v3160
    %v3333 = vpop.f32.mrf.mxu0
    %v3334 = vadd.f32 %v3194, %v3333
    %v3335 = vpop.f32.mrf.mxu0
    %v3336 = vadd.f32 %v3194, %v3335
    %3337 = vmatmul.bf16.gmra.mxu0 %v3161
    %v3338 = vpop.f32.mrf.mxu0
    %v3339 = vadd.f32 %v3194, %v3338
    %v3340 = vpop.f32.mrf.mxu0
    %v3341 = vadd.f32 %v3194, %v3340
    %3342 = vmatmul.bf16.gmra.mxu0 %v3162
    %v3343 = vpop.f32.mrf.mxu0
    %v3344 = vadd.f32 %v3194, %v3343
    %v3345 = vpop.f32.mrf.mxu0
    %v3346 = vadd.f32 %v3194, %v3345
    %3347 = vmatmul.bf16.gmra.mxu0 %v3163
    %v3348 = vpop.f32.mrf.mxu0
    %v3349 = vadd.f32 %v3194, %v3348
    %v3350 = vpop.f32.mrf.mxu0
    %v3351 = vadd.f32 %v3194, %v3350
    %3352 = vmatmul.bf16.gmra.mxu0 %v3164
    %v3353 = vpop.f32.mrf.mxu0
    %v3354 = vadd.f32 %v3194, %v3353
    %v3355 = vpop.f32.mrf.mxu0
    %v3356 = vadd.f32 %v3194, %v3355
    %3357 = vmatmul.bf16.gmra.mxu0 %v3165
    %v3358 = vpop.f32.mrf.mxu0
    %v3359 = vadd.f32 %v3194, %v3358
    %v3360 = vpop.f32.mrf.mxu0
    %v3361 = vadd.f32 %v3194, %v3360
    %3362 = vmatmul.bf16.gmra.mxu0 %v3166
    %v3363 = vpop.f32.mrf.mxu0
    %v3364 = vadd.f32 %v3194, %v3363
    %v3365 = vpop.f32.mrf.mxu0
    %v3366 = vadd.f32 %v3194, %v3365
    %3367 = vmatmul.bf16.gmra.mxu0 %v3167
    %v3368 = vpop.f32.mrf.mxu0
    %v3369 = vadd.f32 %v3194, %v3368
    %v3370 = vpop.f32.mrf.mxu0
    %v3371 = vadd.f32 %v3194, %v3370
    %3372 = vmatmul.bf16.gmra.mxu0 %v3168
    %v3373 = vpop.f32.mrf.mxu0
    %v3374 = vadd.f32 %v3194, %v3373
    %v3375 = vpop.f32.mrf.mxu0
    %v3376 = vadd.f32 %v3194, %v3375
    %3377 = vmatmul.bf16.gmra.mxu0 %v3169
    %v3378 = vpop.f32.mrf.mxu0
    %v3379 = vadd.f32 %v3194, %v3378
    %v3380 = vpop.f32.mrf.mxu0
    %v3381 = vadd.f32 %v3194, %v3380
    %3382 = vmatmul.bf16.gmra.mxu0 %v3170
    %v3383 = vpop.f32.mrf.mxu0
    %v3384 = vadd.f32 %v3194, %v3383
    %v3385 = vpop.f32.mrf.mxu0
    %v3386 = vadd.f32 %v3194, %v3385
    %3387 = vmatmul.bf16.gmra.mxu0 %v3171
    %v3388 = vpop.f32.mrf.mxu0
    %v3389 = vadd.f32 %v3194, %v3388
    %v3390 = vpop.f32.mrf.mxu0
    %v3391 = vadd.f32 %v3194, %v3390
    %3392 = vmatmul.bf16.gmra.mxu0 %v3172
    %v3393 = vpop.f32.mrf.mxu0
    %v3394 = vadd.f32 %v3194, %v3393
    %v3395 = vpop.f32.mrf.mxu0
    %v3396 = vadd.f32 %v3194, %v3395
    %3397 = vmatmul.bf16.gmra.mxu0 %v3173
    %v3398 = vpop.f32.mrf.mxu0
    %v3399 = vadd.f32 %v3194, %v3398
    %v3400 = vpop.f32.mrf.mxu0
    %v3401 = vadd.f32 %v3194, %v3400
    %3402 = vmatmul.bf16.gmra.mxu0 %v3174
    %v3403 = vpop.f32.mrf.mxu0
    %v3404 = vadd.f32 %v3194, %v3403
    %v3405 = vpop.f32.mrf.mxu0
    %v3406 = vadd.f32 %v3194, %v3405
    %3407 = vmatmul.bf16.gmra.mxu0 %v3175
    %v3408 = vpop.f32.mrf.mxu0
    %v3409 = vadd.f32 %v3194, %v3408
    %v3410 = vpop.f32.mrf.mxu0
    %v3411 = vadd.f32 %v3194, %v3410
    %3412 = vdwg.mxu0
    %v3413 = vmax.f32 %v3254, 0.0
    %v3414 = vmax.f32 %v3256, 0.0
    %v3415 = vmax.f32 %v3259, 0.0
    %v3416 = vmax.f32 %v3261, 0.0
    %v3417 = vmax.f32 %v3264, 0.0
    %v3418 = vmax.f32 %v3266, 0.0
    %v3419 = vmax.f32 %v3269, 0.0
    %v3420 = vmax.f32 %v3271, 0.0
    %v3421 = vmax.f32 %v3274, 0.0
    %v3422 = vmax.f32 %v3276, 0.0
    %v3423 = vmax.f32 %v3279, 0.0
    %v3424 = vmax.f32 %v3281, 0.0
    %v3425 = vmax.f32 %v3284, 0.0
    %v3426 = vmax.f32 %v3286, 0.0
    %v3427 = vmax.f32 %v3289, 0.0
    %v3428 = vmax.f32 %v3291, 0.0
    %v3429 = vmax.f32 %v3294, 0.0
    %v3430 = vmax.f32 %v3296, 0.0
    %v3431 = vmax.f32 %v3299, 0.0
    %v3432 = vmax.f32 %v3301, 0.0
    %v3433 = vmax.f32 %v3304, 0.0
    %v3434 = vmax.f32 %v3306, 0.0
    %v3435 = vmax.f32 %v3309, 0.0
    %v3436 = vmax.f32 %v3311, 0.0
    %v3437 = vmax.f32 %v3314, 0.0
    %v3438 = vmax.f32 %v3316, 0.0
    %v3439 = vmax.f32 %v3319, 0.0
    %v3440 = vmax.f32 %v3321, 0.0
    %v3441 = vmax.f32 %v3324, 0.0
    %v3442 = vmax.f32 %v3326, 0.0
    %v3443 = vmax.f32 %v3329, 0.0
    %v3444 = vmax.f32 %v3331, 0.0
    %v3445 = vmax.f32 %v3334, 0.0
    %v3446 = vmax.f32 %v3336, 0.0
    %v3447 = vmax.f32 %v3339, 0.0
    %v3448 = vmax.f32 %v3341, 0.0
    %v3449 = vmax.f32 %v3344, 0.0
    %v3450 = vmax.f32 %v3346, 0.0
    %v3451 = vmax.f32 %v3349, 0.0
    %v3452 = vmax.f32 %v3351, 0.0
    %v3453 = vmax.f32 %v3354, 0.0
    %v3454 = vmax.f32 %v3356, 0.0
    %v3455 = vmax.f32 %v3359, 0.0
    %v3456 = vmax.f32 %v3361, 0.0
    %v3457 = vmax.f32 %v3364, 0.0
    %v3458 = vmax.f32 %v3366, 0.0
    %v3459 = vmax.f32 %v3369, 0.0
    %v3460 = vmax.f32 %v3371, 0.0
    %v3461 = vmax.f32 %v3374, 0.0
    %v3462 = vmax.f32 %v3376, 0.0
    %v3463 = vmax.f32 %v3379, 0.0
    %v3464 = vmax.f32 %v3381, 0.0
    %v3465 = vmax.f32 %v3384, 0.0
    %v3466 = vmax.f32 %v3386, 0.0
    %v3467 = vmax.f32 %v3389, 0.0
    %v3468 = vmax.f32 %v3391, 0.0
    %v3469 = vmax.f32 %v3394, 0.0
    %v3470 = vmax.f32 %v3396, 0.0
    %v3471 = vmax.f32 %v3399, 0.0
    %v3472 = vmax.f32 %v3401, 0.0
    %v3473 = vmax.f32 %v3404, 0.0
    %v3474 = vmax.f32 %v3406, 0.0
    %v3475 = vmax.f32 %v3409, 0.0
    %v3476 = vmax.f32 %v3411, 0.0
    %v3477 = vpack.c.bf16 %v3414, %v3413
    %v3478 = vpack.c.bf16 %v3416, %v3415
    %v3479 = vpack.c.bf16 %v3418, %v3417
    %v3480 = vpack.c.bf16 %v3420, %v3419
    %v3481 = vpack.c.bf16 %v3422, %v3421
    %v3482 = vpack.c.bf16 %v3424, %v3423
    %v3483 = vpack.c.bf16 %v3426, %v3425
    %v3484 = vpack.c.bf16 %v3428, %v3427
    %v3485 = vpack.c.bf16 %v3430, %v3429
    %v3486 = vpack.c.bf16 %v3432, %v3431
    %v3487 = vpack.c.bf16 %v3434, %v3433
    %v3488 = vpack.c.bf16 %v3436, %v3435
    %v3489 = vpack.c.bf16 %v3438, %v3437
    %v3490 = vpack.c.bf16 %v3440, %v3439
    %v3491 = vpack.c.bf16 %v3442, %v3441
    %v3492 = vpack.c.bf16 %v3444, %v3443
    %v3493 = vpack.c.bf16 %v3446, %v3445
    %v3494 = vpack.c.bf16 %v3448, %v3447
    %v3495 = vpack.c.bf16 %v3450, %v3449
    %v3496 = vpack.c.bf16 %v3452, %v3451
    %v3497 = vpack.c.bf16 %v3454, %v3453
    %v3498 = vpack.c.bf16 %v3456, %v3455
    %v3499 = vpack.c.bf16 %v3458, %v3457
    %v3500 = vpack.c.bf16 %v3460, %v3459
    %v3501 = vpack.c.bf16 %v3462, %v3461
    %v3502 = vpack.c.bf16 %v3464, %v3463
    %v3503 = vpack.c.bf16 %v3466, %v3465
    %v3504 = vpack.c.bf16 %v3468, %v3467
    %v3505 = vpack.c.bf16 %v3470, %v3469
    %v3506 = vpack.c.bf16 %v3472, %v3471
    %v3507 = vpack.c.bf16 %v3474, %v3473
    %v3508 = vpack.c.bf16 %v3476, %v3475
    %v3509 = vld [vmem:[%s5] sm:$0xf]
    %v3510 = vld [vmem:[%s5 + $0x4] sm:$0xf]
    %v3511 = vld [vmem:[%s5 + $0x8] sm:$0xf]
    %v3512 = vld [vmem:[%s5 + $0xc] sm:$0xf]
    %v3513 = vld [vmem:[%s5 + $0x10] sm:$0xf]
    %v3514 = vld [vmem:[%s5 + $0x14] sm:$0xf]
    %v3515 = vld [vmem:[%s5 + $0x18] sm:$0xf]
    %v3516 = vld [vmem:[%s5 + $0x1c] sm:$0xf]
    %v3517 = vld [vmem:[%s6] sm:$0x1]
    %v3519 = vperm.slane %v3517, 0
    %v3529 = vunpack.c.l.b16 %v3509
    %v3530 = vunpack.c.l.b16 %v3510
    %v3531 = vunpack.c.l.b16 %v3511
    %v3532 = vunpack.c.l.b16 %v3512
    %v3533 = vunpack.c.l.b16 %v3513
    %v3534 = vunpack.c.l.b16 %v3514
    %v3535 = vunpack.c.l.b16 %v3515
    %v3536 = vunpack.c.l.b16 %v3516
    %v3537 = vpack.c.b16 %v3530, %v3529
    %v3538 = vpack.c.b16 %v3532, %v3531
    %v3539 = vpack.c.b16 %v3534, %v3533
    %v3540 = vpack.c.b16 %v3536, %v3535
    %vm3545 = vcmask 523264
    %v3547 = vsel %vm3545, %v3477, 0
    %v3550 = vsel %vm3545, %v3478, 0
    %v3553 = vsel %vm3545, %v3479, 0
    %v3556 = vsel %vm3545, %v3480, 0
    %v3559 = vsel %vm3545, %v3481, 0
    %v3562 = vsel %vm3545, %v3482, 0
    %v3565 = vsel %vm3545, %v3483, 0
    %v3568 = vsel %vm3545, %v3484, 0
    %v3571 = vsel %vm3545, %v3485, 0
    %v3574 = vsel %vm3545, %v3486, 0
    %v3577 = vsel %vm3545, %v3487, 0
    %v3580 = vsel %vm3545, %v3488, 0
    %v3583 = vsel %vm3545, %v3489, 0
    %v3586 = vsel %vm3545, %v3490, 0
    %v3589 = vsel %vm3545, %v3491, 0
    %v3592 = vsel %vm3545, %v3492, 0
    %v3595 = vsel %vm3545, %v3493, 0
    %v3598 = vsel %vm3545, %v3494, 0
    %v3601 = vsel %vm3545, %v3495, 0
    %v3604 = vsel %vm3545, %v3496, 0
    %v3607 = vsel %vm3545, %v3497, 0
    %v3610 = vsel %vm3545, %v3498, 0
    %v3613 = vsel %vm3545, %v3499, 0
    %v3616 = vsel %vm3545, %v3500, 0
    %v3619 = vsel %vm3545, %v3501, 0
    %v3622 = vsel %vm3545, %v3502, 0
    %v3625 = vsel %vm3545, %v3503, 0
    %v3628 = vsel %vm3545, %v3504, 0
    %v3631 = vsel %vm3545, %v3505, 0
    %v3634 = vsel %vm3545, %v3506, 0
    %v3637 = vsel %vm3545, %v3507, 0
    %v3640 = vsel %vm3545, %v3508, 0
    %3642 = vmatpush.bf16.msra.mxu0 0
    %3643 = vmatpush.bf16.msra.mxu0 0
    %3644 = vmatpush.bf16.msra.mxu0 0
    %3645 = vmatpush.bf16.msra.mxu0 0
    %3646 = vmatpush.bf16.msra.mxu0 %v3540
    %3647 = vmatpush.bf16.msra.mxu0 %v3539
    %3648 = vmatpush.bf16.msra.mxu0 %v3538
    %3649 = vmatpush.bf16.msra.mxu0 %v3537
    %3650 = vmatmul.bf16.gmra.mxu0 %v3547
    %v3651 = vpop.f32.mrf.mxu0
    %v3652 = vadd.f32 %v3519, %v3651
    %v3653 = vpop.f32.mrf.mxu0
    %v3654 = vadd.f32 %v3519, %v3653
    %3655 = vmatmul.bf16.gmra.mxu0 %v3550
    %v3656 = vpop.f32.mrf.mxu0
    %v3657 = vadd.f32 %v3519, %v3656
    %v3658 = vpop.f32.mrf.mxu0
    %v3659 = vadd.f32 %v3519, %v3658
    %3660 = vmatmul.bf16.gmra.mxu0 %v3553
    %v3661 = vpop.f32.mrf.mxu0
    %v3662 = vadd.f32 %v3519, %v3661
    %v3663 = vpop.f32.mrf.mxu0
    %v3664 = vadd.f32 %v3519, %v3663
    %3665 = vmatmul.bf16.gmra.mxu0 %v3556
    %v3666 = vpop.f32.mrf.mxu0
    %v3667 = vadd.f32 %v3519, %v3666
    %v3668 = vpop.f32.mrf.mxu0
    %v3669 = vadd.f32 %v3519, %v3668
    %3670 = vmatmul.bf16.gmra.mxu0 %v3559
    %v3671 = vpop.f32.mrf.mxu0
    %v3672 = vadd.f32 %v3519, %v3671
    %v3673 = vpop.f32.mrf.mxu0
    %v3674 = vadd.f32 %v3519, %v3673
    %3675 = vmatmul.bf16.gmra.mxu0 %v3562
    %v3676 = vpop.f32.mrf.mxu0
    %v3677 = vadd.f32 %v3519, %v3676
    %v3678 = vpop.f32.mrf.mxu0
    %v3679 = vadd.f32 %v3519, %v3678
    %3680 = vmatmul.bf16.gmra.mxu0 %v3565
    %v3681 = vpop.f32.mrf.mxu0
    %v3682 = vadd.f32 %v3519, %v3681
    %v3683 = vpop.f32.mrf.mxu0
    %v3684 = vadd.f32 %v3519, %v3683
    %3685 = vmatmul.bf16.gmra.mxu0 %v3568
    %v3686 = vpop.f32.mrf.mxu0
    %v3687 = vadd.f32 %v3519, %v3686
    %v3688 = vpop.f32.mrf.mxu0
    %v3689 = vadd.f32 %v3519, %v3688
    %3690 = vmatmul.bf16.gmra.mxu0 %v3571
    %v3691 = vpop.f32.mrf.mxu0
    %v3692 = vadd.f32 %v3519, %v3691
    %v3693 = vpop.f32.mrf.mxu0
    %v3694 = vadd.f32 %v3519, %v3693
    %3695 = vmatmul.bf16.gmra.mxu0 %v3574
    %v3696 = vpop.f32.mrf.mxu0
    %v3697 = vadd.f32 %v3519, %v3696
    %v3698 = vpop.f32.mrf.mxu0
    %v3699 = vadd.f32 %v3519, %v3698
    %3700 = vmatmul.bf16.gmra.mxu0 %v3577
    %v3701 = vpop.f32.mrf.mxu0
    %v3702 = vadd.f32 %v3519, %v3701
    %v3703 = vpop.f32.mrf.mxu0
    %v3704 = vadd.f32 %v3519, %v3703
    %3705 = vmatmul.bf16.gmra.mxu0 %v3580
    %v3706 = vpop.f32.mrf.mxu0
    %v3707 = vadd.f32 %v3519, %v3706
    %v3708 = vpop.f32.mrf.mxu0
    %v3709 = vadd.f32 %v3519, %v3708
    %3710 = vmatmul.bf16.gmra.mxu0 %v3583
    %v3711 = vpop.f32.mrf.mxu0
    %v3712 = vadd.f32 %v3519, %v3711
    %v3713 = vpop.f32.mrf.mxu0
    %v3714 = vadd.f32 %v3519, %v3713
    %3715 = vmatmul.bf16.gmra.mxu0 %v3586
    %v3716 = vpop.f32.mrf.mxu0
    %v3717 = vadd.f32 %v3519, %v3716
    %v3718 = vpop.f32.mrf.mxu0
    %v3719 = vadd.f32 %v3519, %v3718
    %3720 = vmatmul.bf16.gmra.mxu0 %v3589
    %v3721 = vpop.f32.mrf.mxu0
    %v3722 = vadd.f32 %v3519, %v3721
    %v3723 = vpop.f32.mrf.mxu0
    %v3724 = vadd.f32 %v3519, %v3723
    %3725 = vmatmul.bf16.gmra.mxu0 %v3592
    %v3726 = vpop.f32.mrf.mxu0
    %v3727 = vadd.f32 %v3519, %v3726
    %v3728 = vpop.f32.mrf.mxu0
    %v3729 = vadd.f32 %v3519, %v3728
    %3730 = vmatmul.bf16.gmra.mxu0 %v3595
    %v3731 = vpop.f32.mrf.mxu0
    %v3732 = vadd.f32 %v3519, %v3731
    %v3733 = vpop.f32.mrf.mxu0
    %v3734 = vadd.f32 %v3519, %v3733
    %3735 = vmatmul.bf16.gmra.mxu0 %v3598
    %v3736 = vpop.f32.mrf.mxu0
    %v3737 = vadd.f32 %v3519, %v3736
    %v3738 = vpop.f32.mrf.mxu0
    %v3739 = vadd.f32 %v3519, %v3738
    %3740 = vmatmul.bf16.gmra.mxu0 %v3601
    %v3741 = vpop.f32.mrf.mxu0
    %v3742 = vadd.f32 %v3519, %v3741
    %v3743 = vpop.f32.mrf.mxu0
    %v3744 = vadd.f32 %v3519, %v3743
    %3745 = vmatmul.bf16.gmra.mxu0 %v3604
    %v3746 = vpop.f32.mrf.mxu0
    %v3747 = vadd.f32 %v3519, %v3746
    %v3748 = vpop.f32.mrf.mxu0
    %v3749 = vadd.f32 %v3519, %v3748
    %3750 = vmatmul.bf16.gmra.mxu0 %v3607
    %v3751 = vpop.f32.mrf.mxu0
    %v3752 = vadd.f32 %v3519, %v3751
    %v3753 = vpop.f32.mrf.mxu0
    %v3754 = vadd.f32 %v3519, %v3753
    %3755 = vmatmul.bf16.gmra.mxu0 %v3610
    %v3756 = vpop.f32.mrf.mxu0
    %v3757 = vadd.f32 %v3519, %v3756
    %v3758 = vpop.f32.mrf.mxu0
    %v3759 = vadd.f32 %v3519, %v3758
    %3760 = vmatmul.bf16.gmra.mxu0 %v3613
    %v3761 = vpop.f32.mrf.mxu0
    %v3762 = vadd.f32 %v3519, %v3761
    %v3763 = vpop.f32.mrf.mxu0
    %v3764 = vadd.f32 %v3519, %v3763
    %3765 = vmatmul.bf16.gmra.mxu0 %v3616
    %v3766 = vpop.f32.mrf.mxu0
    %v3767 = vadd.f32 %v3519, %v3766
    %v3768 = vpop.f32.mrf.mxu0
    %v3769 = vadd.f32 %v3519, %v3768
    %3770 = vmatmul.bf16.gmra.mxu0 %v3619
    %v3771 = vpop.f32.mrf.mxu0
    %v3772 = vadd.f32 %v3519, %v3771
    %v3773 = vpop.f32.mrf.mxu0
    %v3774 = vadd.f32 %v3519, %v3773
    %3775 = vmatmul.bf16.gmra.mxu0 %v3622
    %v3776 = vpop.f32.mrf.mxu0
    %v3777 = vadd.f32 %v3519, %v3776
    %v3778 = vpop.f32.mrf.mxu0
    %v3779 = vadd.f32 %v3519, %v3778
    %3780 = vmatmul.bf16.gmra.mxu0 %v3625
    %v3781 = vpop.f32.mrf.mxu0
    %v3782 = vadd.f32 %v3519, %v3781
    %v3783 = vpop.f32.mrf.mxu0
    %v3784 = vadd.f32 %v3519, %v3783
    %3785 = vmatmul.bf16.gmra.mxu0 %v3628
    %v3786 = vpop.f32.mrf.mxu0
    %v3787 = vadd.f32 %v3519, %v3786
    %v3788 = vpop.f32.mrf.mxu0
    %v3789 = vadd.f32 %v3519, %v3788
    %3790 = vmatmul.bf16.gmra.mxu0 %v3631
    %v3791 = vpop.f32.mrf.mxu0
    %v3792 = vadd.f32 %v3519, %v3791
    %v3793 = vpop.f32.mrf.mxu0
    %v3794 = vadd.f32 %v3519, %v3793
    %3795 = vmatmul.bf16.gmra.mxu0 %v3634
    %v3796 = vpop.f32.mrf.mxu0
    %v3797 = vadd.f32 %v3519, %v3796
    %v3798 = vpop.f32.mrf.mxu0
    %v3799 = vadd.f32 %v3519, %v3798
    %3800 = vmatmul.bf16.gmra.mxu0 %v3637
    %v3801 = vpop.f32.mrf.mxu0
    %v3802 = vadd.f32 %v3519, %v3801
    %v3803 = vpop.f32.mrf.mxu0
    %v3804 = vadd.f32 %v3519, %v3803
    %3805 = vmatmul.bf16.gmra.mxu0 %v3640
    %v3806 = vpop.f32.mrf.mxu0
    %v3807 = vadd.f32 %v3519, %v3806
    %v3808 = vpop.f32.mrf.mxu0
    %v3809 = vadd.f32 %v3519, %v3808
    %3810 = vdwg.mxu0
    %3811 = vmax.xlane.f32.xlu0 %v3652
    %v3812 = vpop.xlane.xlu0 %3811
    %3813 = vmax.xlane.f32.xlu0 %v3654
    %v3814 = vpop.xlane.xlu0 %3813
    %3815 = vmax.xlane.f32.xlu0 %v3657
    %v3816 = vpop.xlane.xlu0 %3815
    %3817 = vmax.xlane.f32.xlu0 %v3659
    %v3818 = vpop.xlane.xlu0 %3817
    %3819 = vmax.xlane.f32.xlu0 %v3662
    %v3820 = vpop.xlane.xlu0 %3819
    %3821 = vmax.xlane.f32.xlu0 %v3664
    %v3822 = vpop.xlane.xlu0 %3821
    %3823 = vmax.xlane.f32.xlu0 %v3667
    %v3824 = vpop.xlane.xlu0 %3823
    %3825 = vmax.xlane.f32.xlu0 %v3669
    %v3826 = vpop.xlane.xlu0 %3825
    %3827 = vmax.xlane.f32.xlu0 %v3672
    %v3828 = vpop.xlane.xlu0 %3827
    %3829 = vmax.xlane.f32.xlu0 %v3674
    %v3830 = vpop.xlane.xlu0 %3829
    %3831 = vmax.xlane.f32.xlu0 %v3677
    %v3832 = vpop.xlane.xlu0 %3831
    %3833 = vmax.xlane.f32.xlu0 %v3679
    %v3834 = vpop.xlane.xlu0 %3833
    %3835 = vmax.xlane.f32.xlu0 %v3682
    %v3836 = vpop.xlane.xlu0 %3835
    %3837 = vmax.xlane.f32.xlu0 %v3684
    %v3838 = vpop.xlane.xlu0 %3837
    %3839 = vmax.xlane.f32.xlu0 %v3687
    %v3840 = vpop.xlane.xlu0 %3839
    %3841 = vmax.xlane.f32.xlu0 %v3689
    %v3842 = vpop.xlane.xlu0 %3841
    %3843 = vmax.xlane.f32.xlu0 %v3692
    %v3844 = vpop.xlane.xlu0 %3843
    %3845 = vmax.xlane.f32.xlu0 %v3694
    %v3846 = vpop.xlane.xlu0 %3845
    %3847 = vmax.xlane.f32.xlu0 %v3697
    %v3848 = vpop.xlane.xlu0 %3847
    %3849 = vmax.xlane.f32.xlu0 %v3699
    %v3850 = vpop.xlane.xlu0 %3849
    %3851 = vmax.xlane.f32.xlu0 %v3702
    %v3852 = vpop.xlane.xlu0 %3851
    %3853 = vmax.xlane.f32.xlu0 %v3704
    %v3854 = vpop.xlane.xlu0 %3853
    %3855 = vmax.xlane.f32.xlu0 %v3707
    %v3856 = vpop.xlane.xlu0 %3855
    %3857 = vmax.xlane.f32.xlu0 %v3709
    %v3858 = vpop.xlane.xlu0 %3857
    %3859 = vmax.xlane.f32.xlu0 %v3712
    %v3860 = vpop.xlane.xlu0 %3859
    %3861 = vmax.xlane.f32.xlu0 %v3714
    %v3862 = vpop.xlane.xlu0 %3861
    %3863 = vmax.xlane.f32.xlu0 %v3717
    %v3864 = vpop.xlane.xlu0 %3863
    %3865 = vmax.xlane.f32.xlu0 %v3719
    %v3866 = vpop.xlane.xlu0 %3865
    %3867 = vmax.xlane.f32.xlu0 %v3722
    %v3868 = vpop.xlane.xlu0 %3867
    %3869 = vmax.xlane.f32.xlu0 %v3724
    %v3870 = vpop.xlane.xlu0 %3869
    %3871 = vmax.xlane.f32.xlu0 %v3727
    %v3872 = vpop.xlane.xlu0 %3871
    %3873 = vmax.xlane.f32.xlu0 %v3729
    %v3874 = vpop.xlane.xlu0 %3873
    %3875 = vmax.xlane.f32.xlu0 %v3732
    %v3876 = vpop.xlane.xlu0 %3875
    %3877 = vmax.xlane.f32.xlu0 %v3734
    %v3878 = vpop.xlane.xlu0 %3877
    %3879 = vmax.xlane.f32.xlu0 %v3737
    %v3880 = vpop.xlane.xlu0 %3879
    %3881 = vmax.xlane.f32.xlu0 %v3739
    %v3882 = vpop.xlane.xlu0 %3881
    %3883 = vmax.xlane.f32.xlu0 %v3742
    %v3884 = vpop.xlane.xlu0 %3883
    %3885 = vmax.xlane.f32.xlu0 %v3744
    %v3886 = vpop.xlane.xlu0 %3885
    %3887 = vmax.xlane.f32.xlu0 %v3747
    %v3888 = vpop.xlane.xlu0 %3887
    %3889 = vmax.xlane.f32.xlu0 %v3749
    %v3890 = vpop.xlane.xlu0 %3889
    %3891 = vmax.xlane.f32.xlu0 %v3752
    %v3892 = vpop.xlane.xlu0 %3891
    %3893 = vmax.xlane.f32.xlu0 %v3754
    %v3894 = vpop.xlane.xlu0 %3893
    %3895 = vmax.xlane.f32.xlu0 %v3757
    %v3896 = vpop.xlane.xlu0 %3895
    %3897 = vmax.xlane.f32.xlu0 %v3759
    %v3898 = vpop.xlane.xlu0 %3897
    %3899 = vmax.xlane.f32.xlu0 %v3762
    %v3900 = vpop.xlane.xlu0 %3899
    %3901 = vmax.xlane.f32.xlu0 %v3764
    %v3902 = vpop.xlane.xlu0 %3901
    %3903 = vmax.xlane.f32.xlu0 %v3767
    %v3904 = vpop.xlane.xlu0 %3903
    %3905 = vmax.xlane.f32.xlu0 %v3769
    %v3906 = vpop.xlane.xlu0 %3905
    %3907 = vmax.xlane.f32.xlu0 %v3772
    %v3908 = vpop.xlane.xlu0 %3907
    %3909 = vmax.xlane.f32.xlu0 %v3774
    %v3910 = vpop.xlane.xlu0 %3909
    %3911 = vmax.xlane.f32.xlu0 %v3777
    %v3912 = vpop.xlane.xlu0 %3911
    %3913 = vmax.xlane.f32.xlu0 %v3779
    %v3914 = vpop.xlane.xlu0 %3913
    %3915 = vmax.xlane.f32.xlu0 %v3782
    %v3916 = vpop.xlane.xlu0 %3915
    %3917 = vmax.xlane.f32.xlu0 %v3784
    %v3918 = vpop.xlane.xlu0 %3917
    %3919 = vmax.xlane.f32.xlu0 %v3787
    %v3920 = vpop.xlane.xlu0 %3919
    %3921 = vmax.xlane.f32.xlu0 %v3789
    %v3922 = vpop.xlane.xlu0 %3921
    %3923 = vmax.xlane.f32.xlu0 %v3792
    %v3924 = vpop.xlane.xlu0 %3923
    %3925 = vmax.xlane.f32.xlu0 %v3794
    %v3926 = vpop.xlane.xlu0 %3925
    %3927 = vmax.xlane.f32.xlu0 %v3797
    %v3928 = vpop.xlane.xlu0 %3927
    %3929 = vmax.xlane.f32.xlu0 %v3799
    %v3930 = vpop.xlane.xlu0 %3929
    %3931 = vmax.xlane.f32.xlu0 %v3802
    %v3932 = vpop.xlane.xlu0 %3931
    %3933 = vmax.xlane.f32.xlu0 %v3804
    %v3934 = vpop.xlane.xlu0 %3933
    %3935 = vmax.xlane.f32.xlu0 %v3807
    %v3936 = vpop.xlane.xlu0 %3935
    %3937 = vmax.xlane.f32.xlu0 %v3809
    %v3938 = vpop.xlane.xlu0 %3937
    %v3939 = vsub.f32 %v3652, %v3812
    %v3940 = vsub.f32 %v3654, %v3814
    %v3941 = vsub.f32 %v3657, %v3816
    %v3942 = vsub.f32 %v3659, %v3818
    %v3943 = vsub.f32 %v3662, %v3820
    %v3944 = vsub.f32 %v3664, %v3822
    %v3945 = vsub.f32 %v3667, %v3824
    %v3946 = vsub.f32 %v3669, %v3826
    %v3947 = vsub.f32 %v3672, %v3828
    %v3948 = vsub.f32 %v3674, %v3830
    %v3949 = vsub.f32 %v3677, %v3832
    %v3950 = vsub.f32 %v3679, %v3834
    %v3951 = vsub.f32 %v3682, %v3836
    %v3952 = vsub.f32 %v3684, %v3838
    %v3953 = vsub.f32 %v3687, %v3840
    %v3954 = vsub.f32 %v3689, %v3842
    %v3955 = vsub.f32 %v3692, %v3844
    %v3956 = vsub.f32 %v3694, %v3846
    %v3957 = vsub.f32 %v3697, %v3848
    %v3958 = vsub.f32 %v3699, %v3850
    %v3959 = vsub.f32 %v3702, %v3852
    %v3960 = vsub.f32 %v3704, %v3854
    %v3961 = vsub.f32 %v3707, %v3856
    %v3962 = vsub.f32 %v3709, %v3858
    %v3963 = vsub.f32 %v3712, %v3860
    %v3964 = vsub.f32 %v3714, %v3862
    %v3965 = vsub.f32 %v3717, %v3864
    %v3966 = vsub.f32 %v3719, %v3866
    %v3967 = vsub.f32 %v3722, %v3868
    %v3968 = vsub.f32 %v3724, %v3870
    %v3969 = vsub.f32 %v3727, %v3872
    %v3970 = vsub.f32 %v3729, %v3874
    %v3971 = vsub.f32 %v3732, %v3876
    %v3972 = vsub.f32 %v3734, %v3878
    %v3973 = vsub.f32 %v3737, %v3880
    %v3974 = vsub.f32 %v3739, %v3882
    %v3975 = vsub.f32 %v3742, %v3884
    %v3976 = vsub.f32 %v3744, %v3886
    %v3977 = vsub.f32 %v3747, %v3888
    %v3978 = vsub.f32 %v3749, %v3890
    %v3979 = vsub.f32 %v3752, %v3892
    %v3980 = vsub.f32 %v3754, %v3894
    %v3981 = vsub.f32 %v3757, %v3896
    %v3982 = vsub.f32 %v3759, %v3898
    %v3983 = vsub.f32 %v3762, %v3900
    %v3984 = vsub.f32 %v3764, %v3902
    %v3985 = vsub.f32 %v3767, %v3904
    %v3986 = vsub.f32 %v3769, %v3906
    %v3987 = vsub.f32 %v3772, %v3908
    %v3988 = vsub.f32 %v3774, %v3910
    %v3989 = vsub.f32 %v3777, %v3912
    %v3990 = vsub.f32 %v3779, %v3914
    %v3991 = vsub.f32 %v3782, %v3916
    %v3992 = vsub.f32 %v3784, %v3918
    %v3993 = vsub.f32 %v3787, %v3920
    %v3994 = vsub.f32 %v3789, %v3922
    %v3995 = vsub.f32 %v3792, %v3924
    %v3996 = vsub.f32 %v3794, %v3926
    %v3997 = vsub.f32 %v3797, %v3928
    %v3998 = vsub.f32 %v3799, %v3930
    %v3999 = vsub.f32 %v3802, %v3932
    %v4000 = vsub.f32 %v3804, %v3934
    %v4001 = vsub.f32 %v3807, %v3936
    %v4002 = vsub.f32 %v3809, %v3938
    %v4003 = vmul.f32 %v3939, 1.442695
    %v4004 = vpow.pop %v4003
    %v4005 = vmul.f32 %v3940, 1.442695
    %v4006 = vpow.pop %v4005
    %v4007 = vmul.f32 %v3941, 1.442695
    %v4008 = vpow.pop %v4007
    %v4009 = vmul.f32 %v3942, 1.442695
    %v4010 = vpow.pop %v4009
    %v4011 = vmul.f32 %v3943, 1.442695
    %v4012 = vpow.pop %v4011
    %v4013 = vmul.f32 %v3944, 1.442695
    %v4014 = vpow.pop %v4013
    %v4015 = vmul.f32 %v3945, 1.442695
    %v4016 = vpow.pop %v4015
    %v4017 = vmul.f32 %v3946, 1.442695
    %v4018 = vpow.pop %v4017
    %v4019 = vmul.f32 %v3947, 1.442695
    %v4020 = vpow.pop %v4019
    %v4021 = vmul.f32 %v3948, 1.442695
    %v4022 = vpow.pop %v4021
    %v4023 = vmul.f32 %v3949, 1.442695
    %v4024 = vpow.pop %v4023
    %v4025 = vmul.f32 %v3950, 1.442695
    %v4026 = vpow.pop %v4025
    %v4027 = vmul.f32 %v3951, 1.442695
    %v4028 = vpow.pop %v4027
    %v4029 = vmul.f32 %v3952, 1.442695
    %v4030 = vpow.pop %v4029
    %v4031 = vmul.f32 %v3953, 1.442695
    %v4032 = vpow.pop %v4031
    %v4033 = vmul.f32 %v3954, 1.442695
    %v4034 = vpow.pop %v4033
    %v4035 = vmul.f32 %v3955, 1.442695
    %v4036 = vpow.pop %v4035
    %v4037 = vmul.f32 %v3956, 1.442695
    %v4038 = vpow.pop %v4037
    %v4039 = vmul.f32 %v3957, 1.442695
    %v4040 = vpow.pop %v4039
    %v4041 = vmul.f32 %v3958, 1.442695
    %v4042 = vpow.pop %v4041
    %v4043 = vmul.f32 %v3959, 1.442695
    %v4044 = vpow.pop %v4043
    %v4045 = vmul.f32 %v3960, 1.442695
    %v4046 = vpow.pop %v4045
    %v4047 = vmul.f32 %v3961, 1.442695
    %v4048 = vpow.pop %v4047
    %v4049 = vmul.f32 %v3962, 1.442695
    %v4050 = vpow.pop %v4049
    %v4051 = vmul.f32 %v3963, 1.442695
    %v4052 = vpow.pop %v4051
    %v4053 = vmul.f32 %v3964, 1.442695
    %v4054 = vpow.pop %v4053
    %v4055 = vmul.f32 %v3965, 1.442695
    %v4056 = vpow.pop %v4055
    %v4057 = vmul.f32 %v3966, 1.442695
    %v4058 = vpow.pop %v4057
    %v4059 = vmul.f32 %v3967, 1.442695
    %v4060 = vpow.pop %v4059
    %v4061 = vmul.f32 %v3968, 1.442695
    %v4062 = vpow.pop %v4061
    %v4063 = vmul.f32 %v3969, 1.442695
    %v4064 = vpow.pop %v4063
    %v4065 = vmul.f32 %v3970, 1.442695
    %v4066 = vpow.pop %v4065
    %v4067 = vmul.f32 %v3971, 1.442695
    %v4068 = vpow.pop %v4067
    %v4069 = vmul.f32 %v3972, 1.442695
    %v4070 = vpow.pop %v4069
    %v4071 = vmul.f32 %v3973, 1.442695
    %v4072 = vpow.pop %v4071
    %v4073 = vmul.f32 %v3974, 1.442695
    %v4074 = vpow.pop %v4073
    %v4075 = vmul.f32 %v3975, 1.442695
    %v4076 = vpow.pop %v4075
    %v4077 = vmul.f32 %v3976, 1.442695
    %v4078 = vpow.pop %v4077
    %v4079 = vmul.f32 %v3977, 1.442695
    %v4080 = vpow.pop %v4079
    %v4081 = vmul.f32 %v3978, 1.442695
    %v4082 = vpow.pop %v4081
    %v4083 = vmul.f32 %v3979, 1.442695
    %v4084 = vpow.pop %v4083
    %v4085 = vmul.f32 %v3980, 1.442695
    %v4086 = vpow.pop %v4085
    %v4087 = vmul.f32 %v3981, 1.442695
    %v4088 = vpow.pop %v4087
    %v4089 = vmul.f32 %v3982, 1.442695
    %v4090 = vpow.pop %v4089
    %v4091 = vmul.f32 %v3983, 1.442695
    %v4092 = vpow.pop %v4091
    %v4093 = vmul.f32 %v3984, 1.442695
    %v4094 = vpow.pop %v4093
    %v4095 = vmul.f32 %v3985, 1.442695
    %v4096 = vpow.pop %v4095
    %v4097 = vmul.f32 %v3986, 1.442695
    %v4098 = vpow.pop %v4097
    %v4099 = vmul.f32 %v3987, 1.442695
    %v4100 = vpow.pop %v4099
    %v4101 = vmul.f32 %v3988, 1.442695
    %v4102 = vpow.pop %v4101
    %v4103 = vmul.f32 %v3989, 1.442695
    %v4104 = vpow.pop %v4103
    %v4105 = vmul.f32 %v3990, 1.442695
    %v4106 = vpow.pop %v4105
    %v4107 = vmul.f32 %v3991, 1.442695
    %v4108 = vpow.pop %v4107
    %v4109 = vmul.f32 %v3992, 1.442695
    %v4110 = vpow.pop %v4109
    %v4111 = vmul.f32 %v3993, 1.442695
    %v4112 = vpow.pop %v4111
    %v4113 = vmul.f32 %v3994, 1.442695
    %v4114 = vpow.pop %v4113
    %v4115 = vmul.f32 %v3995, 1.442695
    %v4116 = vpow.pop %v4115
    %v4117 = vmul.f32 %v3996, 1.442695
    %v4118 = vpow.pop %v4117
    %v4119 = vmul.f32 %v3997, 1.442695
    %v4120 = vpow.pop %v4119
    %v4121 = vmul.f32 %v3998, 1.442695
    %v4122 = vpow.pop %v4121
    %v4123 = vmul.f32 %v3999, 1.442695
    %v4124 = vpow.pop %v4123
    %v4125 = vmul.f32 %v4000, 1.442695
    %v4126 = vpow.pop %v4125
    %v4127 = vmul.f32 %v4001, 1.442695
    %v4128 = vpow.pop %v4127
    %v4129 = vmul.f32 %v4002, 1.442695
    %v4130 = vpow.pop %v4129
    %4131 = vadd.xlane.f32.xlu0 %v4004
    %v4132 = vpop.xlane.xlu0 %4131
    %4133 = vadd.xlane.f32.xlu0 %v4006
    %v4134 = vpop.xlane.xlu0 %4133
    %4135 = vadd.xlane.f32.xlu0 %v4008
    %v4136 = vpop.xlane.xlu0 %4135
    %4137 = vadd.xlane.f32.xlu0 %v4010
    %v4138 = vpop.xlane.xlu0 %4137
    %4139 = vadd.xlane.f32.xlu0 %v4012
    %v4140 = vpop.xlane.xlu0 %4139
    %4141 = vadd.xlane.f32.xlu0 %v4014
    %v4142 = vpop.xlane.xlu0 %4141
    %4143 = vadd.xlane.f32.xlu0 %v4016
    %v4144 = vpop.xlane.xlu0 %4143
    %4145 = vadd.xlane.f32.xlu0 %v4018
    %v4146 = vpop.xlane.xlu0 %4145
    %4147 = vadd.xlane.f32.xlu0 %v4020
    %v4148 = vpop.xlane.xlu0 %4147
    %4149 = vadd.xlane.f32.xlu0 %v4022
    %v4150 = vpop.xlane.xlu0 %4149
    %4151 = vadd.xlane.f32.xlu0 %v4024
    %v4152 = vpop.xlane.xlu0 %4151
    %4153 = vadd.xlane.f32.xlu0 %v4026
    %v4154 = vpop.xlane.xlu0 %4153
    %4155 = vadd.xlane.f32.xlu0 %v4028
    %v4156 = vpop.xlane.xlu0 %4155
    %4157 = vadd.xlane.f32.xlu0 %v4030
    %v4158 = vpop.xlane.xlu0 %4157
    %4159 = vadd.xlane.f32.xlu0 %v4032
    %v4160 = vpop.xlane.xlu0 %4159
    %4161 = vadd.xlane.f32.xlu0 %v4034
    %v4162 = vpop.xlane.xlu0 %4161
    %4163 = vadd.xlane.f32.xlu0 %v4036
    %v4164 = vpop.xlane.xlu0 %4163
    %4165 = vadd.xlane.f32.xlu0 %v4038
    %v4166 = vpop.xlane.xlu0 %4165
    %4167 = vadd.xlane.f32.xlu0 %v4040
    %v4168 = vpop.xlane.xlu0 %4167
    %4169 = vadd.xlane.f32.xlu0 %v4042
    %v4170 = vpop.xlane.xlu0 %4169
    %4171 = vadd.xlane.f32.xlu0 %v4044
    %v4172 = vpop.xlane.xlu0 %4171
    %4173 = vadd.xlane.f32.xlu0 %v4046
    %v4174 = vpop.xlane.xlu0 %4173
    %4175 = vadd.xlane.f32.xlu0 %v4048
    %v4176 = vpop.xlane.xlu0 %4175
    %4177 = vadd.xlane.f32.xlu0 %v4050
    %v4178 = vpop.xlane.xlu0 %4177
    %4179 = vadd.xlane.f32.xlu0 %v4052
    %v4180 = vpop.xlane.xlu0 %4179
    %4181 = vadd.xlane.f32.xlu0 %v4054
    %v4182 = vpop.xlane.xlu0 %4181
    %4183 = vadd.xlane.f32.xlu0 %v4056
    %v4184 = vpop.xlane.xlu0 %4183
    %4185 = vadd.xlane.f32.xlu0 %v4058
    %v4186 = vpop.xlane.xlu0 %4185
    %4187 = vadd.xlane.f32.xlu0 %v4060
    %v4188 = vpop.xlane.xlu0 %4187
    %4189 = vadd.xlane.f32.xlu0 %v4062
    %v4190 = vpop.xlane.xlu0 %4189
    %4191 = vadd.xlane.f32.xlu0 %v4064
    %v4192 = vpop.xlane.xlu0 %4191
    %4193 = vadd.xlane.f32.xlu0 %v4066
    %v4194 = vpop.xlane.xlu0 %4193
    %4195 = vadd.xlane.f32.xlu0 %v4068
    %v4196 = vpop.xlane.xlu0 %4195
    %4197 = vadd.xlane.f32.xlu0 %v4070
    %v4198 = vpop.xlane.xlu0 %4197
    %4199 = vadd.xlane.f32.xlu0 %v4072
    %v4200 = vpop.xlane.xlu0 %4199
    %4201 = vadd.xlane.f32.xlu0 %v4074
    %v4202 = vpop.xlane.xlu0 %4201
    %4203 = vadd.xlane.f32.xlu0 %v4076
    %v4204 = vpop.xlane.xlu0 %4203
    %4205 = vadd.xlane.f32.xlu0 %v4078
    %v4206 = vpop.xlane.xlu0 %4205
    %4207 = vadd.xlane.f32.xlu0 %v4080
    %v4208 = vpop.xlane.xlu0 %4207
    %4209 = vadd.xlane.f32.xlu0 %v4082
    %v4210 = vpop.xlane.xlu0 %4209
    %4211 = vadd.xlane.f32.xlu0 %v4084
    %v4212 = vpop.xlane.xlu0 %4211
    %4213 = vadd.xlane.f32.xlu0 %v4086
    %v4214 = vpop.xlane.xlu0 %4213
    %4215 = vadd.xlane.f32.xlu0 %v4088
    %v4216 = vpop.xlane.xlu0 %4215
    %4217 = vadd.xlane.f32.xlu0 %v4090
    %v4218 = vpop.xlane.xlu0 %4217
    %4219 = vadd.xlane.f32.xlu0 %v4092
    %v4220 = vpop.xlane.xlu0 %4219
    %4221 = vadd.xlane.f32.xlu0 %v4094
    %v4222 = vpop.xlane.xlu0 %4221
    %4223 = vadd.xlane.f32.xlu0 %v4096
    %v4224 = vpop.xlane.xlu0 %4223
    %4225 = vadd.xlane.f32.xlu0 %v4098
    %v4226 = vpop.xlane.xlu0 %4225
    %4227 = vadd.xlane.f32.xlu0 %v4100
    %v4228 = vpop.xlane.xlu0 %4227
    %4229 = vadd.xlane.f32.xlu0 %v4102
    %v4230 = vpop.xlane.xlu0 %4229
    %4231 = vadd.xlane.f32.xlu0 %v4104
    %v4232 = vpop.xlane.xlu0 %4231
    %4233 = vadd.xlane.f32.xlu0 %v4106
    %v4234 = vpop.xlane.xlu0 %4233
    %4235 = vadd.xlane.f32.xlu0 %v4108
    %v4236 = vpop.xlane.xlu0 %4235
    %4237 = vadd.xlane.f32.xlu0 %v4110
    %v4238 = vpop.xlane.xlu0 %4237
    %4239 = vadd.xlane.f32.xlu0 %v4112
    %v4240 = vpop.xlane.xlu0 %4239
    %4241 = vadd.xlane.f32.xlu0 %v4114
    %v4242 = vpop.xlane.xlu0 %4241
    %4243 = vadd.xlane.f32.xlu0 %v4116
    %v4244 = vpop.xlane.xlu0 %4243
    %4245 = vadd.xlane.f32.xlu0 %v4118
    %v4246 = vpop.xlane.xlu0 %4245
    %4247 = vadd.xlane.f32.xlu0 %v4120
    %v4248 = vpop.xlane.xlu0 %4247
    %4249 = vadd.xlane.f32.xlu0 %v4122
    %v4250 = vpop.xlane.xlu0 %4249
    %4251 = vadd.xlane.f32.xlu0 %v4124
    %v4252 = vpop.xlane.xlu0 %4251
    %4253 = vadd.xlane.f32.xlu0 %v4126
    %v4254 = vpop.xlane.xlu0 %4253
    %4255 = vadd.xlane.f32.xlu0 %v4128
    %v4256 = vpop.xlane.xlu0 %4255
    %4257 = vadd.xlane.f32.xlu0 %v4130
    %v4258 = vpop.xlane.xlu0 %4257
    %v4259 = vlog2.pop %v4132
    %v4260 = vmul.f32 %v4259, 0.6931472
    %v4261 = vlog2.pop %v4134
    %v4262 = vmul.f32 %v4261, 0.6931472
    %v4263 = vlog2.pop %v4136
    %v4264 = vmul.f32 %v4263, 0.6931472
    %v4265 = vlog2.pop %v4138
    %v4266 = vmul.f32 %v4265, 0.6931472
    %v4267 = vlog2.pop %v4140
    %v4268 = vmul.f32 %v4267, 0.6931472
    %v4269 = vlog2.pop %v4142
    %v4270 = vmul.f32 %v4269, 0.6931472
    %v4271 = vlog2.pop %v4144
    %v4272 = vmul.f32 %v4271, 0.6931472
    %v4273 = vlog2.pop %v4146
    %v4274 = vmul.f32 %v4273, 0.6931472
    %v4275 = vlog2.pop %v4148
    %v4276 = vmul.f32 %v4275, 0.6931472
    %v4277 = vlog2.pop %v4150
    %v4278 = vmul.f32 %v4277, 0.6931472
    %v4279 = vlog2.pop %v4152
    %v4280 = vmul.f32 %v4279, 0.6931472
    %v4281 = vlog2.pop %v4154
    %v4282 = vmul.f32 %v4281, 0.6931472
    %v4283 = vlog2.pop %v4156
    %v4284 = vmul.f32 %v4283, 0.6931472
    %v4285 = vlog2.pop %v4158
    %v4286 = vmul.f32 %v4285, 0.6931472
    %v4287 = vlog2.pop %v4160
    %v4288 = vmul.f32 %v4287, 0.6931472
    %v4289 = vlog2.pop %v4162
    %v4290 = vmul.f32 %v4289, 0.6931472
    %v4291 = vlog2.pop %v4164
    %v4292 = vmul.f32 %v4291, 0.6931472
    %v4293 = vlog2.pop %v4166
    %v4294 = vmul.f32 %v4293, 0.6931472
    %v4295 = vlog2.pop %v4168
    %v4296 = vmul.f32 %v4295, 0.6931472
    %v4297 = vlog2.pop %v4170
    %v4298 = vmul.f32 %v4297, 0.6931472
    %v4299 = vlog2.pop %v4172
    %v4300 = vmul.f32 %v4299, 0.6931472
    %v4301 = vlog2.pop %v4174
    %v4302 = vmul.f32 %v4301, 0.6931472
    %v4303 = vlog2.pop %v4176
    %v4304 = vmul.f32 %v4303, 0.6931472
    %v4305 = vlog2.pop %v4178
    %v4306 = vmul.f32 %v4305, 0.6931472
    %v4307 = vlog2.pop %v4180
    %v4308 = vmul.f32 %v4307, 0.6931472
    %v4309 = vlog2.pop %v4182
    %v4310 = vmul.f32 %v4309, 0.6931472
    %v4311 = vlog2.pop %v4184
    %v4312 = vmul.f32 %v4311, 0.6931472
    %v4313 = vlog2.pop %v4186
    %v4314 = vmul.f32 %v4313, 0.6931472
    %v4315 = vlog2.pop %v4188
    %v4316 = vmul.f32 %v4315, 0.6931472
    %v4317 = vlog2.pop %v4190
    %v4318 = vmul.f32 %v4317, 0.6931472
    %v4319 = vlog2.pop %v4192
    %v4320 = vmul.f32 %v4319, 0.6931472
    %v4321 = vlog2.pop %v4194
    %v4322 = vmul.f32 %v4321, 0.6931472
    %v4323 = vlog2.pop %v4196
    %v4324 = vmul.f32 %v4323, 0.6931472
    %v4325 = vlog2.pop %v4198
    %v4326 = vmul.f32 %v4325, 0.6931472
    %v4327 = vlog2.pop %v4200
    %v4328 = vmul.f32 %v4327, 0.6931472
    %v4329 = vlog2.pop %v4202
    %v4330 = vmul.f32 %v4329, 0.6931472
    %v4331 = vlog2.pop %v4204
    %v4332 = vmul.f32 %v4331, 0.6931472
    %v4333 = vlog2.pop %v4206
    %v4334 = vmul.f32 %v4333, 0.6931472
    %v4335 = vlog2.pop %v4208
    %v4336 = vmul.f32 %v4335, 0.6931472
    %v4337 = vlog2.pop %v4210
    %v4338 = vmul.f32 %v4337, 0.6931472
    %v4339 = vlog2.pop %v4212
    %v4340 = vmul.f32 %v4339, 0.6931472
    %v4341 = vlog2.pop %v4214
    %v4342 = vmul.f32 %v4341, 0.6931472
    %v4343 = vlog2.pop %v4216
    %v4344 = vmul.f32 %v4343, 0.6931472
    %v4345 = vlog2.pop %v4218
    %v4346 = vmul.f32 %v4345, 0.6931472
    %v4347 = vlog2.pop %v4220
    %v4348 = vmul.f32 %v4347, 0.6931472
    %v4349 = vlog2.pop %v4222
    %v4350 = vmul.f32 %v4349, 0.6931472
    %v4351 = vlog2.pop %v4224
    %v4352 = vmul.f32 %v4351, 0.6931472
    %v4353 = vlog2.pop %v4226
    %v4354 = vmul.f32 %v4353, 0.6931472
    %v4355 = vlog2.pop %v4228
    %v4356 = vmul.f32 %v4355, 0.6931472
    %v4357 = vlog2.pop %v4230
    %v4358 = vmul.f32 %v4357, 0.6931472
    %v4359 = vlog2.pop %v4232
    %v4360 = vmul.f32 %v4359, 0.6931472
    %v4361 = vlog2.pop %v4234
    %v4362 = vmul.f32 %v4361, 0.6931472
    %v4363 = vlog2.pop %v4236
    %v4364 = vmul.f32 %v4363, 0.6931472
    %v4365 = vlog2.pop %v4238
    %v4366 = vmul.f32 %v4365, 0.6931472
    %v4367 = vlog2.pop %v4240
    %v4368 = vmul.f32 %v4367, 0.6931472
    %v4369 = vlog2.pop %v4242
    %v4370 = vmul.f32 %v4369, 0.6931472
    %v4371 = vlog2.pop %v4244
    %v4372 = vmul.f32 %v4371, 0.6931472
    %v4373 = vlog2.pop %v4246
    %v4374 = vmul.f32 %v4373, 0.6931472
    %v4375 = vlog2.pop %v4248
    %v4376 = vmul.f32 %v4375, 0.6931472
    %v4377 = vlog2.pop %v4250
    %v4378 = vmul.f32 %v4377, 0.6931472
    %v4379 = vlog2.pop %v4252
    %v4380 = vmul.f32 %v4379, 0.6931472
    %v4381 = vlog2.pop %v4254
    %v4382 = vmul.f32 %v4381, 0.6931472
    %v4383 = vlog2.pop %v4256
    %v4384 = vmul.f32 %v4383, 0.6931472
    %v4385 = vlog2.pop %v4258
    %v4386 = vmul.f32 %v4385, 0.6931472
    %v4387 = vsub.f32 %v3939, %v4260
    %v4388 = vsub.f32 %v3940, %v4262
    %v4389 = vsub.f32 %v3941, %v4264
    %v4390 = vsub.f32 %v3942, %v4266
    %v4391 = vsub.f32 %v3943, %v4268
    %v4392 = vsub.f32 %v3944, %v4270
    %v4393 = vsub.f32 %v3945, %v4272
    %v4394 = vsub.f32 %v3946, %v4274
    %v4395 = vsub.f32 %v3947, %v4276
    %v4396 = vsub.f32 %v3948, %v4278
    %v4397 = vsub.f32 %v3949, %v4280
    %v4398 = vsub.f32 %v3950, %v4282
    %v4399 = vsub.f32 %v3951, %v4284
    %v4400 = vsub.f32 %v3952, %v4286
    %v4401 = vsub.f32 %v3953, %v4288
    %v4402 = vsub.f32 %v3954, %v4290
    %v4403 = vsub.f32 %v3955, %v4292
    %v4404 = vsub.f32 %v3956, %v4294
    %v4405 = vsub.f32 %v3957, %v4296
    %v4406 = vsub.f32 %v3958, %v4298
    %v4407 = vsub.f32 %v3959, %v4300
    %v4408 = vsub.f32 %v3960, %v4302
    %v4409 = vsub.f32 %v3961, %v4304
    %v4410 = vsub.f32 %v3962, %v4306
    %v4411 = vsub.f32 %v3963, %v4308
    %v4412 = vsub.f32 %v3964, %v4310
    %v4413 = vsub.f32 %v3965, %v4312
    %v4414 = vsub.f32 %v3966, %v4314
    %v4415 = vsub.f32 %v3967, %v4316
    %v4416 = vsub.f32 %v3968, %v4318
    %v4417 = vsub.f32 %v3969, %v4320
    %v4418 = vsub.f32 %v3970, %v4322
    %v4419 = vsub.f32 %v3971, %v4324
    %v4420 = vsub.f32 %v3972, %v4326
    %v4421 = vsub.f32 %v3973, %v4328
    %v4422 = vsub.f32 %v3974, %v4330
    %v4423 = vsub.f32 %v3975, %v4332
    %v4424 = vsub.f32 %v3976, %v4334
    %v4425 = vsub.f32 %v3977, %v4336
    %v4426 = vsub.f32 %v3978, %v4338
    %v4427 = vsub.f32 %v3979, %v4340
    %v4428 = vsub.f32 %v3980, %v4342
    %v4429 = vsub.f32 %v3981, %v4344
    %v4430 = vsub.f32 %v3982, %v4346
    %v4431 = vsub.f32 %v3983, %v4348
    %v4432 = vsub.f32 %v3984, %v4350
    %v4433 = vsub.f32 %v3985, %v4352
    %v4434 = vsub.f32 %v3986, %v4354
    %v4435 = vsub.f32 %v3987, %v4356
    %v4436 = vsub.f32 %v3988, %v4358
    %v4437 = vsub.f32 %v3989, %v4360
    %v4438 = vsub.f32 %v3990, %v4362
    %v4439 = vsub.f32 %v3991, %v4364
    %v4440 = vsub.f32 %v3992, %v4366
    %v4441 = vsub.f32 %v3993, %v4368
    %v4442 = vsub.f32 %v3994, %v4370
    %v4443 = vsub.f32 %v3995, %v4372
    %v4444 = vsub.f32 %v3996, %v4374
    %v4445 = vsub.f32 %v3997, %v4376
    %v4446 = vsub.f32 %v3998, %v4378
    %v4447 = vsub.f32 %v3999, %v4380
    %v4448 = vsub.f32 %v4000, %v4382
    %v4449 = vsub.f32 %v4001, %v4384
    %v4450 = vsub.f32 %v4002, %v4386
    %4451 = vst [vmem:[#allocation2] sm:$0xff] %v4387
    %4452 = vst [vmem:[#allocation2 + $0x8] sm:$0xff] %v4388
    %4453 = vst [vmem:[#allocation2 + $0x10] sm:$0xff] %v4389
    %4454 = vst [vmem:[#allocation2 + $0x18] sm:$0xff] %v4390
    %4455 = vst [vmem:[#allocation2 + $0x20] sm:$0xff] %v4391
    %4456 = vst [vmem:[#allocation2 + $0x28] sm:$0xff] %v4392
    %4457 = vst [vmem:[#allocation2 + $0x30] sm:$0xff] %v4393
    %4458 = vst [vmem:[#allocation2 + $0x38] sm:$0xff] %v4394
    %4459 = vst [vmem:[#allocation2 + $0x40] sm:$0xff] %v4395
    %4460 = vst [vmem:[#allocation2 + $0x48] sm:$0xff] %v4396
    %4461 = vst [vmem:[#allocation2 + $0x50] sm:$0xff] %v4397
    %4462 = vst [vmem:[#allocation2 + $0x58] sm:$0xff] %v4398
    %4463 = vst [vmem:[#allocation2 + $0x60] sm:$0xff] %v4399
    %4464 = vst [vmem:[#allocation2 + $0x68] sm:$0xff] %v4400
    %4465 = vst [vmem:[#allocation2 + $0x70] sm:$0xff] %v4401
    %4466 = vst [vmem:[#allocation2 + $0x78] sm:$0xff] %v4402
    %4467 = vst [vmem:[#allocation2 + $0x80] sm:$0xff] %v4403
    %4468 = vst [vmem:[#allocation2 + $0x88] sm:$0xff] %v4404
    %4469 = vst [vmem:[#allocation2 + $0x90] sm:$0xff] %v4405
    %4470 = vst [vmem:[#allocation2 + $0x98] sm:$0xff] %v4406
    %4471 = vst [vmem:[#allocation2 + $0xa0] sm:$0xff] %v4407
    %4472 = vst [vmem:[#allocation2 + $0xa8] sm:$0xff] %v4408
    %4473 = vst [vmem:[#allocation2 + $0xb0] sm:$0xff] %v4409
    %4474 = vst [vmem:[#allocation2 + $0xb8] sm:$0xff] %v4410
    %4475 = vst [vmem:[#allocation2 + $0xc0] sm:$0xff] %v4411
    %4476 = vst [vmem:[#allocation2 + $0xc8] sm:$0xff] %v4412
    %4477 = vst [vmem:[#allocation2 + $0xd0] sm:$0xff] %v4413
    %4478 = vst [vmem:[#allocation2 + $0xd8] sm:$0xff] %v4414
    %4479 = vst [vmem:[#allocation2 + $0xe0] sm:$0xff] %v4415
    %4480 = vst [vmem:[#allocation2 + $0xe8] sm:$0xff] %v4416
    %4481 = vst [vmem:[#allocation2 + $0xf0] sm:$0xff] %v4417
    %4482 = vst [vmem:[#allocation2 + $0xf8] sm:$0xff] %v4418
    %4483 = vst [vmem:[#allocation2 + $0x100] sm:$0xff] %v4419
    %4484 = vst [vmem:[#allocation2 + $0x108] sm:$0xff] %v4420
    %4485 = vst [vmem:[#allocation2 + $0x110] sm:$0xff] %v4421
    %4486 = vst [vmem:[#allocation2 + $0x118] sm:$0xff] %v4422
    %4487 = vst [vmem:[#allocation2 + $0x120] sm:$0xff] %v4423
    %4488 = vst [vmem:[#allocation2 + $0x128] sm:$0xff] %v4424
    %4489 = vst [vmem:[#allocation2 + $0x130] sm:$0xff] %v4425
    %4490 = vst [vmem:[#allocation2 + $0x138] sm:$0xff] %v4426
    %4491 = vst [vmem:[#allocation2 + $0x140] sm:$0xff] %v4427
    %4492 = vst [vmem:[#allocation2 + $0x148] sm:$0xff] %v4428
    %4493 = vst [vmem:[#allocation2 + $0x150] sm:$0xff] %v4429
    %4494 = vst [vmem:[#allocation2 + $0x158] sm:$0xff] %v4430
    %4495 = vst [vmem:[#allocation2 + $0x160] sm:$0xff] %v4431
    %4496 = vst [vmem:[#allocation2 + $0x168] sm:$0xff] %v4432
    %4497 = vst [vmem:[#allocation2 + $0x170] sm:$0xff] %v4433
    %4498 = vst [vmem:[#allocation2 + $0x178] sm:$0xff] %v4434
    %4499 = vst [vmem:[#allocation2 + $0x180] sm:$0xff] %v4435
    %4500 = vst [vmem:[#allocation2 + $0x188] sm:$0xff] %v4436
    %4501 = vst [vmem:[#allocation2 + $0x190] sm:$0xff] %v4437
    %4502 = vst [vmem:[#allocation2 + $0x198] sm:$0xff] %v4438
    %4503 = vst [vmem:[#allocation2 + $0x1a0] sm:$0xff] %v4439
    %4504 = vst [vmem:[#allocation2 + $0x1a8] sm:$0xff] %v4440
    %4505 = vst [vmem:[#allocation2 + $0x1b0] sm:$0xff] %v4441
    %4506 = vst [vmem:[#allocation2 + $0x1b8] sm:$0xff] %v4442
    %4507 = vst [vmem:[#allocation2 + $0x1c0] sm:$0xff] %v4443
    %4508 = vst [vmem:[#allocation2 + $0x1c8] sm:$0xff] %v4444
    %4509 = vst [vmem:[#allocation2 + $0x1d0] sm:$0xff] %v4445
    %4510 = vst [vmem:[#allocation2 + $0x1d8] sm:$0xff] %v4446
    %4511 = vst [vmem:[#allocation2 + $0x1e0] sm:$0xff] %v4447
    %4512 = vst [vmem:[#allocation2 + $0x1e8] sm:$0xff] %v4448
    %4513 = vst [vmem:[#allocation2 + $0x1f0] sm:$0xff] %v4449
    %4514 = vst [vmem:[#allocation2 + $0x1f8] sm:$0xff] %v4450
    // Predicated region
    $region30: #{tpu_custom_call.1} parent=1 // pred_check
      _
    $region31: #{tpu_custom_call.1} parent=1 // pred_check_branch
      %4516 = sbr.rel (0) target = $region33
    $region32: #{tpu_custom_call.1} parent=1 // pred_region
      %4518 = vsyncadd [#allocation3], 0
      %s4519 = sshll.u32 [#allocation2], 4
      %s4520 = int_to_ptr.vmem [resolvable:$true] %s4519
      %s4521 = sshll.u32 %s7, 4
      %s4522 = int_to_ptr.hbm [resolvable:$true] %s4521
      %4527 = dma.vmem_to_hbm [thread:$0]  %s4520, 8192, %s4522, [#allocation3], 128, 128, 8
    $region33: #{tpu_custom_call.1} parent=1 // pred_fallthru
      _
    // Predicated region
    $region34: #{tpu_custom_call.1} parent=1 // pred_check
      _
    $region35: #{tpu_custom_call.1} parent=1 // pred_check_branch
      %4529 = sbr.rel (0) target = $region37
    $region36: #{tpu_custom_call.1} parent=1 // pred_region
      %4531 = dma.done [#allocation3], 8192
    $region37: #{tpu_custom_call.1} parent=1 // pred_fallthru
      _
    %4532 = vsyncpa [#allocation3], 1

</llo_original>
